<compile_context>
chip_gen: v5e
topology: v5e:2x2
jax: 0.10.0
libtpu: 0.0.40
codegen_flags: <defaults>
</compile_context>

<pallas_src>
import jax
import jax.numpy as jnp
from jax import lax
from jax.experimental import pallas as pl
from jax.experimental.pallas import tpu as pltpu

EPS = 1e-5
LANE = 128                       # channel padding target (lane width)
VMEM_LIMIT = 32 * 1024 * 1024    # safe on v5e/v6e/v7x


def _round_up(x, m):
    return (x + m - 1) // m * m


def _pad_to(a, axis, size):
    if a.shape[axis] == size:
        return a
    pads = [(0, 0)] * a.ndim
    pads[axis] = (0, size - a.shape[axis])
    return jnp.pad(a, pads)


# ----------------------------- Pallas kernels ------------------------------ #

def _make_conv1_kernel(stride, Ho, Wo, Cin_p, Cout_p, has_proj):
    """conv1 (3x3, stride) as 9 shifted MXU matmuls, fused with the 1x1 skip
    conv (shares the centre tap) and per-channel sum/sumsq emission."""
    s = stride
    MT = Ho * Wo
    taps = [(di, dj) for di in range(3) for dj in range(3)]

    def kernel(*refs):
        if has_proj:
            x_ref, w_ref, ws_ref, c_ref, sk_ref, st_ref, stsk_ref = refs
        else:
            x_ref, w_ref, c_ref, st_ref = refs

        acc = jnp.zeros((MT, Cout_p), jnp.float32)
        v_center = None
        for t, (di, dj) in enumerate(taps):
            pidx = (di % s) * s + (dj % s)        # phase index (static)
            oi, oj = di // s, dj // s             # offset inside the phase
            v = x_ref[pidx, oi:oi + Ho, oj:oj + Wo, :].reshape(MT, Cin_p)
            if (di, dj) == (1, 1):
                v_center = v                      # reused by the 1x1 skip conv
            acc = acc + jnp.dot(v, w_ref[t],
                                preferred_element_type=jnp.float32)
        c_ref[0] = acc
        st_ref[0] = jnp.concatenate(
            [jnp.sum(acc, axis=0, keepdims=True),
             jnp.sum(acc * acc, axis=0, keepdims=True)], axis=0)

        if has_proj:
            skacc = jnp.dot(v_center, ws_ref[...],
                            preferred_element_type=jnp.float32)
            sk_ref[0] = skacc
            stsk_ref[0] = jnp.concatenate(
                [jnp.sum(skacc, axis=0, keepdims=True),
                 jnp.sum(skacc * skacc, axis=0, keepdims=True)], axis=0)

    return kernel


def _make_conv2_kernel(Ho, Wo, Cout_p):
    """bn1 + ReLU + zero-pad (VMEM scratch) + conv2 (3x3, stride 1) as 9
    shifted MXU matmuls + per-channel sum/sumsq emission."""
    MT = Ho * Wo
    taps = [(di, dj) for di in range(3) for dj in range(3)]

    def kernel(c1_ref, aff1_ref, w2_ref, c2_ref, st_ref, ypad_ref):
        # The grid axis is megacore-parallel, so no single iteration can own
        # the scratch init: zero the padded tile every step (cheap vs matmuls).
        ypad_ref[...] = jnp.zeros((Ho + 2, Wo + 2, Cout_p), jnp.float32)

        # bn1 + ReLU (f32), written into the interior of the padded tile.
        scale = aff1_ref[0:1, :]
        shift = aff1_ref[1:2, :]
        y = jnp.maximum(c1_ref[0] * scale + shift, 0.0)     # (MT, C)
        ypad_ref[1:Ho + 1, 1:Wo + 1, :] = y.reshape(Ho, Wo, Cout_p)

        # conv2 as 9 shifted matmuls (bf16 MXU inputs, f32 accumulate).
        acc = jnp.zeros((MT, Cout_p), jnp.float32)
        for t, (di, dj) in enumerate(taps):
            v = ypad_ref[di:di + Ho, dj:dj + Wo, :].astype(jnp.bfloat16)
            acc = acc + jnp.dot(v.reshape(MT, Cout_p), w2_ref[t],
                                preferred_element_type=jnp.float32)
        c2_ref[0] = acc
        st_ref[0] = jnp.concatenate(
            [jnp.sum(acc, axis=0, keepdims=True),
             jnp.sum(acc * acc, axis=0, keepdims=True)], axis=0)

    return kernel


def _make_finalize_kernel(has_proj):
    """bn2 (+ skip bn) + residual add + ReLU over lane-dense row tiles."""

    def kernel(*refs):
        if has_proj:
            c2_ref, sk_ref, aff2_ref, affs_ref, o_ref = refs
        else:
            c2_ref, sk_ref, aff2_ref, o_ref = refs
        y = c2_ref[...] * aff2_ref[0:1, :] + aff2_ref[1:2, :]
        if has_proj:
            skv = sk_ref[...] * affs_ref[0:1, :] + affs_ref[1:2, :]
        else:
            skv = sk_ref[...]
        o_ref[...] = jnp.maximum(y + skv, 0.0)

    return kernel


# ------------------------------ pallas_call wrappers ------------------------ #

def _conv1_call(xph, w1t, ws, N, stride, Ho, Wo, Cin_p, Cout_p):
    has_proj = ws is not None
    s = stride
    nph, Hp2, Wp2 = s * s, xph.shape[1], xph.shape[2]
    MT = Ho * Wo
    kernel = _make_conv1_kernel(s, Ho, Wo, Cin_p, Cout_p, has_proj)

    img_spec = pl.BlockSpec((1, MT, Cout_p), lambda n: (n, 0, 0))
    st_spec = pl.BlockSpec((1, 2, Cout_p), lambda n: (n, 0, 0))

    in_specs = [pl.BlockSpec((nph, Hp2, Wp2, Cin_p), lambda n: (n, 0, 0, 0)),
                pl.BlockSpec((9, Cin_p, Cout_p), lambda n: (0, 0, 0))]
    inputs = [xph, w1t]
    out_shape = [jax.ShapeDtypeStruct((N, MT, Cout_p), jnp.float32)]
    out_specs = [img_spec]
    if has_proj:
        in_specs.append(pl.BlockSpec((Cin_p, Cout_p), lambda n: (0, 0)))
        inputs.append(ws)
        out_shape.append(jax.ShapeDtypeStruct((N, MT, Cout_p), jnp.float32))
        out_specs.append(img_spec)
    out_shape.append(jax.ShapeDtypeStruct((N, 2, Cout_p), jnp.float32))
    out_specs.append(st_spec)
    if has_proj:
        out_shape.append(jax.ShapeDtypeStruct((N, 2, Cout_p), jnp.float32))
        out_specs.append(st_spec)

    return pl.pallas_call(
        kernel,
        out_shape=tuple(out_shape),
        grid=(N,),
        in_specs=in_specs,
        out_specs=tuple(out_specs),
        compiler_params=pltpu.CompilerParams(
            dimension_semantics=("parallel",),    # per-image, megacore-shardable
            vmem_limit_bytes=VMEM_LIMIT),
    )(*inputs)


def _conv2_call(c1_raw, aff1, w2t, N, Ho, Wo, Cout_p):
    MT = Ho * Wo
    kernel = _make_conv2_kernel(Ho, Wo, Cout_p)
    return pl.pallas_call(
        kernel,
        out_shape=(jax.ShapeDtypeStruct((N, MT, Cout_p), jnp.float32),
                   jax.ShapeDtypeStruct((N, 2, Cout_p), jnp.float32)),
        grid=(N,),
        in_specs=[pl.BlockSpec((1, MT, Cout_p), lambda n: (n, 0, 0)),
                  pl.BlockSpec((2, Cout_p), lambda n: (0, 0)),
                  pl.BlockSpec((9, Cout_p, Cout_p), lambda n: (0, 0, 0))],
        out_specs=(pl.BlockSpec((1, MT, Cout_p), lambda n: (n, 0, 0)),
                   pl.BlockSpec((1, 2, Cout_p), lambda n: (n, 0, 0))),
        scratch_shapes=[pltpu.VMEM((Ho + 2, Wo + 2, Cout_p), jnp.float32)],
        compiler_params=pltpu.CompilerParams(
            dimension_semantics=("parallel",),
            vmem_limit_bytes=VMEM_LIMIT),
    )(c1_raw, aff1, w2t)


def _finalize_call(c2_flat, sk_flat, aff2, aff_sk, TM, Cout_p):
    has_proj = aff_sk is not None
    Mp = c2_flat.shape[0]
    kernel = _make_finalize_kernel(has_proj)
    row_spec = pl.BlockSpec((TM, Cout_p), lambda i: (i, 0))
    aff_spec = pl.BlockSpec((2, Cout_p), lambda i: (0, 0))
    in_specs = [row_spec, row_spec, aff_spec]
    inputs = [c2_flat, sk_flat, aff2]
    if has_proj:
        in_specs.append(aff_spec)
        inputs.append(aff_sk)
    return pl.pallas_call(
        kernel,
        out_shape=jax.ShapeDtypeStruct((Mp, Cout_p), jnp.float32),
        grid=(Mp // TM,),
        in_specs=in_specs,
        out_specs=row_spec,
        compiler_params=pltpu.CompilerParams(
            dimension_semantics=("parallel",),
            vmem_limit_bytes=VMEM_LIMIT),
    )(*inputs)


# ------------------------------ JAX glue ----------------------------------- #

def _phase_split(x_nhwc_p, stride):
    """Zero-pad spatially by 1 and split into stride^2 phases so every 3x3
    tap inside the kernel is a plain unit-stride slice (even for stride 2).
    Returns [N*stride^2, Hp2, Wp2, Cp] plus the phase spatial dims."""
    N, H, W, Cp = x_nhwc_p.shape
    s = stride
    xp = jnp.pad(x_nhwc_p, ((0, 0), (1, 1), (1, 1), (0, 0)))
    Hp, Wp = H + 2, W + 2
    Hp2, Wp2 = -(-Hp // s), -(-Wp // s)
    xp = jnp.pad(xp, ((0, 0), (0, s * Hp2 - Hp), (0, s * Wp2 - Wp), (0, 0)))
    xph = xp.reshape(N, Hp2, s, Wp2, s, Cp).transpose(0, 2, 4, 1, 3, 5)
    return xph.reshape(N * s * s, Hp2, Wp2, Cp), Hp2, Wp2


def _bn_affine(stats, gamma_p, beta_p, count):
    """Fold BN(train) batch statistics + gamma/beta into (scale, shift)."""
    mean = stats[0:1, :] / count
    var = jnp.maximum(stats[1:2, :] / count - mean * mean, 0.0)
    scale = gamma_p.reshape(1, -1) * lax.rsqrt(var + EPS)
    shift = beta_p.reshape(1, -1) - mean * scale
    return jnp.concatenate([scale, shift], axis=0)          # (2, Cp)


def init_params(key, in_channels, out_channels, downsample):
    """Deterministic parameter init (HWIO conv weights, PyTorch-default BN)."""
    k1, k2, k3 = jax.random.split(key, 3)
    params = {
        "w1": 0.1 * jax.random.normal(k1, (3, 3, in_channels, out_channels),
                                      jnp.float32),
        "g1": jnp.ones((out_channels,), jnp.float32),
        "b1": jnp.zeros((out_channels,), jnp.float32),
        "w2": 0.1 * jax.random.normal(k2, (3, 3, out_channels, out_channels),
                                      jnp.float32),
        "g2": jnp.ones((out_channels,), jnp.float32),
        "b2": jnp.zeros((out_channels,), jnp.float32),
    }
    if in_channels != out_channels or downsample:
        params["ws"] = 0.1 * jax.random.normal(
            k3, (1, 1, in_channels, out_channels), jnp.float32)
        params["gs"] = jnp.ones((out_channels,), jnp.float32)
        params["bs"] = jnp.zeros((out_channels,), jnp.float32)
    return params


def residual_block_pallas(x_nchw, params, downsample):
    stride = 2 if downsample else 1
    has_proj = "ws" in params

    # NCHW (PyTorch boundary) -> NHWC; the transposes are layout plumbing only.
    x = jnp.transpose(x_nchw, (0, 2, 3, 1)).astype(jnp.float32)
    N, H, W, Cin = x.shape
    Cout = params["w1"].shape[-1]
    Ho = (H - 1) // stride + 1
    Wo = (W - 1) // stride + 1
    M = N * Ho * Wo

    Cin_p = _round_up(Cin, LANE)
    Cout_p = _round_up(Cout, LANE)

    # ---- operand prep (once, in XLA): channel pad, phase split, bf16 -------
    x_p = _pad_to(x, 3, Cin_p)
    xph, Hp2, Wp2 = _phase_split(x_p, stride)
    xph = xph.astype(jnp.bfloat16)

    w1t = _pad_to(_pad_to(params["w1"], 2, Cin_p), 3, Cout_p)
    w1t = w1t.reshape(9, Cin_p, Cout_p).astype(jnp.bfloat16)
    w2t = _pad_to(_pad_to(params["w2"], 2, Cout_p), 3, Cout_p)
    w2t = w2t.reshape(9, Cout_p, Cout_p).astype(jnp.bfloat16)

    g1 = _pad_to(params["g1"], 0, Cout_p)
    b1 = _pad_to(params["b1"], 0, Cout_p)
    g2 = _pad_to(params["g2"], 0, Cout_p)
    b2 = _pad_to(params["b2"], 0, Cout_p)
    if has_proj:
        ws = _pad_to(_pad_to(params["ws"][0, 0], 0, Cin_p), 1, Cout_p)
        ws = ws.astype(jnp.bfloat16)
        gs = _pad_to(params["gs"], 0, Cout_p)
        bs = _pad_to(params["bs"], 0, Cout_p)

    # ---- K1: conv1 (+ fused 1x1 skip conv) + per-channel sum/sumsq ---------
    if has_proj:
        c1_raw, sk_raw, st1, st_sk = _conv1_call(
            xph, w1t, ws, N, stride, Ho, Wo, Cin_p, Cout_p)
    else:
        c1_raw, st1 = _conv1_call(
            xph, w1t, None, N, stride, Ho, Wo, Cin_p, Cout_p)
    aff1 = _bn_affine(jnp.sum(st1, axis=0), g1, b1, M)       # tiny O(N*C) op

    # ---- K2: bn1 + ReLU + conv2 (fused) + per-channel sum/sumsq ------------
    c2_raw, st2 = _conv2_call(c1_raw, aff1, w2t, N, Ho, Wo, Cout_p)
    aff2 = _bn_affine(jnp.sum(st2, axis=0), g2, b2, M)

    # ---- K3: bn2 (+ skip bn) + residual add + ReLU, lane-dense M tiles -----
    if has_proj:
        aff_sk = _bn_affine(jnp.sum(st_sk, axis=0), gs, bs, M)
        sk_flat = sk_raw.reshape(M, Cout_p)
    else:
        aff_sk = None
        sk_flat = _pad_to(x, 3, Cout_p).reshape(M, Cout_p)   # identity skip

    c2_flat = c2_raw.reshape(M, Cout_p)
    TM = min(1024, _round_up(M, 8))
    Mp = _round_up(M, TM)
    c2_flat = _pad_to(c2_flat, 0, Mp)
    sk_flat = _pad_to(sk_flat, 0, Mp)

    out_flat = _finalize_call(c2_flat, sk_flat, aff2, aff_sk, TM, Cout_p)

    out = out_flat[:M, :Cout].reshape(N, Ho, Wo, Cout)
    return jnp.transpose(out, (0, 3, 1, 2))                  # NHWC -> NCHW


# --------------------------- plain-JAX reference ---------------------------- #

def _bn_train(y_nchw, gamma, beta):
    mean = jnp.mean(y_nchw, axis=(0, 2, 3), keepdims=True)
    var = jnp.mean((y_nchw - mean) ** 2, axis=(0, 2, 3), keepdims=True)
    return ((y_nchw - mean) * lax.rsqrt(var + EPS)
            * gamma.reshape(1, -1, 1, 1) + beta.reshape(1, -1, 1, 1))


def _conv_nchw(x, w_hwio, stride, pad):
    w_oihw = jnp.transpose(w_hwio, (3, 2, 0, 1))
    return lax.conv_general_dilated(
        x, w_oihw, window_strides=(stride, stride),
        padding=((pad, pad), (pad, pad)),
        dimension_numbers=("NCHW", "OIHW", "NCHW"))


def residual_block_ref(x, params, downsample):
    stride = 2 if downsample else 1
    out = _conv_nchw(x, params["w1"], stride, 1)
    out = jnp.maximum(_bn_train(out, params["g1"], params["b1"]), 0.0)
    out = _conv_nchw(out, params["w2"], 1, 1)
    out = _bn_train(out, params["g2"], params["b2"])
    if "ws" in params:
        identity = _bn_train(_conv_nchw(x, params["ws"], stride, 0),
                             params["gs"], params["bs"])
    else:
        identity = x
    return jnp.maximum(out + identity, 0.0)


# ----------------------------------- main ----------------------------------- #

def _run_case(in_channels, out_channels, downsample, N=2, H=16, W=16, seed=0):
    key = jax.random.PRNGKey(seed)
    kx, kp = jax.random.split(key)
    x = jax.random.normal(kx, (N, in_channels, H, W), jnp.float32)
    params = init_params(kp, in_channels, out_channels, downsample)

    fwd = jax.jit(residual_block_pallas, static_argnums=2)
    out = jax.block_until_ready(fwd(x, params, downsample))
    ref = jax.block_until_ready(residual_block_ref(x, params, downsample))

    assert out.shape == ref.shape, (out.shape, ref.shape)
    max_err = float(jnp.max(jnp.abs(out - ref)))
    # bf16 MXU inputs vs a pure-f32 reference: allow a few 1e-2 absolute.
    assert max_err < 5e-2, f"mismatch vs reference: max abs err = {max_err}"
    return max_err


if __name__ == "__main__":
    _run_case(4, 8, True)     # projection skip (1x1 conv + BN), stride 2
    _run_case(8, 8, False)    # identity skip, stride 1
    print("KERNEL_OK")
</pallas_src>

<mosaic_0001>
module attributes {stable_mosaic.version = 11 : i64} {
  func.func @kernel(%arg0: i32, %arg1: memref<1x64x128xf32, #tpu.memory_space<vmem>>, %arg2: memref<2x128xf32, #tpu.memory_space<vmem>>, %arg3: memref<9x128x128xbf16, #tpu.memory_space<vmem>>, %arg4: memref<1x64x128xf32, #tpu.memory_space<vmem>>, %arg5: memref<1x2x128xf32, #tpu.memory_space<vmem>>, %arg6: memref<10x10x128xf32, #tpu.memory_space<vmem>>) attributes {dimension_semantics = [#tpu.dimension_semantics<parallel>], iteration_bounds = array<i64: 2>, scalar_prefetch = 0 : i64, scratch_operands = 1 : i64, tpu.core_type = #tpu.core_type<tc>, window_params = [{transform_indices = @transform_0, window_bounds = array<i64: 1, 64, 128>}, {pipeline_mode = #tpu.pipeline_mode<synchronous>, transform_indices = @transform_1, window_bounds = array<i64: 2, 128>}, {pipeline_mode = #tpu.pipeline_mode<synchronous>, transform_indices = @transform_2, window_bounds = array<i64: 9, 128, 128>}, {transform_indices = @transform_3, window_bounds = array<i64: 1, 64, 128>}, {transform_indices = @transform_4, window_bounds = array<i64: 1, 2, 128>}]} {
    %cst = arith.constant 0.000000e+00 : f32
    %0 = vector.broadcast %cst : f32 to vector<10x10x128xf32>
    %c0 = arith.constant 0 : index
    %c0_0 = arith.constant 0 : index
    %c0_1 = arith.constant 0 : index
    %1 = vector.load %arg6[%c0, %c0_0, %c0_1] : memref<10x10x128xf32, #tpu.memory_space<vmem>>, vector<10x10x128xf32>
    tpu.vector_store %arg6[%c0, %c0_0, %c0_1], %0 {strides = array<i32>} : memref<10x10x128xf32, #tpu.memory_space<vmem>>, vector<10x10x128xf32>,
    %c0_2 = arith.constant 0 : index
    %c0_3 = arith.constant 0 : index
    %2 = vector.load %arg2[%c0_2, %c0_3] : memref<2x128xf32, #tpu.memory_space<vmem>>, vector<1x128xf32>
    %c1 = arith.constant 1 : index
    %c0_4 = arith.constant 0 : index
    %3 = vector.load %arg2[%c1, %c0_4] : memref<2x128xf32, #tpu.memory_space<vmem>>, vector<1x128xf32>
    %c0_5 = arith.constant 0 : index
    %c0_6 = arith.constant 0 : index
    %c0_7 = arith.constant 0 : index
    %4 = vector.load %arg1[%c0_5, %c0_6, %c0_7] : memref<1x64x128xf32, #tpu.memory_space<vmem>>, vector<1x64x128xf32>
    %5 = vector.shape_cast %4 : vector<1x64x128xf32> to vector<64x128xf32>
    %6 = vector.broadcast %2 : vector<1x128xf32> to vector<64x128xf32>
    %7 = arith.mulf %5, %6 : vector<64x128xf32>
    %8 = vector.broadcast %3 : vector<1x128xf32> to vector<64x128xf32>
    %9 = arith.addf %7, %8 : vector<64x128xf32>
    %cst_8 = arith.constant 0.000000e+00 : f32
    %10 = vector.broadcast %cst_8 : f32 to vector<64x128xf32>
    %11 = arith.maximumf %9, %10 : vector<64x128xf32>
    %12 = vector.shape_cast %11 : vector<64x128xf32> to vector<8x8x128xf32>
    %c1_9 = arith.constant 1 : index
    %c1_10 = arith.constant 1 : index
    %c0_11 = arith.constant 0 : index
    %13 = vector.load %arg6[%c1_9, %c1_10, %c0_11] : memref<10x10x128xf32, #tpu.memory_space<vmem>>, vector<8x8x128xf32>
    tpu.vector_store %arg6[%c1_9, %c1_10, %c0_11], %12 {strides = array<i32>} : memref<10x10x128xf32, #tpu.memory_space<vmem>>, vector<8x8x128xf32>,
    %cst_12 = arith.constant 0.000000e+00 : f32
    %14 = vector.broadcast %cst_12 : f32 to vector<64x128xf32>
    %c0_13 = arith.constant 0 : index
    %c0_14 = arith.constant 0 : index
    %c0_15 = arith.constant 0 : index
    %15 = vector.load %arg6[%c0_13, %c0_14, %c0_15] : memref<10x10x128xf32, #tpu.memory_space<vmem>>, vector<8x8x128xf32>
    %16 = arith.truncf %15 : vector<8x8x128xf32> to vector<8x8x128xbf16>
    %17 = vector.shape_cast %16 : vector<8x8x128xbf16> to vector<64x128xbf16>
    %c0_16 = arith.constant 0 : index
    %c0_17 = arith.constant 0 : index
    %c0_18 = arith.constant 0 : index
    %18 = vector.load %arg3[%c0_16, %c0_17, %c0_18] : memref<9x128x128xbf16, #tpu.memory_space<vmem>>, vector<1x128x128xbf16>
    %19 = vector.shape_cast %18 : vector<1x128x128xbf16> to vector<128x128xbf16>
    %cst_19 = arith.constant dense<0.000000e+00> : vector<64x128xf32>
    %20 = tpu.matmul %17, %19, %cst_19 {dimension_numbers = #tpu.dot_dimension_numbers<[1], [0], [0], [1], [0, 0, 1, 1], [], []>} : vector<64x128xbf16>, vector<128x128xbf16>, vector<64x128xf32> -> vector<64x128xf32>
    %21 = arith.addf %14, %20 : vector<64x128xf32>
    %c0_20 = arith.constant 0 : index
    %c1_21 = arith.constant 1 : index
    %c0_22 = arith.constant 0 : index
    %22 = vector.load %arg6[%c0_20, %c1_21, %c0_22] : memref<10x10x128xf32, #tpu.memory_space<vmem>>, vector<8x8x128xf32>
    %23 = arith.truncf %22 : vector<8x8x128xf32> to vector<8x8x128xbf16>
    %24 = vector.shape_cast %23 : vector<8x8x128xbf16> to vector<64x128xbf16>
    %c1_23 = arith.constant 1 : index
    %c0_24 = arith.constant 0 : index
    %c0_25 = arith.constant 0 : index
    %25 = vector.load %arg3[%c1_23, %c0_24, %c0_25] : memref<9x128x128xbf16, #tpu.memory_space<vmem>>, vector<1x128x128xbf16>
    %26 = vector.shape_cast %25 : vector<1x128x128xbf16> to vector<128x128xbf16>
    %cst_26 = arith.constant dense<0.000000e+00> : vector<64x128xf32>
    %27 = tpu.matmul %24, %26, %cst_26 {dimension_numbers = #tpu.dot_dimension_numbers<[1], [0], [0], [1], [0, 0, 1, 1], [], []>} : vector<64x128xbf16>, vector<128x128xbf16>, vector<64x128xf32> -> vector<64x128xf32>
    %28 = arith.addf %21, %27 : vector<64x128xf32>
    %c0_27 = arith.constant 0 : index
    %c2 = arith.constant 2 : index
    %c0_28 = arith.constant 0 : index
    %29 = vector.load %arg6[%c0_27, %c2, %c0_28] : memref<10x10x128xf32, #tpu.memory_space<vmem>>, vector<8x8x128xf32>
    %30 = arith.truncf %29 : vector<8x8x128xf32> to vector<8x8x128xbf16>
    %31 = vector.shape_cast %30 : vector<8x8x128xbf16> to vector<64x128xbf16>
    %c2_29 = arith.constant 2 : index
    %c0_30 = arith.constant 0 : index
    %c0_31 = arith.constant 0 : index
    %32 = vector.load %arg3[%c2_29, %c0_30, %c0_31] : memref<9x128x128xbf16, #tpu.memory_space<vmem>>, vector<1x128x128xbf16>
    %33 = vector.shape_cast %32 : vector<1x128x128xbf16> to vector<128x128xbf16>
    %cst_32 = arith.constant dense<0.000000e+00> : vector<64x128xf32>
    %34 = tpu.matmul %31, %33, %cst_32 {dimension_numbers = #tpu.dot_dimension_numbers<[1], [0], [0], [1], [0, 0, 1, 1], [], []>} : vector<64x128xbf16>, vector<128x128xbf16>, vector<64x128xf32> -> vector<64x128xf32>
    %35 = arith.addf %28, %34 : vector<64x128xf32>
    %c1_33 = arith.constant 1 : index
    %c0_34 = arith.constant 0 : index
    %c0_35 = arith.constant 0 : index
    %36 = vector.load %arg6[%c1_33, %c0_34, %c0_35] : memref<10x10x128xf32, #tpu.memory_space<vmem>>, vector<8x8x128xf32>
    %37 = arith.truncf %36 : vector<8x8x128xf32> to vector<8x8x128xbf16>
    %38 = vector.shape_cast %37 : vector<8x8x128xbf16> to vector<64x128xbf16>
    %c3 = arith.constant 3 : index
    %c0_36 = arith.constant 0 : index
    %c0_37 = arith.constant 0 : index
    %39 = vector.load %arg3[%c3, %c0_36, %c0_37] : memref<9x128x128xbf16, #tpu.memory_space<vmem>>, vector<1x128x128xbf16>
    %40 = vector.shape_cast %39 : vector<1x128x128xbf16> to vector<128x128xbf16>
    %cst_38 = arith.constant dense<0.000000e+00> : vector<64x128xf32>
    %41 = tpu.matmul %38, %40, %cst_38 {dimension_numbers = #tpu.dot_dimension_numbers<[1], [0], [0], [1], [0, 0, 1, 1], [], []>} : vector<64x128xbf16>, vector<128x128xbf16>, vector<64x128xf32> -> vector<64x128xf32>
    %42 = arith.addf %35, %41 : vector<64x128xf32>
    %c1_39 = arith.constant 1 : index
    %c1_40 = arith.constant 1 : index
    %c0_41 = arith.constant 0 : index
    %43 = vector.load %arg6[%c1_39, %c1_40, %c0_41] : memref<10x10x128xf32, #tpu.memory_space<vmem>>, vector<8x8x128xf32>
    %44 = arith.truncf %43 : vector<8x8x128xf32> to vector<8x8x128xbf16>
    %45 = vector.shape_cast %44 : vector<8x8x128xbf16> to vector<64x128xbf16>
    %c4 = arith.constant 4 : index
    %c0_42 = arith.constant 0 : index
    %c0_43 = arith.constant 0 : index
    %46 = vector.load %arg3[%c4, %c0_42, %c0_43] : memref<9x128x128xbf16, #tpu.memory_space<vmem>>, vector<1x128x128xbf16>
    %47 = vector.shape_cast %46 : vector<1x128x128xbf16> to vector<128x128xbf16>
    %cst_44 = arith.constant dense<0.000000e+00> : vector<64x128xf32>
    %48 = tpu.matmul %45, %47, %cst_44 {dimension_numbers = #tpu.dot_dimension_numbers<[1], [0], [0], [1], [0, 0, 1, 1], [], []>} : vector<64x128xbf16>, vector<128x128xbf16>, vector<64x128xf32> -> vector<64x128xf32>
    %49 = arith.addf %42, %48 : vector<64x128xf32>
    %c1_45 = arith.constant 1 : index
    %c2_46 = arith.constant 2 : index
    %c0_47 = arith.constant 0 : index
    %50 = vector.load %arg6[%c1_45, %c2_46, %c0_47] : memref<10x10x128xf32, #tpu.memory_space<vmem>>, vector<8x8x128xf32>
    %51 = arith.truncf %50 : vector<8x8x128xf32> to vector<8x8x128xbf16>
    %52 = vector.shape_cast %51 : vector<8x8x128xbf16> to vector<64x128xbf16>
    %c5 = arith.constant 5 : index
    %c0_48 = arith.constant 0 : index
    %c0_49 = arith.constant 0 : index
    %53 = vector.load %arg3[%c5, %c0_48, %c0_49] : memref<9x128x128xbf16, #tpu.memory_space<vmem>>, vector<1x128x128xbf16>
    %54 = vector.shape_cast %53 : vector<1x128x128xbf16> to vector<128x128xbf16>
    %cst_50 = arith.constant dense<0.000000e+00> : vector<64x128xf32>
    %55 = tpu.matmul %52, %54, %cst_50 {dimension_numbers = #tpu.dot_dimension_numbers<[1], [0], [0], [1], [0, 0, 1, 1], [], []>} : vector<64x128xbf16>, vector<128x128xbf16>, vector<64x128xf32> -> vector<64x128xf32>
    %56 = arith.addf %49, %55 : vector<64x128xf32>
    %c2_51 = arith.constant 2 : index
    %c0_52 = arith.constant 0 : index
    %c0_53 = arith.constant 0 : index
    %57 = vector.load %arg6[%c2_51, %c0_52, %c0_53] : memref<10x10x128xf32, #tpu.memory_space<vmem>>, vector<8x8x128xf32>
    %58 = arith.truncf %57 : vector<8x8x128xf32> to vector<8x8x128xbf16>
    %59 = vector.shape_cast %58 : vector<8x8x128xbf16> to vector<64x128xbf16>
    %c6 = arith.constant 6 : index
    %c0_54 = arith.constant 0 : index
    %c0_55 = arith.constant 0 : index
    %60 = vector.load %arg3[%c6, %c0_54, %c0_55] : memref<9x128x128xbf16, #tpu.memory_space<vmem>>, vector<1x128x128xbf16>
    %61 = vector.shape_cast %60 : vector<1x128x128xbf16> to vector<128x128xbf16>
    %cst_56 = arith.constant dense<0.000000e+00> : vector<64x128xf32>
    %62 = tpu.matmul %59, %61, %cst_56 {dimension_numbers = #tpu.dot_dimension_numbers<[1], [0], [0], [1], [0, 0, 1, 1], [], []>} : vector<64x128xbf16>, vector<128x128xbf16>, vector<64x128xf32> -> vector<64x128xf32>
    %63 = arith.addf %56, %62 : vector<64x128xf32>
    %c2_57 = arith.constant 2 : index
    %c1_58 = arith.constant 1 : index
    %c0_59 = arith.constant 0 : index
    %64 = vector.load %arg6[%c2_57, %c1_58, %c0_59] : memref<10x10x128xf32, #tpu.memory_space<vmem>>, vector<8x8x128xf32>
    %65 = arith.truncf %64 : vector<8x8x128xf32> to vector<8x8x128xbf16>
    %66 = vector.shape_cast %65 : vector<8x8x128xbf16> to vector<64x128xbf16>
    %c7 = arith.constant 7 : index
    %c0_60 = arith.constant 0 : index
    %c0_61 = arith.constant 0 : index
    %67 = vector.load %arg3[%c7, %c0_60, %c0_61] : memref<9x128x128xbf16, #tpu.memory_space<vmem>>, vector<1x128x128xbf16>
    %68 = vector.shape_cast %67 : vector<1x128x128xbf16> to vector<128x128xbf16>
    %cst_62 = arith.constant dense<0.000000e+00> : vector<64x128xf32>
    %69 = tpu.matmul %66, %68, %cst_62 {dimension_numbers = #tpu.dot_dimension_numbers<[1], [0], [0], [1], [0, 0, 1, 1], [], []>} : vector<64x128xbf16>, vector<128x128xbf16>, vector<64x128xf32> -> vector<64x128xf32>
    %70 = arith.addf %63, %69 : vector<64x128xf32>
    %c2_63 = arith.constant 2 : index
    %c2_64 = arith.constant 2 : index
    %c0_65 = arith.constant 0 : index
    %71 = vector.load %arg6[%c2_63, %c2_64, %c0_65] : memref<10x10x128xf32, #tpu.memory_space<vmem>>, vector<8x8x128xf32>
    %72 = arith.truncf %71 : vector<8x8x128xf32> to vector<8x8x128xbf16>
    %73 = vector.shape_cast %72 : vector<8x8x128xbf16> to vector<64x128xbf16>
    %c8 = arith.constant 8 : index
    %c0_66 = arith.constant 0 : index
    %c0_67 = arith.constant 0 : index
    %74 = vector.load %arg3[%c8, %c0_66, %c0_67] : memref<9x128x128xbf16, #tpu.memory_space<vmem>>, vector<1x128x128xbf16>
    %75 = vector.shape_cast %74 : vector<1x128x128xbf16> to vector<128x128xbf16>
    %cst_68 = arith.constant dense<0.000000e+00> : vector<64x128xf32>
    %76 = tpu.matmul %73, %75, %cst_68 {dimension_numbers = #tpu.dot_dimension_numbers<[1], [0], [0], [1], [0, 0, 1, 1], [], []>} : vector<64x128xbf16>, vector<128x128xbf16>, vector<64x128xf32> -> vector<64x128xf32>
    %77 = arith.addf %70, %76 : vector<64x128xf32>
    %c0_69 = arith.constant 0 : index
    %c0_70 = arith.constant 0 : index
    %c0_71 = arith.constant 0 : index
    %78 = vector.load %arg4[%c0_69, %c0_70, %c0_71] : memref<1x64x128xf32, #tpu.memory_space<vmem>>, vector<1x64x128xf32>
    %79 = vector.shape_cast %78 : vector<1x64x128xf32> to vector<64x128xf32>
    %80 = vector.shape_cast %77 : vector<64x128xf32> to vector<1x64x128xf32>
    tpu.vector_store %arg4[%c0_69, %c0_70, %c0_71], %80 {strides = array<i32>} : memref<1x64x128xf32, #tpu.memory_space<vmem>>, vector<1x64x128xf32>,
    %cst_72 = arith.constant dense<0.000000e+00> : vector<128xf32>
    %81 = vector.multi_reduction <add>, %77, %cst_72 [0] : vector<64x128xf32> to vector<128xf32>
    %82 = vector.shape_cast %81 : vector<128xf32> to vector<1x128xf32>
    %83 = arith.mulf %77, %77 : vector<64x128xf32>
    %cst_73 = arith.constant dense<0.000000e+00> : vector<128xf32>
    %84 = vector.multi_reduction <add>, %83, %cst_73 [0] : vector<64x128xf32> to vector<128xf32>
    %85 = vector.shape_cast %84 : vector<128xf32> to vector<1x128xf32>
    %86 = tpu.concatenate %82, %85 in 0 : vector<1x128xf32>, vector<1x128xf32> -> vector<2x128xf32>
    %c0_74 = arith.constant 0 : index
    %c0_75 = arith.constant 0 : index
    %c0_76 = arith.constant 0 : index
    %87 = vector.load %arg5[%c0_74, %c0_75, %c0_76] : memref<1x2x128xf32, #tpu.memory_space<vmem>>, vector<1x2x128xf32>
    %88 = vector.shape_cast %87 : vector<1x2x128xf32> to vector<2x128xf32>
    %89 = vector.shape_cast %86 : vector<2x128xf32> to vector<1x2x128xf32>
    tpu.vector_store %arg5[%c0_74, %c0_75, %c0_76], %89 {strides = array<i32>} : memref<1x2x128xf32, #tpu.memory_space<vmem>>, vector<1x2x128xf32>,
    return
  }
  func.func @transform_0(%arg0: i32) -> (i32, i32, i32) {
    %c0_i32 = arith.constant 0 : i32
    %c0_i32_0 = arith.constant 0 : i32
    %c0_i32_1 = arith.constant 0 : i32
    return %arg0, %c0_i32, %c0_i32_0 : i32, i32, i32
  }
  func.func @transform_1(%arg0: i32) -> (i32, i32) {
    %c0_i32 = arith.constant 0 : i32
    %c0_i32_0 = arith.constant 0 : i32
    %c0_i32_1 = arith.constant 0 : i32
    return %c0_i32, %c0_i32_0 : i32, i32
  }
  func.func @transform_2(%arg0: i32) -> (i32, i32, i32) {
    %c0_i32 = arith.constant 0 : i32
    %c0_i32_0 = arith.constant 0 : i32
    %c0_i32_1 = arith.constant 0 : i32
    %c0_i32_2 = arith.constant 0 : i32
    return %c0_i32, %c0_i32_0, %c0_i32_1 : i32, i32, i32
  }
  func.func @transform_3(%arg0: i32) -> (i32, i32, i32) {
    %c0_i32 = arith.constant 0 : i32
    %c0_i32_0 = arith.constant 0 : i32
    %c0_i32_1 = arith.constant 0 : i32
    return %arg0, %c0_i32, %c0_i32_0 : i32, i32, i32
  }
  func.func @transform_4(%arg0: i32) -> (i32, i32, i32) {
    %c0_i32 = arith.constant 0 : i32
    %c0_i32_0 = arith.constant 0 : i32
    %c0_i32_1 = arith.constant 0 : i32
    return %arg0, %c0_i32, %c0_i32_0 : i32, i32, i32
  }
}

module attributes {stable_mosaic.version = 11 : i64} {
  func.func @kernel(%arg0: i32, %arg1: memref<4x9x9x128xbf16, #tpu.memory_space<vmem>>, %arg2: memref<9x128x128xbf16, #tpu.memory_space<vmem>>, %arg3: memref<128x128xbf16, #tpu.memory_space<vmem>>, %arg4: memref<1x64x128xf32, #tpu.memory_space<vmem>>, %arg5: memref<1x64x128xf32, #tpu.memory_space<vmem>>, %arg6: memref<1x2x128xf32, #tpu.memory_space<vmem>>, %arg7: memref<1x2x128xf32, #tpu.memory_space<vmem>>) attributes {dimension_semantics = [#tpu.dimension_semantics<parallel>], iteration_bounds = array<i64: 2>, scalar_prefetch = 0 : i64, scratch_operands = 0 : i64, tpu.core_type = #tpu.core_type<tc>, window_params = [{transform_indices = @transform_0, window_bounds = array<i64: 4, 9, 9, 128>}, {pipeline_mode = #tpu.pipeline_mode<synchronous>, transform_indices = @transform_1, window_bounds = array<i64: 9, 128, 128>}, {pipeline_mode = #tpu.pipeline_mode<synchronous>, transform_indices = @transform_2, window_bounds = array<i64: 128, 128>}, {transform_indices = @transform_3, window_bounds = array<i64: 1, 64, 128>}, {transform_indices = @transform_4, window_bounds = array<i64: 1, 64, 128>}, {transform_indices = @transform_5, window_bounds = array<i64: 1, 2, 128>}, {transform_indices = @transform_6, window_bounds = array<i64: 1, 2, 128>}]} {
    %cst = arith.constant 0.000000e+00 : f32
    %0 = vector.broadcast %cst : f32 to vector<64x128xf32>
    %c0 = arith.constant 0 : index
    %c0_0 = arith.constant 0 : index
    %c0_1 = arith.constant 0 : index
    %c0_2 = arith.constant 0 : index
    %1 = vector.load %arg1[%c0, %c0_0, %c0_1, %c0_2] : memref<4x9x9x128xbf16, #tpu.memory_space<vmem>>, vector<1x8x8x128xbf16>
    %2 = vector.shape_cast %1 : vector<1x8x8x128xbf16> to vector<8x8x128xbf16>
    %3 = vector.shape_cast %2 : vector<8x8x128xbf16> to vector<64x128xbf16>
    %c0_3 = arith.constant 0 : index
    %c0_4 = arith.constant 0 : index
    %c0_5 = arith.constant 0 : index
    %4 = vector.load %arg2[%c0_3, %c0_4, %c0_5] : memref<9x128x128xbf16, #tpu.memory_space<vmem>>, vector<1x128x128xbf16>
    %5 = vector.shape_cast %4 : vector<1x128x128xbf16> to vector<128x128xbf16>
    %cst_6 = arith.constant dense<0.000000e+00> : vector<64x128xf32>
    %6 = tpu.matmul %3, %5, %cst_6 {dimension_numbers = #tpu.dot_dimension_numbers<[1], [0], [0], [1], [0, 0, 1, 1], [], []>} : vector<64x128xbf16>, vector<128x128xbf16>, vector<64x128xf32> -> vector<64x128xf32>
    %7 = arith.addf %0, %6 : vector<64x128xf32>
    %c1 = arith.constant 1 : index
    %c0_7 = arith.constant 0 : index
    %c0_8 = arith.constant 0 : index
    %c0_9 = arith.constant 0 : index
    %8 = vector.load %arg1[%c1, %c0_7, %c0_8, %c0_9] : memref<4x9x9x128xbf16, #tpu.memory_space<vmem>>, vector<1x8x8x128xbf16>
    %9 = vector.shape_cast %8 : vector<1x8x8x128xbf16> to vector<8x8x128xbf16>
    %10 = vector.shape_cast %9 : vector<8x8x128xbf16> to vector<64x128xbf16>
    %c1_10 = arith.constant 1 : index
    %c0_11 = arith.constant 0 : index
    %c0_12 = arith.constant 0 : index
    %11 = vector.load %arg2[%c1_10, %c0_11, %c0_12] : memref<9x128x128xbf16, #tpu.memory_space<vmem>>, vector<1x128x128xbf16>
    %12 = vector.shape_cast %11 : vector<1x128x128xbf16> to vector<128x128xbf16>
    %cst_13 = arith.constant dense<0.000000e+00> : vector<64x128xf32>
    %13 = tpu.matmul %10, %12, %cst_13 {dimension_numbers = #tpu.dot_dimension_numbers<[1], [0], [0], [1], [0, 0, 1, 1], [], []>} : vector<64x128xbf16>, vector<128x128xbf16>, vector<64x128xf32> -> vector<64x128xf32>
    %14 = arith.addf %7, %13 : vector<64x128xf32>
    %c0_14 = arith.constant 0 : index
    %c0_15 = arith.constant 0 : index
    %c1_16 = arith.constant 1 : index
    %c0_17 = arith.constant 0 : index
    %15 = vector.load %arg1[%c0_14, %c0_15, %c1_16, %c0_17] : memref<4x9x9x128xbf16, #tpu.memory_space<vmem>>, vector<1x8x8x128xbf16>
    %16 = vector.shape_cast %15 : vector<1x8x8x128xbf16> to vector<8x8x128xbf16>
    %17 = vector.shape_cast %16 : vector<8x8x128xbf16> to vector<64x128xbf16>
    %c2 = arith.constant 2 : index
    %c0_18 = arith.constant 0 : index
    %c0_19 = arith.constant 0 : index
    %18 = vector.load %arg2[%c2, %c0_18, %c0_19] : memref<9x128x128xbf16, #tpu.memory_space<vmem>>, vector<1x128x128xbf16>
    %19 = vector.shape_cast %18 : vector<1x128x128xbf16> to vector<128x128xbf16>
    %cst_20 = arith.constant dense<0.000000e+00> : vector<64x128xf32>
    %20 = tpu.matmul %17, %19, %cst_20 {dimension_numbers = #tpu.dot_dimension_numbers<[1], [0], [0], [1], [0, 0, 1, 1], [], []>} : vector<64x128xbf16>, vector<128x128xbf16>, vector<64x128xf32> -> vector<64x128xf32>
    %21 = arith.addf %14, %20 : vector<64x128xf32>
    %c2_21 = arith.constant 2 : index
    %c0_22 = arith.constant 0 : index
    %c0_23 = arith.constant 0 : index
    %c0_24 = arith.constant 0 : index
    %22 = vector.load %arg1[%c2_21, %c0_22, %c0_23, %c0_24] : memref<4x9x9x128xbf16, #tpu.memory_space<vmem>>, vector<1x8x8x128xbf16>
    %23 = vector.shape_cast %22 : vector<1x8x8x128xbf16> to vector<8x8x128xbf16>
    %24 = vector.shape_cast %23 : vector<8x8x128xbf16> to vector<64x128xbf16>
    %c3 = arith.constant 3 : index
    %c0_25 = arith.constant 0 : index
    %c0_26 = arith.constant 0 : index
    %25 = vector.load %arg2[%c3, %c0_25, %c0_26] : memref<9x128x128xbf16, #tpu.memory_space<vmem>>, vector<1x128x128xbf16>
    %26 = vector.shape_cast %25 : vector<1x128x128xbf16> to vector<128x128xbf16>
    %cst_27 = arith.constant dense<0.000000e+00> : vector<64x128xf32>
    %27 = tpu.matmul %24, %26, %cst_27 {dimension_numbers = #tpu.dot_dimension_numbers<[1], [0], [0], [1], [0, 0, 1, 1], [], []>} : vector<64x128xbf16>, vector<128x128xbf16>, vector<64x128xf32> -> vector<64x128xf32>
    %28 = arith.addf %21, %27 : vector<64x128xf32>
    %c3_28 = arith.constant 3 : index
    %c0_29 = arith.constant 0 : index
    %c0_30 = arith.constant 0 : index
    %c0_31 = arith.constant 0 : index
    %29 = vector.load %arg1[%c3_28, %c0_29, %c0_30, %c0_31] : memref<4x9x9x128xbf16, #tpu.memory_space<vmem>>, vector<1x8x8x128xbf16>
    %30 = vector.shape_cast %29 : vector<1x8x8x128xbf16> to vector<8x8x128xbf16>
    %31 = vector.shape_cast %30 : vector<8x8x128xbf16> to vector<64x128xbf16>
    %c4 = arith.constant 4 : index
    %c0_32 = arith.constant 0 : index
    %c0_33 = arith.constant 0 : index
    %32 = vector.load %arg2[%c4, %c0_32, %c0_33] : memref<9x128x128xbf16, #tpu.memory_space<vmem>>, vector<1x128x128xbf16>
    %33 = vector.shape_cast %32 : vector<1x128x128xbf16> to vector<128x128xbf16>
    %cst_34 = arith.constant dense<0.000000e+00> : vector<64x128xf32>
    %34 = tpu.matmul %31, %33, %cst_34 {dimension_numbers = #tpu.dot_dimension_numbers<[1], [0], [0], [1], [0, 0, 1, 1], [], []>} : vector<64x128xbf16>, vector<128x128xbf16>, vector<64x128xf32> -> vector<64x128xf32>
    %35 = arith.addf %28, %34 : vector<64x128xf32>
    %c2_35 = arith.constant 2 : index
    %c0_36 = arith.constant 0 : index
    %c1_37 = arith.constant 1 : index
    %c0_38 = arith.constant 0 : index
    %36 = vector.load %arg1[%c2_35, %c0_36, %c1_37, %c0_38] : memref<4x9x9x128xbf16, #tpu.memory_space<vmem>>, vector<1x8x8x128xbf16>
    %37 = vector.shape_cast %36 : vector<1x8x8x128xbf16> to vector<8x8x128xbf16>
    %38 = vector.shape_cast %37 : vector<8x8x128xbf16> to vector<64x128xbf16>
    %c5 = arith.constant 5 : index
    %c0_39 = arith.constant 0 : index
    %c0_40 = arith.constant 0 : index
    %39 = vector.load %arg2[%c5, %c0_39, %c0_40] : memref<9x128x128xbf16, #tpu.memory_space<vmem>>, vector<1x128x128xbf16>
    %40 = vector.shape_cast %39 : vector<1x128x128xbf16> to vector<128x128xbf16>
    %cst_41 = arith.constant dense<0.000000e+00> : vector<64x128xf32>
    %41 = tpu.matmul %38, %40, %cst_41 {dimension_numbers = #tpu.dot_dimension_numbers<[1], [0], [0], [1], [0, 0, 1, 1], [], []>} : vector<64x128xbf16>, vector<128x128xbf16>, vector<64x128xf32> -> vector<64x128xf32>
    %42 = arith.addf %35, %41 : vector<64x128xf32>
    %c0_42 = arith.constant 0 : index
    %c1_43 = arith.constant 1 : index
    %c0_44 = arith.constant 0 : index
    %c0_45 = arith.constant 0 : index
    %43 = vector.load %arg1[%c0_42, %c1_43, %c0_44, %c0_45] : memref<4x9x9x128xbf16, #tpu.memory_space<vmem>>, vector<1x8x8x128xbf16>
    %44 = vector.shape_cast %43 : vector<1x8x8x128xbf16> to vector<8x8x128xbf16>
    %45 = vector.shape_cast %44 : vector<8x8x128xbf16> to vector<64x128xbf16>
    %c6 = arith.constant 6 : index
    %c0_46 = arith.constant 0 : index
    %c0_47 = arith.constant 0 : index
    %46 = vector.load %arg2[%c6, %c0_46, %c0_47] : memref<9x128x128xbf16, #tpu.memory_space<vmem>>, vector<1x128x128xbf16>
    %47 = vector.shape_cast %46 : vector<1x128x128xbf16> to vector<128x128xbf16>
    %cst_48 = arith.constant dense<0.000000e+00> : vector<64x128xf32>
    %48 = tpu.matmul %45, %47, %cst_48 {dimension_numbers = #tpu.dot_dimension_numbers<[1], [0], [0], [1], [0, 0, 1, 1], [], []>} : vector<64x128xbf16>, vector<128x128xbf16>, vector<64x128xf32> -> vector<64x128xf32>
    %49 = arith.addf %42, %48 : vector<64x128xf32>
    %c1_49 = arith.constant 1 : index
    %c1_50 = arith.constant 1 : index
    %c0_51 = arith.constant 0 : index
    %c0_52 = arith.constant 0 : index
    %50 = vector.load %arg1[%c1_49, %c1_50, %c0_51, %c0_52] : memref<4x9x9x128xbf16, #tpu.memory_space<vmem>>, vector<1x8x8x128xbf16>
    %51 = vector.shape_cast %50 : vector<1x8x8x128xbf16> to vector<8x8x128xbf16>
    %52 = vector.shape_cast %51 : vector<8x8x128xbf16> to vector<64x128xbf16>
    %c7 = arith.constant 7 : index
    %c0_53 = arith.constant 0 : index
    %c0_54 = arith.constant 0 : index
    %53 = vector.load %arg2[%c7, %c0_53, %c0_54] : memref<9x128x128xbf16, #tpu.memory_space<vmem>>, vector<1x128x128xbf16>
    %54 = vector.shape_cast %53 : vector<1x128x128xbf16> to vector<128x128xbf16>
    %cst_55 = arith.constant dense<0.000000e+00> : vector<64x128xf32>
    %55 = tpu.matmul %52, %54, %cst_55 {dimension_numbers = #tpu.dot_dimension_numbers<[1], [0], [0], [1], [0, 0, 1, 1], [], []>} : vector<64x128xbf16>, vector<128x128xbf16>, vector<64x128xf32> -> vector<64x128xf32>
    %56 = arith.addf %49, %55 : vector<64x128xf32>
    %c0_56 = arith.constant 0 : index
    %c1_57 = arith.constant 1 : index
    %c1_58 = arith.constant 1 : index
    %c0_59 = arith.constant 0 : index
    %57 = vector.load %arg1[%c0_56, %c1_57, %c1_58, %c0_59] : memref<4x9x9x128xbf16, #tpu.memory_space<vmem>>, vector<1x8x8x128xbf16>
    %58 = vector.shape_cast %57 : vector<1x8x8x128xbf16> to vector<8x8x128xbf16>
    %59 = vector.shape_cast %58 : vector<8x8x128xbf16> to vector<64x128xbf16>
    %c8 = arith.constant 8 : index
    %c0_60 = arith.constant 0 : index
    %c0_61 = arith.constant 0 : index
    %60 = vector.load %arg2[%c8, %c0_60, %c0_61] : memref<9x128x128xbf16, #tpu.memory_space<vmem>>, vector<1x128x128xbf16>
    %61 = vector.shape_cast %60 : vector<1x128x128xbf16> to vector<128x128xbf16>
    %cst_62 = arith.constant dense<0.000000e+00> : vector<64x128xf32>
    %62 = tpu.matmul %59, %61, %cst_62 {dimension_numbers = #tpu.dot_dimension_numbers<[1], [0], [0], [1], [0, 0, 1, 1], [], []>} : vector<64x128xbf16>, vector<128x128xbf16>, vector<64x128xf32> -> vector<64x128xf32>
    %63 = arith.addf %56, %62 : vector<64x128xf32>
    %c0_63 = arith.constant 0 : index
    %c0_64 = arith.constant 0 : index
    %c0_65 = arith.constant 0 : index
    %64 = vector.load %arg4[%c0_63, %c0_64, %c0_65] : memref<1x64x128xf32, #tpu.memory_space<vmem>>, vector<1x64x128xf32>
    %65 = vector.shape_cast %64 : vector<1x64x128xf32> to vector<64x128xf32>
    %66 = vector.shape_cast %63 : vector<64x128xf32> to vector<1x64x128xf32>
    tpu.vector_store %arg4[%c0_63, %c0_64, %c0_65], %66 {strides = array<i32>} : memref<1x64x128xf32, #tpu.memory_space<vmem>>, vector<1x64x128xf32>,
    %cst_66 = arith.constant dense<0.000000e+00> : vector<128xf32>
    %67 = vector.multi_reduction <add>, %63, %cst_66 [0] : vector<64x128xf32> to vector<128xf32>
    %68 = vector.shape_cast %67 : vector<128xf32> to vector<1x128xf32>
    %69 = arith.mulf %63, %63 : vector<64x128xf32>
    %cst_67 = arith.constant dense<0.000000e+00> : vector<128xf32>
    %70 = vector.multi_reduction <add>, %69, %cst_67 [0] : vector<64x128xf32> to vector<128xf32>
    %71 = vector.shape_cast %70 : vector<128xf32> to vector<1x128xf32>
    %72 = tpu.concatenate %68, %71 in 0 : vector<1x128xf32>, vector<1x128xf32> -> vector<2x128xf32>
    %c0_68 = arith.constant 0 : index
    %c0_69 = arith.constant 0 : index
    %c0_70 = arith.constant 0 : index
    %73 = vector.load %arg6[%c0_68, %c0_69, %c0_70] : memref<1x2x128xf32, #tpu.memory_space<vmem>>, vector<1x2x128xf32>
    %74 = vector.shape_cast %73 : vector<1x2x128xf32> to vector<2x128xf32>
    %75 = vector.shape_cast %72 : vector<2x128xf32> to vector<1x2x128xf32>
    tpu.vector_store %arg6[%c0_68, %c0_69, %c0_70], %75 {strides = array<i32>} : memref<1x2x128xf32, #tpu.memory_space<vmem>>, vector<1x2x128xf32>,
    %c0_71 = arith.constant 0 : index
    %c0_72 = arith.constant 0 : index
    %76 = vector.load %arg3[%c0_71, %c0_72] : memref<128x128xbf16, #tpu.memory_space<vmem>>, vector<128x128xbf16>
    %cst_73 = arith.constant dense<0.000000e+00> : vector<64x128xf32>
    %77 = tpu.matmul %31, %76, %cst_73 {dimension_numbers = #tpu.dot_dimension_numbers<[1], [0], [0], [1], [0, 0, 1, 1], [], []>} : vector<64x128xbf16>, vector<128x128xbf16>, vector<64x128xf32> -> vector<64x128xf32>
    %c0_74 = arith.constant 0 : index
    %c0_75 = arith.constant 0 : index
    %c0_76 = arith.constant 0 : index
    %78 = vector.load %arg5[%c0_74, %c0_75, %c0_76] : memref<1x64x128xf32, #tpu.memory_space<vmem>>, vector<1x64x128xf32>
    %79 = vector.shape_cast %78 : vector<1x64x128xf32> to vector<64x128xf32>
    %80 = vector.shape_cast %77 : vector<64x128xf32> to vector<1x64x128xf32>
    tpu.vector_store %arg5[%c0_74, %c0_75, %c0_76], %80 {strides = array<i32>} : memref<1x64x128xf32, #tpu.memory_space<vmem>>, vector<1x64x128xf32>,
    %cst_77 = arith.constant dense<0.000000e+00> : vector<128xf32>
    %81 = vector.multi_reduction <add>, %77, %cst_77 [0] : vector<64x128xf32> to vector<128xf32>
    %82 = vector.shape_cast %81 : vector<128xf32> to vector<1x128xf32>
    %83 = arith.mulf %77, %77 : vector<64x128xf32>
    %cst_78 = arith.constant dense<0.000000e+00> : vector<128xf32>
    %84 = vector.multi_reduction <add>, %83, %cst_78 [0] : vector<64x128xf32> to vector<128xf32>
    %85 = vector.shape_cast %84 : vector<128xf32> to vector<1x128xf32>
    %86 = tpu.concatenate %82, %85 in 0 : vector<1x128xf32>, vector<1x128xf32> -> vector<2x128xf32>
    %c0_79 = arith.constant 0 : index
    %c0_80 = arith.constant 0 : index
    %c0_81 = arith.constant 0 : index
    %87 = vector.load %arg7[%c0_79, %c0_80, %c0_81] : memref<1x2x128xf32, #tpu.memory_space<vmem>>, vector<1x2x128xf32>
    %88 = vector.shape_cast %87 : vector<1x2x128xf32> to vector<2x128xf32>
    %89 = vector.shape_cast %86 : vector<2x128xf32> to vector<1x2x128xf32>
    tpu.vector_store %arg7[%c0_79, %c0_80, %c0_81], %89 {strides = array<i32>} : memref<1x2x128xf32, #tpu.memory_space<vmem>>, vector<1x2x128xf32>,
    return
  }
  func.func @transform_0(%arg0: i32) -> (i32, i32, i32, i32) {
    %c0_i32 = arith.constant 0 : i32
    %c0_i32_0 = arith.constant 0 : i32
    %c0_i32_1 = arith.constant 0 : i32
    %c0_i32_2 = arith.constant 0 : i32
    return %arg0, %c0_i32, %c0_i32_0, %c0_i32_1 : i32, i32, i32, i32
  }
  func.func @transform_1(%arg0: i32) -> (i32, i32, i32) {
    %c0_i32 = arith.constant 0 : i32
    %c0_i32_0 = arith.constant 0 : i32
    %c0_i32_1 = arith.constant 0 : i32
    %c0_i32_2 = arith.constant 0 : i32
    return %c0_i32, %c0_i32_0, %c0_i32_1 : i32, i32, i32
  }
  func.func @transform_2(%arg0: i32) -> (i32, i32) {
    %c0_i32 = arith.constant 0 : i32
    %c0_i32_0 = arith.constant 0 : i32
    %c0_i32_1 = arith.constant 0 : i32
    return %c0_i32, %c0_i32_0 : i32, i32
  }
  func.func @transform_3(%arg0: i32) -> (i32, i32, i32) {
    %c0_i32 = arith.constant 0 : i32
    %c0_i32_0 = arith.constant 0 : i32
    %c0_i32_1 = arith.constant 0 : i32
    return %arg0, %c0_i32, %c0_i32_0 : i32, i32, i32
  }
  func.func @transform_4(%arg0: i32) -> (i32, i32, i32) {
    %c0_i32 = arith.constant 0 : i32
    %c0_i32_0 = arith.constant 0 : i32
    %c0_i32_1 = arith.constant 0 : i32
    return %arg0, %c0_i32, %c0_i32_0 : i32, i32, i32
  }
  func.func @transform_5(%arg0: i32) -> (i32, i32, i32) {
    %c0_i32 = arith.constant 0 : i32
    %c0_i32_0 = arith.constant 0 : i32
    %c0_i32_1 = arith.constant 0 : i32
    return %arg0, %c0_i32, %c0_i32_0 : i32, i32, i32
  }
  func.func @transform_6(%arg0: i32) -> (i32, i32, i32) {
    %c0_i32 = arith.constant 0 : i32
    %c0_i32_0 = arith.constant 0 : i32
    %c0_i32_1 = arith.constant 0 : i32
    return %arg0, %c0_i32, %c0_i32_0 : i32, i32, i32
  }
}

module attributes {stable_mosaic.version = 11 : i64} {
  func.func @kernel(%arg0: i32, %arg1: memref<128x128xf32, #tpu.memory_space<vmem>>, %arg2: memref<128x128xf32, #tpu.memory_space<vmem>>, %arg3: memref<2x128xf32, #tpu.memory_space<vmem>>, %arg4: memref<2x128xf32, #tpu.memory_space<vmem>>, %arg5: memref<128x128xf32, #tpu.memory_space<vmem>>) attributes {dimension_semantics = [#tpu.dimension_semantics<parallel>], iteration_bounds = array<i64: 1>, scalar_prefetch = 0 : i64, scratch_operands = 0 : i64, tpu.core_type = #tpu.core_type<tc>, window_params = [{transform_indices = @transform_0, window_bounds = array<i64: 128, 128>}, {transform_indices = @transform_1, window_bounds = array<i64: 128, 128>}, {pipeline_mode = #tpu.pipeline_mode<synchronous>, transform_indices = @transform_2, window_bounds = array<i64: 2, 128>}, {pipeline_mode = #tpu.pipeline_mode<synchronous>, transform_indices = @transform_3, window_bounds = array<i64: 2, 128>}, {transform_indices = @transform_4, window_bounds = array<i64: 128, 128>}]} {
    %c0 = arith.constant 0 : index
    %c0_0 = arith.constant 0 : index
    %0 = vector.load %arg1[%c0, %c0_0] : memref<128x128xf32, #tpu.memory_space<vmem>>, vector<128x128xf32>
    %c0_1 = arith.constant 0 : index
    %c0_2 = arith.constant 0 : index
    %1 = vector.load %arg3[%c0_1, %c0_2] : memref<2x128xf32, #tpu.memory_space<vmem>>, vector<1x128xf32>
    %2 = vector.broadcast %1 : vector<1x128xf32> to vector<128x128xf32>
    %3 = arith.mulf %0, %2 : vector<128x128xf32>
    %c1 = arith.constant 1 : index
    %c0_3 = arith.constant 0 : index
    %4 = vector.load %arg3[%c1, %c0_3] : memref<2x128xf32, #tpu.memory_space<vmem>>, vector<1x128xf32>
    %5 = vector.broadcast %4 : vector<1x128xf32> to vector<128x128xf32>
    %6 = arith.addf %3, %5 : vector<128x128xf32>
    %c0_4 = arith.constant 0 : index
    %c0_5 = arith.constant 0 : index
    %7 = vector.load %arg2[%c0_4, %c0_5] : memref<128x128xf32, #tpu.memory_space<vmem>>, vector<128x128xf32>
    %c0_6 = arith.constant 0 : index
    %c0_7 = arith.constant 0 : index
    %8 = vector.load %arg4[%c0_6, %c0_7] : memref<2x128xf32, #tpu.memory_space<vmem>>, vector<1x128xf32>
    %9 = vector.broadcast %8 : vector<1x128xf32> to vector<128x128xf32>
    %10 = arith.mulf %7, %9 : vector<128x128xf32>
    %c1_8 = arith.constant 1 : index
    %c0_9 = arith.constant 0 : index
    %11 = vector.load %arg4[%c1_8, %c0_9] : memref<2x128xf32, #tpu.memory_space<vmem>>, vector<1x128xf32>
    %12 = vector.broadcast %11 : vector<1x128xf32> to vector<128x128xf32>
    %13 = arith.addf %10, %12 : vector<128x128xf32>
    %14 = arith.addf %6, %13 : vector<128x128xf32>
    %cst = arith.constant 0.000000e+00 : f32
    %15 = vector.broadcast %cst : f32 to vector<128x128xf32>
    %16 = arith.maximumf %14, %15 : vector<128x128xf32>
    %c0_10 = arith.constant 0 : index
    %c0_11 = arith.constant 0 : index
    %17 = vector.load %arg5[%c0_10, %c0_11] : memref<128x128xf32, #tpu.memory_space<vmem>>, vector<128x128xf32>
    tpu.vector_store %arg5[%c0_10, %c0_11], %16 {strides = array<i32>} : memref<128x128xf32, #tpu.memory_space<vmem>>, vector<128x128xf32>,
    return
  }
  func.func @transform_0(%arg0: i32) -> (i32, i32) {
    %c0_i32 = arith.constant 0 : i32
    %c0_i32_0 = arith.constant 0 : i32
    return %arg0, %c0_i32 : i32, i32
  }
  func.func @transform_1(%arg0: i32) -> (i32, i32) {
    %c0_i32 = arith.constant 0 : i32
    %c0_i32_0 = arith.constant 0 : i32
    return %arg0, %c0_i32 : i32, i32
  }
  func.func @transform_2(%arg0: i32) -> (i32, i32) {
    %c0_i32 = arith.constant 0 : i32
    %c0_i32_0 = arith.constant 0 : i32
    %c0_i32_1 = arith.constant 0 : i32
    return %c0_i32, %c0_i32_0 : i32, i32
  }
  func.func @transform_3(%arg0: i32) -> (i32, i32) {
    %c0_i32 = arith.constant 0 : i32
    %c0_i32_0 = arith.constant 0 : i32
    %c0_i32_1 = arith.constant 0 : i32
    return %c0_i32, %c0_i32_0 : i32, i32
  }
  func.func @transform_4(%arg0: i32) -> (i32, i32) {
    %c0_i32 = arith.constant 0 : i32
    %c0_i32_0 = arith.constant 0 : i32
    return %arg0, %c0_i32 : i32, i32
  }
}

</mosaic_0001>

<llo_original>
// kernel: residual_block_pallas.5
$region0: #{residual_block_pallas.5}
  #allocation0 [shape = 'u32[]', space=smem, size = 0x4, offset = 0x4, fixed_abs, tag = 'smem constant byte address 0x4 - core index']
  #allocation1 [shape = 'u32[72,128]{1,0:T(1,128)}', space=vmem, size = 0x9000, scoped, tag = 'internal scratch']
  %s0 = inlined_call_operand.vmem [shape: f32[128,128], index: 0, kind: input, shape index: {}]
  %s1 = inlined_call_operand.vmem [shape: f32[128,128], index: 1, kind: input, shape index: {}]
  %s2 = inlined_call_operand.vmem [shape: f32[2,128], index: 2, kind: input, shape index: {}]
  %s3 = inlined_call_operand.vmem [shape: f32[2,128], index: 3, kind: input, shape index: {}]
  %s4 = inlined_call_operand.vmem [shape: f32[128,128], index: 4, kind: output, shape index: {}]
  %s5 = sld [smem:[#allocation0]]
  $region26: #{residual_block_pallas.5} parent=0
    _
  %s7 = ssub.s32 1, %s5
  %s8 = scalar_select 0, %s7, %s5
  // Predicated region
  $region2: #{residual_block_pallas.5} parent=0 // pred_check
    _
  $region3: #{residual_block_pallas.5} parent=0 // pred_check_branch
    %10 = sbr.rel (0) target = $region5
  $region4: #{residual_block_pallas.5} parent=0 // pred_region
    _
  $region5: #{residual_block_pallas.5} parent=0 // pred_fallthru
    _
  // Predicated region
  $region6: #{residual_block_pallas.5} parent=0 // pred_check
    _
  $region7: #{residual_block_pallas.5} parent=0 // pred_check_branch
    %12 = sbr.rel (0) target = $region9
  $region8: #{residual_block_pallas.5} parent=0 // pred_region
    _
  $region9: #{residual_block_pallas.5} parent=0 // pred_fallthru
    _
  // Predicated region
  $region10: #{residual_block_pallas.5} parent=0 // pred_check
    _
  $region11: #{residual_block_pallas.5} parent=0 // pred_check_branch
    %14 = sbr.rel (0) target = $region13
  $region12: #{residual_block_pallas.5} parent=0 // pred_region
    _
  $region13: #{residual_block_pallas.5} parent=0 // pred_fallthru
    _
  // Predicated region
  $region14: #{residual_block_pallas.5} parent=0 // pred_check
    _
  $region15: #{residual_block_pallas.5} parent=0 // pred_check_branch
    %16 = sbr.rel (0) target = $region17
  $region16: #{residual_block_pallas.5} parent=0 // pred_region
    _
  $region17: #{residual_block_pallas.5} parent=0 // pred_fallthru
    _
  %v17 = vld [vmem:[%s0] sm:$0xff]
  %v18 = vld [vmem:[%s0 + $0x8] sm:$0xff]
  %v19 = vld [vmem:[%s0 + $0x10] sm:$0xff]
  %v20 = vld [vmem:[%s0 + $0x18] sm:$0xff]
  %v21 = vld [vmem:[%s0 + $0x20] sm:$0xff]
  %v22 = vld [vmem:[%s0 + $0x28] sm:$0xff]
  %v23 = vld [vmem:[%s0 + $0x30] sm:$0xff]
  %v24 = vld [vmem:[%s0 + $0x38] sm:$0xff]
  %v25 = vld [vmem:[%s0 + $0x40] sm:$0xff]
  %v26 = vld [vmem:[%s0 + $0x48] sm:$0xff]
  %v27 = vld [vmem:[%s0 + $0x50] sm:$0xff]
  %v28 = vld [vmem:[%s0 + $0x58] sm:$0xff]
  %v29 = vld [vmem:[%s0 + $0x60] sm:$0xff]
  %v30 = vld [vmem:[%s0 + $0x68] sm:$0xff]
  %v31 = vld [vmem:[%s0 + $0x70] sm:$0xff]
  %v32 = vld [vmem:[%s0 + $0x78] sm:$0xff]
  %v33 = vld [vmem:[%s2] sm:$0x1]
  %v34 = vperm.slane %v33, 0
  %v35 = vmul.f32 %v17, %v34
  %v36 = vmul.f32 %v18, %v34
  %v37 = vmul.f32 %v19, %v34
  %v38 = vmul.f32 %v20, %v34
  %v39 = vmul.f32 %v21, %v34
  %v40 = vmul.f32 %v22, %v34
  %v41 = vmul.f32 %v23, %v34
  %v42 = vmul.f32 %v24, %v34
  %v43 = vmul.f32 %v25, %v34
  %v44 = vmul.f32 %v26, %v34
  %v45 = vmul.f32 %v27, %v34
  %v46 = vmul.f32 %v28, %v34
  %v47 = vmul.f32 %v29, %v34
  %v48 = vmul.f32 %v30, %v34
  %v49 = vmul.f32 %v31, %v34
  %v50 = vmul.f32 %v32, %v34
  %v51 = vld [vmem:[%s2 + $0x1] sm:$0x1]
  %v52 = vperm.slane %v51, 0
  %v53 = vadd.f32 %v35, %v52
  %v54 = vadd.f32 %v36, %v52
  %v55 = vadd.f32 %v37, %v52
  %v56 = vadd.f32 %v38, %v52
  %v57 = vadd.f32 %v39, %v52
  %v58 = vadd.f32 %v40, %v52
  %v59 = vadd.f32 %v41, %v52
  %v60 = vadd.f32 %v42, %v52
  %v61 = vadd.f32 %v43, %v52
  %v62 = vadd.f32 %v44, %v52
  %v63 = vadd.f32 %v45, %v52
  %v64 = vadd.f32 %v46, %v52
  %v65 = vadd.f32 %v47, %v52
  %v66 = vadd.f32 %v48, %v52
  %v67 = vadd.f32 %v49, %v52
  %v68 = vadd.f32 %v50, %v52
  %v69 = vld [vmem:[%s1] sm:$0xff]
  %v70 = vld [vmem:[%s1 + $0x8] sm:$0xff]
  %v71 = vld [vmem:[%s1 + $0x10] sm:$0xff]
  %v72 = vld [vmem:[%s1 + $0x18] sm:$0xff]
  %v73 = vld [vmem:[%s1 + $0x20] sm:$0xff]
  %v74 = vld [vmem:[%s1 + $0x28] sm:$0xff]
  %v75 = vld [vmem:[%s1 + $0x30] sm:$0xff]
  %v76 = vld [vmem:[%s1 + $0x38] sm:$0xff]
  %v77 = vld [vmem:[%s1 + $0x40] sm:$0xff]
  %v78 = vld [vmem:[%s1 + $0x48] sm:$0xff]
  %v79 = vld [vmem:[%s1 + $0x50] sm:$0xff]
  %v80 = vld [vmem:[%s1 + $0x58] sm:$0xff]
  %v81 = vld [vmem:[%s1 + $0x60] sm:$0xff]
  %v82 = vld [vmem:[%s1 + $0x68] sm:$0xff]
  %v83 = vld [vmem:[%s1 + $0x70] sm:$0xff]
  %v84 = vld [vmem:[%s1 + $0x78] sm:$0xff]
  %v85 = vld [vmem:[%s3] sm:$0x1]
  %v86 = vperm.slane %v85, 0
  %v87 = vmul.f32 %v69, %v86
  %v88 = vmul.f32 %v70, %v86
  %v89 = vmul.f32 %v71, %v86
  %v90 = vmul.f32 %v72, %v86
  %v91 = vmul.f32 %v73, %v86
  %v92 = vmul.f32 %v74, %v86
  %v93 = vmul.f32 %v75, %v86
  %v94 = vmul.f32 %v76, %v86
  %v95 = vmul.f32 %v77, %v86
  %v96 = vmul.f32 %v78, %v86
  %v97 = vmul.f32 %v79, %v86
  %v98 = vmul.f32 %v80, %v86
  %v99 = vmul.f32 %v81, %v86
  %v100 = vmul.f32 %v82, %v86
  %v101 = vmul.f32 %v83, %v86
  %v102 = vmul.f32 %v84, %v86
  %v103 = vld [vmem:[%s3 + $0x1] sm:$0x1]
  %v104 = vperm.slane %v103, 0
  %v105 = vadd.f32 %v87, %v104
  %v106 = vadd.f32 %v88, %v104
  %v107 = vadd.f32 %v89, %v104
  %v108 = vadd.f32 %v90, %v104
  %v109 = vadd.f32 %v91, %v104
  %v110 = vadd.f32 %v92, %v104
  %v111 = vadd.f32 %v93, %v104
  %v112 = vadd.f32 %v94, %v104
  %v113 = vadd.f32 %v95, %v104
  %v114 = vadd.f32 %v96, %v104
  %v115 = vadd.f32 %v97, %v104
  %v116 = vadd.f32 %v98, %v104
  %v117 = vadd.f32 %v99, %v104
  %v118 = vadd.f32 %v100, %v104
  %v119 = vadd.f32 %v101, %v104
  %v120 = vadd.f32 %v102, %v104
  %v121 = vadd.f32 %v53, %v105
  %v122 = vadd.f32 %v54, %v106
  %v123 = vadd.f32 %v55, %v107
  %v124 = vadd.f32 %v56, %v108
  %v125 = vadd.f32 %v57, %v109
  %v126 = vadd.f32 %v58, %v110
  %v127 = vadd.f32 %v59, %v111
  %v128 = vadd.f32 %v60, %v112
  %v129 = vadd.f32 %v61, %v113
  %v130 = vadd.f32 %v62, %v114
  %v131 = vadd.f32 %v63, %v115
  %v132 = vadd.f32 %v64, %v116
  %v133 = vadd.f32 %v65, %v117
  %v134 = vadd.f32 %v66, %v118
  %v135 = vadd.f32 %v67, %v119
  %v136 = vadd.f32 %v68, %v120
  %v137 = vmax.f32 %v121, 0.0
  %v138 = vmax.f32 %v122, 0.0
  %v139 = vmax.f32 %v123, 0.0
  %v140 = vmax.f32 %v124, 0.0
  %v141 = vmax.f32 %v125, 0.0
  %v142 = vmax.f32 %v126, 0.0
  %v143 = vmax.f32 %v127, 0.0
  %v144 = vmax.f32 %v128, 0.0
  %v145 = vmax.f32 %v129, 0.0
  %v146 = vmax.f32 %v130, 0.0
  %v147 = vmax.f32 %v131, 0.0
  %v148 = vmax.f32 %v132, 0.0
  %v149 = vmax.f32 %v133, 0.0
  %v150 = vmax.f32 %v134, 0.0
  %v151 = vmax.f32 %v135, 0.0
  %v152 = vmax.f32 %v136, 0.0
  %153 = vst [vmem:[%s4] sm:$0xff] %v137
  %154 = vst [vmem:[%s4 + $0x8] sm:$0xff] %v138
  %155 = vst [vmem:[%s4 + $0x10] sm:$0xff] %v139
  %156 = vst [vmem:[%s4 + $0x18] sm:$0xff] %v140
  %157 = vst [vmem:[%s4 + $0x20] sm:$0xff] %v141
  %158 = vst [vmem:[%s4 + $0x28] sm:$0xff] %v142
  %159 = vst [vmem:[%s4 + $0x30] sm:$0xff] %v143
  %160 = vst [vmem:[%s4 + $0x38] sm:$0xff] %v144
  %161 = vst [vmem:[%s4 + $0x40] sm:$0xff] %v145
  %162 = vst [vmem:[%s4 + $0x48] sm:$0xff] %v146
  %163 = vst [vmem:[%s4 + $0x50] sm:$0xff] %v147
  %164 = vst [vmem:[%s4 + $0x58] sm:$0xff] %v148
  %165 = vst [vmem:[%s4 + $0x60] sm:$0xff] %v149
  %166 = vst [vmem:[%s4 + $0x68] sm:$0xff] %v150
  %167 = vst [vmem:[%s4 + $0x70] sm:$0xff] %v151
  %168 = vst [vmem:[%s4 + $0x78] sm:$0xff] %v152
  // Predicated region
  $region18: #{residual_block_pallas.5} parent=0 // pred_check
    _
  $region19: #{residual_block_pallas.5} parent=0 // pred_check_branch
    %170 = sbr.rel (0) target = $region21
  $region20: #{residual_block_pallas.5} parent=0 // pred_region
    _
  $region21: #{residual_block_pallas.5} parent=0 // pred_fallthru
    _
  // Predicated region
  $region22: #{residual_block_pallas.5} parent=0 // pred_check
    _
  $region23: #{residual_block_pallas.5} parent=0 // pred_check_branch
    %172 = sbr.rel (0) target = $region25
  $region24: #{residual_block_pallas.5} parent=0 // pred_region
    _
  $region25: #{residual_block_pallas.5} parent=0 // pred_fallthru
    _

// kernel: residual_block_pallas.4
$region0: #{residual_block_pallas.4}
  #allocation0 [shape = 'u32[]', space=smem, size = 0x4, offset = 0x4, fixed_abs, tag = 'smem constant byte address 0x4 - core index']
  #allocation1 [shape = 'u32[72,128]{1,0:T(1,128)}', space=vmem, size = 0x9000, scoped, tag = 'internal scratch']
  #allocation2 [shape = 'f32[10,10,128]{2,1,0:T(8,128)}', space=vmem, size = 0x14000, scoped, tag = 'scratch operand']
  %s0 = inlined_call_operand.vmem [shape: f32[2,64,128], index: 0, kind: input, shape index: {}]
  %s1 = inlined_call_operand.vmem [shape: f32[2,128], index: 1, kind: input, shape index: {}]
  %s2 = inlined_call_operand.vmem [shape: bf16[9,128,128], index: 2, kind: input, shape index: {}]
  %s3 = inlined_call_operand.vmem [shape: f32[2,64,128], index: 3, kind: output, shape index: {0}]
  %s4 = inlined_call_operand.vmem [shape: f32[2,2,128], index: 4, kind: output, shape index: {1}]
  %5 = xla_tuple %s3, %s4
  %s6 = sld [smem:[#allocation0]]
  $region53: #{residual_block_pallas.4} parent=0
    _
  %s8 = ssub.s32 1, %s6
  %s9 = scalar_select 0, %s8, %s6
  loop: start=0, step=1, limit=4
  $region2: #{residual_block_pallas.4} parent=0 // loop_pre_header
    _
  $region3: #{residual_block_pallas.4} parent=0 // loop_header
    %s11 = sphi 0, %s15
    %p12 = scmp.ge.s32.totalorder %s11, 4
    %s21 = sphi 0, %s23
    %s24 = sphi 0, %s21
    %s25 = sphi 0, %s24
    %s41 = sphi 0, %s25
    %s45 = sphi 0, %s45
    %s47 = sphi 0, %s45
    %s48 = sphi 0, %s47
    %s62 = sphi 0, %s48
    %s66 = sphi 0, %s66
    %s68 = sphi 0, %s66
    %s69 = sphi 0, %s68
    %s83 = sphi 0, %s69
    %s89 = sphi 0, %s91
    %s92 = sphi 0, %s89
    %s93 = sphi 0, %s92
    %s109 = sphi 0, %s93
    %s115 = sphi 0, %s117
    %s118 = sphi 0, %s115
    %s119 = sphi 0, %s118
    %s135 = sphi 0, %s119
  $region4: #{residual_block_pallas.4} parent=0 // loop_header_branch
    %14 = sbr.rel (%p12) target = $region8
  $region5: #{residual_block_pallas.4} parent=0 // loop_body
    %s16 = ssub.s32 %s11, 1
    %s17 = ssub.s32 %s11, 2
    %s18 = sadd.s32 %s11, 1
    %s19 = ssub.s32 %s11, %s18
    %p20 = scmp.eq.s32.totalorder %s19, 0
    %s22 = sadd.s32 %s21, 1
    %s23 = scalar_select %p20, %s21, %s22
    %p26 = pneg %p20
    %p27 = scmp.eq.s32.totalorder %s11, 1
    %p28 = por %p26, %p27
    %p29 = scmp.ne.s32.totalorder %s21, %s24
    %p30 = scmp.eq.s32.totalorder %s11, 0
    %p31 = por %p29, %p30
    %p32 = scmp.ne.s32.totalorder %s21, %s24
    %p33 = scmp.eq.s32.totalorder %s16, 1
    %p34 = por %p32, %p33
    %p35 = scmp.ne.s32.totalorder %s24, %s25
    %p36 = scmp.eq.s32.totalorder %s16, 0
    %p37 = por %p35, %p36
    %p38 = scmp.ne.s32.totalorder %s24, %s25
    %p39 = scmp.eq.s32.totalorder %s17, 1
    %p40 = por %p38, %p39
    %p42 = scmp.ne.s32.totalorder %s25, %s41
    %p43 = scmp.eq.s32.totalorder %s17, 0
    %p44 = por %p42, %p43
    %s46 = sadd.s32 %s45, 1
    %p49 = scmp.eq.s32.totalorder %s11, 1
    %p50 = scmp.ne.s32.totalorder %s45, %s47
    %p51 = scmp.eq.s32.totalorder %s11, 0
    %p52 = por %p50, %p51
    %p53 = scmp.ne.s32.totalorder %s45, %s47
    %p54 = scmp.eq.s32.totalorder %s16, 1
    %p55 = por %p53, %p54
    %p56 = scmp.ne.s32.totalorder %s47, %s48
    %p57 = scmp.eq.s32.totalorder %s16, 0
    %p58 = por %p56, %p57
    %p59 = scmp.ne.s32.totalorder %s47, %s48
    %p60 = scmp.eq.s32.totalorder %s17, 1
    %p61 = por %p59, %p60
    %p63 = scmp.ne.s32.totalorder %s48, %s62
    %p64 = scmp.eq.s32.totalorder %s17, 0
    %p65 = por %p63, %p64
    %s67 = sadd.s32 %s66, 1
    %p70 = scmp.eq.s32.totalorder %s11, 1
    %p71 = scmp.ne.s32.totalorder %s66, %s68
    %p72 = scmp.eq.s32.totalorder %s11, 0
    %p73 = por %p71, %p72
    %p74 = scmp.ne.s32.totalorder %s66, %s68
    %p75 = scmp.eq.s32.totalorder %s16, 1
    %p76 = por %p74, %p75
    %p77 = scmp.ne.s32.totalorder %s68, %s69
    %p78 = scmp.eq.s32.totalorder %s16, 0
    %p79 = por %p77, %p78
    %p80 = scmp.ne.s32.totalorder %s68, %s69
    %p81 = scmp.eq.s32.totalorder %s17, 1
    %p82 = por %p80, %p81
    %p84 = scmp.ne.s32.totalorder %s69, %s83
    %p85 = scmp.eq.s32.totalorder %s17, 0
    %p86 = por %p84, %p85
    %s87 = ssub.s32 %s11, %s18
    %p88 = scmp.eq.s32.totalorder %s87, 0
    %s90 = sadd.s32 %s89, 1
    %s91 = scalar_select %p88, %s89, %s90
    %p94 = pneg %p88
    %p95 = scmp.eq.s32.totalorder %s11, 1
    %p96 = por %p94, %p95
    %p97 = scmp.ne.s32.totalorder %s89, %s92
    %p98 = scmp.eq.s32.totalorder %s11, 0
    %p99 = por %p97, %p98
    %p100 = scmp.ne.s32.totalorder %s89, %s92
    %p101 = scmp.eq.s32.totalorder %s16, 1
    %p102 = por %p100, %p101
    %p103 = scmp.ne.s32.totalorder %s92, %s93
    %p104 = scmp.eq.s32.totalorder %s16, 0
    %p105 = por %p103, %p104
    %p106 = scmp.ne.s32.totalorder %s92, %s93
    %p107 = scmp.eq.s32.totalorder %s17, 1
    %p108 = por %p106, %p107
    %p110 = scmp.ne.s32.totalorder %s93, %s109
    %p111 = scmp.eq.s32.totalorder %s17, 0
    %p112 = por %p110, %p111
    %s113 = ssub.s32 %s11, %s18
    %p114 = scmp.eq.s32.totalorder %s113, 0
    %s116 = sadd.s32 %s115, 1
    %s117 = scalar_select %p114, %s115, %s116
    %p120 = pneg %p114
    %p121 = scmp.eq.s32.totalorder %s11, 1
    %p122 = por %p120, %p121
    %p123 = scmp.ne.s32.totalorder %s115, %s118
    %p124 = scmp.eq.s32.totalorder %s11, 0
    %p125 = por %p123, %p124
    %p126 = scmp.ne.s32.totalorder %s115, %s118
    %p127 = scmp.eq.s32.totalorder %s16, 1
    %p128 = por %p126, %p127
    %p129 = scmp.ne.s32.totalorder %s118, %s119
    %p130 = scmp.eq.s32.totalorder %s16, 0
    %p131 = por %p129, %p130
    %p132 = scmp.ne.s32.totalorder %s118, %s119
    %p133 = scmp.eq.s32.totalorder %s17, 1
    %p134 = por %p132, %p133
    %p136 = scmp.ne.s32.totalorder %s119, %s135
    %p137 = scmp.eq.s32.totalorder %s17, 0
    %p138 = por %p136, %p137
    %p139 = scmp.le.s32.totalorder 1, %s11
    %p140 = scmp.lt.s32.totalorder %s11, 3
    %p141 = pnand %p139, %p140
    %p142 = pneg %p141
    // Predicated region
    $region9: #{residual_block_pallas.4} parent=5 // pred_check
      _
    $region10: #{residual_block_pallas.4} parent=5 // pred_check_branch
      %144 = sbr.rel (%p141) target = $region12
    $region11: #{residual_block_pallas.4} parent=5 // pred_region
      %s145 = ssub.s32 %s11, 1
      // Predicated region
      $region13: #{residual_block_pallas.4} parent=11 // pred_check
        %p146 = pneg %p58
      $region14: #{residual_block_pallas.4} parent=11 // pred_check_branch
        %148 = sbr.rel (%p146) target = $region16
      $region15: #{residual_block_pallas.4} parent=11 // pred_region
        _
      $region16: #{residual_block_pallas.4} parent=11 // pred_fallthru
        _
      // Predicated region
      $region17: #{residual_block_pallas.4} parent=11 // pred_check
        %p149 = pneg %p79
      $region18: #{residual_block_pallas.4} parent=11 // pred_check_branch
        %151 = sbr.rel (%p149) target = $region20
      $region19: #{residual_block_pallas.4} parent=11 // pred_region
        _
      $region20: #{residual_block_pallas.4} parent=11 // pred_fallthru
        _
    $region12: #{residual_block_pallas.4} parent=5 // pred_fallthru
      _
    %p152 = scmp.lt.s32.totalorder %s11, 2
    // Predicated region
    $region21: #{residual_block_pallas.4} parent=5 // pred_check
      %p153 = pneg %p152
    $region22: #{residual_block_pallas.4} parent=5 // pred_check_branch
      %155 = sbr.rel (%p153) target = $region24
    $region23: #{residual_block_pallas.4} parent=5 // pred_region
      // Predicated region
      $region25: #{residual_block_pallas.4} parent=23 // pred_check
        %p156 = pneg %p31
      $region26: #{residual_block_pallas.4} parent=23 // pred_check_branch
        %158 = sbr.rel (%p156) target = $region28
      $region27: #{residual_block_pallas.4} parent=23 // pred_region
        %p159 = scmp.lt.s32.totalorder %s11, 1
        %s160 = scalar_select %p159, %s11, 1
        %s161 = smul.addr %s160, 8
        %s162 = smul.addr %s161, 8
        %s163 = scalar_lea.vmem %s0, %s162
      $region28: #{residual_block_pallas.4} parent=23 // pred_fallthru
        _
    $region24: #{residual_block_pallas.4} parent=5 // pred_fallthru
      _
    %p164 = scmp.le.s32.totalorder 1, %s11
    %p165 = scmp.lt.s32.totalorder %s11, 3
    %p166 = pnand %p164, %p165
    %p167 = pneg %p166
    // Predicated region
    $region29: #{residual_block_pallas.4} parent=5 // pred_check
      _
    $region30: #{residual_block_pallas.4} parent=5 // pred_check_branch
      %169 = sbr.rel (%p166) target = $region32
    $region31: #{residual_block_pallas.4} parent=5 // pred_region
      %s170 = ssub.s32 %s11, 1
      %p171 = scmp.lt.s32.totalorder %s16, 1
      %s172 = scalar_select %p171, %s16, 1
      %s173 = smul.addr %s172, 8
      %s174 = smul.addr %s173, 8
      %s175 = scalar_lea.vmem %s0, %s174
      %p176 = pneg %p37
      %p177 = pneg %p34
      %p178 = pneg %p58
      %p179 = pneg %p55
      %p180 = pneg %p79
      %p181 = pneg %p76
      %p182 = pneg %p105
      %p183 = pneg %p102
      %p184 = scmp.lt.s32.totalorder %s16, 1
      %s185 = scalar_select %p184, %s16, 1
      %s186 = smul.addr %s185, 8
      %s187 = smul.addr %s186, 8
      %s188 = scalar_lea.vmem %s3, %s187
      %p189 = pneg %p131
      %p190 = pneg %p128
      %p191 = scmp.lt.s32.totalorder %s16, 1
      %s192 = scalar_select %p191, %s16, 1
      %s193 = smul.addr %s192, 2
      %s194 = scalar_lea.vmem %s4, %s193
      %p195 = scmp.lt.s32.totalorder %s16, 1
      %s196 = scalar_select %p195, %s16, 1
      %s197 = smul.addr %s196, 8
      %s198 = smul.addr %s197, 8
      %s199 = scalar_lea.vmem %s0, %s198
      %p200 = scmp.lt.s32.totalorder %s16, 1
      %s201 = scalar_select %p200, %s16, 1
      %s202 = smul.addr %s201, 8
      %s203 = smul.addr %s202, 8
      %s204 = scalar_lea.vmem %s3, %s203
      %p205 = scmp.lt.s32.totalorder %s16, 1
      %s206 = scalar_select %p205, %s16, 1
      %s207 = smul.addr %s206, 2
      %s208 = scalar_lea.vmem %s4, %s207
      %209 = vst [vmem:[#allocation2] sm:$0xff] 0.0
      %210 = vst [vmem:[#allocation2 + $0x8] sm:$0x3] 0.0
      %211 = vst [vmem:[#allocation2 + $0x10] sm:$0xff] 0.0
      %212 = vst [vmem:[#allocation2 + $0x18] sm:$0x3] 0.0
      %213 = vst [vmem:[#allocation2 + $0x20] sm:$0xff] 0.0
      %214 = vst [vmem:[#allocation2 + $0x28] sm:$0x3] 0.0
      %215 = vst [vmem:[#allocation2 + $0x30] sm:$0xff] 0.0
      %216 = vst [vmem:[#allocation2 + $0x38] sm:$0x3] 0.0
      %217 = vst [vmem:[#allocation2 + $0x40] sm:$0xff] 0.0
      %218 = vst [vmem:[#allocation2 + $0x48] sm:$0x3] 0.0
      %219 = vst [vmem:[#allocation2 + $0x50] sm:$0xff] 0.0
      %220 = vst [vmem:[#allocation2 + $0x58] sm:$0x3] 0.0
      %221 = vst [vmem:[#allocation2 + $0x60] sm:$0xff] 0.0
      %222 = vst [vmem:[#allocation2 + $0x68] sm:$0x3] 0.0
      %223 = vst [vmem:[#allocation2 + $0x70] sm:$0xff] 0.0
      %224 = vst [vmem:[#allocation2 + $0x78] sm:$0x3] 0.0
      %225 = vst [vmem:[#allocation2 + $0x80] sm:$0xff] 0.0
      %226 = vst [vmem:[#allocation2 + $0x88] sm:$0x3] 0.0
      %227 = vst [vmem:[#allocation2 + $0x90] sm:$0xff] 0.0
      %228 = vst [vmem:[#allocation2 + $0x98] sm:$0x3] 0.0
      %v229 = vld [vmem:[%s1] sm:$0x1]
      %v230 = vld [vmem:[%s1 + $0x1] sm:$0x1]
      %v231 = vld [vmem:[%s199] sm:$0xff]
      %v232 = vld [vmem:[%s199 + $0x8] sm:$0xff]
      %v233 = vld [vmem:[%s199 + $0x10] sm:$0xff]
      %v234 = vld [vmem:[%s199 + $0x18] sm:$0xff]
      %v235 = vld [vmem:[%s199 + $0x20] sm:$0xff]
      %v236 = vld [vmem:[%s199 + $0x28] sm:$0xff]
      %v237 = vld [vmem:[%s199 + $0x30] sm:$0xff]
      %v238 = vld [vmem:[%s199 + $0x38] sm:$0xff]
      %v239 = vperm.slane %v229, 0
      %v240 = vmul.f32 %v231, %v239
      %v241 = vmul.f32 %v232, %v239
      %v242 = vmul.f32 %v233, %v239
      %v243 = vmul.f32 %v234, %v239
      %v244 = vmul.f32 %v235, %v239
      %v245 = vmul.f32 %v236, %v239
      %v246 = vmul.f32 %v237, %v239
      %v247 = vmul.f32 %v238, %v239
      %v248 = vperm.slane %v230, 0
      %v249 = vadd.f32 %v240, %v248
      %v250 = vadd.f32 %v241, %v248
      %v251 = vadd.f32 %v242, %v248
      %v252 = vadd.f32 %v243, %v248
      %v253 = vadd.f32 %v244, %v248
      %v254 = vadd.f32 %v245, %v248
      %v255 = vadd.f32 %v246, %v248
      %v256 = vadd.f32 %v247, %v248
      %v257 = vmax.f32 %v249, 0.0
      %v258 = vmax.f32 %v250, 0.0
      %v259 = vmax.f32 %v251, 0.0
      %v260 = vmax.f32 %v252, 0.0
      %v261 = vmax.f32 %v253, 0.0
      %v262 = vmax.f32 %v254, 0.0
      %v263 = vmax.f32 %v255, 0.0
      %v264 = vmax.f32 %v256, 0.0
      %s265 = scalar_lea.vmem [#allocation2], 16
      %266 = vst [vmem:[%s265 + $0x1] sm:$0xff] %v257
      %267 = vst [vmem:[%s265 + $0x11] sm:$0xff] %v258
      %268 = vst [vmem:[%s265 + $0x21] sm:$0xff] %v259
      %269 = vst [vmem:[%s265 + $0x31] sm:$0xff] %v260
      %270 = vst [vmem:[%s265 + $0x41] sm:$0xff] %v261
      %271 = vst [vmem:[%s265 + $0x51] sm:$0xff] %v262
      %272 = vst [vmem:[%s265 + $0x61] sm:$0xff] %v263
      %273 = vst [vmem:[%s265 + $0x71] sm:$0xff] %v264
      %v274 = vld [vmem:[#allocation2] sm:$0xff]
      %v275 = vld [vmem:[#allocation2 + $0x10] sm:$0xff]
      %v276 = vld [vmem:[#allocation2 + $0x20] sm:$0xff]
      %v277 = vld [vmem:[#allocation2 + $0x30] sm:$0xff]
      %v278 = vld [vmem:[#allocation2 + $0x40] sm:$0xff]
      %v279 = vld [vmem:[#allocation2 + $0x50] sm:$0xff]
      %v280 = vld [vmem:[#allocation2 + $0x60] sm:$0xff]
      %v281 = vld [vmem:[#allocation2 + $0x70] sm:$0xff]
      %v282 = vpack.c.bf16 %v274, %v274
      %v283 = vpack.c.bf16 %v275, %v275
      %v284 = vpack.c.bf16 %v276, %v276
      %v285 = vpack.c.bf16 %v277, %v277
      %v286 = vpack.c.bf16 %v278, %v278
      %v287 = vpack.c.bf16 %v279, %v279
      %v288 = vpack.c.bf16 %v280, %v280
      %v289 = vpack.c.bf16 %v281, %v281
      %v290 = vld [vmem:[%s2] sm:$0xf]
      %v291 = vld [vmem:[%s2 + $0x4] sm:$0xf]
      %v292 = vld [vmem:[%s2 + $0x8] sm:$0xf]
      %v293 = vld [vmem:[%s2 + $0xc] sm:$0xf]
      %v294 = vld [vmem:[%s2 + $0x10] sm:$0xf]
      %v295 = vld [vmem:[%s2 + $0x14] sm:$0xf]
      %v296 = vld [vmem:[%s2 + $0x18] sm:$0xf]
      %v297 = vld [vmem:[%s2 + $0x1c] sm:$0xf]
      %v298 = vld [vmem:[%s2 + $0x20] sm:$0xf]
      %v299 = vld [vmem:[%s2 + $0x24] sm:$0xf]
      %v300 = vld [vmem:[%s2 + $0x28] sm:$0xf]
      %v301 = vld [vmem:[%s2 + $0x2c] sm:$0xf]
      %v302 = vld [vmem:[%s2 + $0x30] sm:$0xf]
      %v303 = vld [vmem:[%s2 + $0x34] sm:$0xf]
      %v304 = vld [vmem:[%s2 + $0x38] sm:$0xf]
      %v305 = vld [vmem:[%s2 + $0x3c] sm:$0xf]
      %v306 = vld [vmem:[#allocation2 + $0x1] sm:$0xff]
      %v307 = vld [vmem:[#allocation2 + $0x11] sm:$0xff]
      %v308 = vld [vmem:[#allocation2 + $0x21] sm:$0xff]
      %v309 = vld [vmem:[#allocation2 + $0x31] sm:$0xff]
      %v310 = vld [vmem:[#allocation2 + $0x41] sm:$0xff]
      %v311 = vld [vmem:[#allocation2 + $0x51] sm:$0xff]
      %v312 = vld [vmem:[#allocation2 + $0x61] sm:$0xff]
      %v313 = vld [vmem:[#allocation2 + $0x71] sm:$0xff]
      %v314 = vpack.c.bf16 %v306, %v306
      %v315 = vpack.c.bf16 %v307, %v307
      %v316 = vpack.c.bf16 %v308, %v308
      %v317 = vpack.c.bf16 %v309, %v309
      %v318 = vpack.c.bf16 %v310, %v310
      %v319 = vpack.c.bf16 %v311, %v311
      %v320 = vpack.c.bf16 %v312, %v312
      %v321 = vpack.c.bf16 %v313, %v313
      %s322 = scalar_lea.vmem %s2, 64
      %v323 = vld [vmem:[%s322] sm:$0xf]
      %v324 = vld [vmem:[%s322 + $0x4] sm:$0xf]
      %v325 = vld [vmem:[%s322 + $0x8] sm:$0xf]
      %v326 = vld [vmem:[%s322 + $0xc] sm:$0xf]
      %v327 = vld [vmem:[%s322 + $0x10] sm:$0xf]
      %v328 = vld [vmem:[%s322 + $0x14] sm:$0xf]
      %v329 = vld [vmem:[%s322 + $0x18] sm:$0xf]
      %v330 = vld [vmem:[%s322 + $0x1c] sm:$0xf]
      %v331 = vld [vmem:[%s322 + $0x20] sm:$0xf]
      %v332 = vld [vmem:[%s322 + $0x24] sm:$0xf]
      %v333 = vld [vmem:[%s322 + $0x28] sm:$0xf]
      %v334 = vld [vmem:[%s322 + $0x2c] sm:$0xf]
      %v335 = vld [vmem:[%s322 + $0x30] sm:$0xf]
      %v336 = vld [vmem:[%s322 + $0x34] sm:$0xf]
      %v337 = vld [vmem:[%s322 + $0x38] sm:$0xf]
      %v338 = vld [vmem:[%s322 + $0x3c] sm:$0xf]
      %v347 = vunpack.c.l.b16 %v314
      %v348 = vunpack.c.l.b16 %v315
      %v349 = vunpack.c.l.b16 %v316
      %v350 = vunpack.c.l.b16 %v317
      %v351 = vunpack.c.l.b16 %v318
      %v352 = vunpack.c.l.b16 %v319
      %v353 = vunpack.c.l.b16 %v320
      %v354 = vunpack.c.l.b16 %v321
      %v355 = vpack.c.b16 %v348, %v347
      %v356 = vpack.c.b16 %v350, %v349
      %v357 = vpack.c.b16 %v352, %v351
      %v358 = vpack.c.b16 %v354, %v353
      %v379 = vunpack.c.l.b16 %v323
      %v380 = vunpack.c.l.b16 %v324
      %v381 = vunpack.c.l.b16 %v325
      %v382 = vunpack.c.l.b16 %v326
      %v383 = vunpack.c.l.b16 %v327
      %v384 = vunpack.c.l.b16 %v328
      %v385 = vunpack.c.l.b16 %v329
      %v386 = vunpack.c.l.b16 %v330
      %v387 = vunpack.c.l.b16 %v331
      %v388 = vunpack.c.l.b16 %v332
      %v389 = vunpack.c.l.b16 %v333
      %v390 = vunpack.c.l.b16 %v334
      %v391 = vunpack.c.l.b16 %v335
      %v392 = vunpack.c.l.b16 %v336
      %v393 = vunpack.c.l.b16 %v337
      %v394 = vunpack.c.l.b16 %v338
      %v395 = vpack.c.b16 %v380, %v379
      %v396 = vpack.c.b16 %v382, %v381
      %v397 = vpack.c.b16 %v384, %v383
      %v398 = vpack.c.b16 %v386, %v385
      %v399 = vpack.c.b16 %v388, %v387
      %v400 = vpack.c.b16 %v390, %v389
      %v401 = vpack.c.b16 %v392, %v391
      %v402 = vpack.c.b16 %v394, %v393
      %411 = vmatpush.bf16.msra.mxu0 %v402
      %412 = vmatpush.bf16.msra.mxu0 %v401
      %413 = vmatpush.bf16.msra.mxu0 %v400
      %414 = vmatpush.bf16.msra.mxu0 %v399
      %415 = vmatpush.bf16.msra.mxu0 %v398
      %416 = vmatpush.bf16.msra.mxu0 %v397
      %417 = vmatpush.bf16.msra.mxu0 %v396
      %418 = vmatpush.bf16.msra.mxu0 %v395
      %419 = vmatmul.bf16.gmra.mxu0 %v355
      %v420 = vpop.f32.mrf.mxu0
      %v421 = vadd.f32 0.0, %v420
      %v422 = vpop.f32.mrf.mxu0
      %v423 = vadd.f32 0.0, %v422
      %424 = vmatmul.bf16.gmra.mxu0 %v356
      %v425 = vpop.f32.mrf.mxu0
      %v426 = vadd.f32 0.0, %v425
      %v427 = vpop.f32.mrf.mxu0
      %v428 = vadd.f32 0.0, %v427
      %429 = vmatmul.bf16.gmra.mxu0 %v357
      %v430 = vpop.f32.mrf.mxu0
      %v431 = vadd.f32 0.0, %v430
      %v432 = vpop.f32.mrf.mxu0
      %v433 = vadd.f32 0.0, %v432
      %434 = vmatmul.bf16.gmra.mxu0 %v358
      %v435 = vpop.f32.mrf.mxu0
      %v436 = vadd.f32 0.0, %v435
      %v437 = vpop.f32.mrf.mxu0
      %v438 = vadd.f32 0.0, %v437
      %439 = vdwg.mxu0
      %v448 = vunpack.c.l.b16 %v282
      %v449 = vunpack.c.l.b16 %v283
      %v450 = vunpack.c.l.b16 %v284
      %v451 = vunpack.c.l.b16 %v285
      %v452 = vunpack.c.l.b16 %v286
      %v453 = vunpack.c.l.b16 %v287
      %v454 = vunpack.c.l.b16 %v288
      %v455 = vunpack.c.l.b16 %v289
      %v456 = vpack.c.b16 %v449, %v448
      %v457 = vpack.c.b16 %v451, %v450
      %v458 = vpack.c.b16 %v453, %v452
      %v459 = vpack.c.b16 %v455, %v454
      %v480 = vunpack.c.l.b16 %v290
      %v481 = vunpack.c.l.b16 %v291
      %v482 = vunpack.c.l.b16 %v292
      %v483 = vunpack.c.l.b16 %v293
      %v484 = vunpack.c.l.b16 %v294
      %v485 = vunpack.c.l.b16 %v295
      %v486 = vunpack.c.l.b16 %v296
      %v487 = vunpack.c.l.b16 %v297
      %v488 = vunpack.c.l.b16 %v298
      %v489 = vunpack.c.l.b16 %v299
      %v490 = vunpack.c.l.b16 %v300
      %v491 = vunpack.c.l.b16 %v301
      %v492 = vunpack.c.l.b16 %v302
      %v493 = vunpack.c.l.b16 %v303
      %v494 = vunpack.c.l.b16 %v304
      %v495 = vunpack.c.l.b16 %v305
      %v496 = vpack.c.b16 %v481, %v480
      %v497 = vpack.c.b16 %v483, %v482
      %v498 = vpack.c.b16 %v485, %v484
      %v499 = vpack.c.b16 %v487, %v486
      %v500 = vpack.c.b16 %v489, %v488
      %v501 = vpack.c.b16 %v491, %v490
      %v502 = vpack.c.b16 %v493, %v492
      %v503 = vpack.c.b16 %v495, %v494
      %512 = vmatpush.bf16.msra.mxu0 %v503
      %513 = vmatpush.bf16.msra.mxu0 %v502
      %514 = vmatpush.bf16.msra.mxu0 %v501
      %515 = vmatpush.bf16.msra.mxu0 %v500
      %516 = vmatpush.bf16.msra.mxu0 %v499
      %517 = vmatpush.bf16.msra.mxu0 %v498
      %518 = vmatpush.bf16.msra.mxu0 %v497
      %519 = vmatpush.bf16.msra.mxu0 %v496
      %520 = vmatmul.bf16.gmra.mxu0 %v456
      %v521 = vpop.f32.mrf.mxu0
      %v522 = vadd.f32 %v421, %v521
      %v523 = vpop.f32.mrf.mxu0
      %v524 = vadd.f32 %v423, %v523
      %525 = vmatmul.bf16.gmra.mxu0 %v457
      %v526 = vpop.f32.mrf.mxu0
      %v527 = vadd.f32 %v426, %v526
      %v528 = vpop.f32.mrf.mxu0
      %v529 = vadd.f32 %v428, %v528
      %530 = vmatmul.bf16.gmra.mxu0 %v458
      %v531 = vpop.f32.mrf.mxu0
      %v532 = vadd.f32 %v431, %v531
      %v533 = vpop.f32.mrf.mxu0
      %v534 = vadd.f32 %v433, %v533
      %535 = vmatmul.bf16.gmra.mxu0 %v459
      %v536 = vpop.f32.mrf.mxu0
      %v537 = vadd.f32 %v436, %v536
      %v538 = vpop.f32.mrf.mxu0
      %v539 = vadd.f32 %v438, %v538
      %540 = vdwg.mxu0
      %v541 = vld [vmem:[#allocation2 + $0x2] sm:$0xff]
      %v542 = vld [vmem:[#allocation2 + $0x12] sm:$0xff]
      %v543 = vld [vmem:[#allocation2 + $0x22] sm:$0xff]
      %v544 = vld [vmem:[#allocation2 + $0x32] sm:$0xff]
      %v545 = vld [vmem:[#allocation2 + $0x42] sm:$0xff]
      %v546 = vld [vmem:[#allocation2 + $0x52] sm:$0xff]
      %v547 = vld [vmem:[#allocation2 + $0x62] sm:$0xff]
      %v548 = vld [vmem:[#allocation2 + $0x72] sm:$0xff]
      %v549 = vpack.c.bf16 %v541, %v541
      %v550 = vpack.c.bf16 %v542, %v542
      %v551 = vpack.c.bf16 %v543, %v543
      %v552 = vpack.c.bf16 %v544, %v544
      %v553 = vpack.c.bf16 %v545, %v545
      %v554 = vpack.c.bf16 %v546, %v546
      %v555 = vpack.c.bf16 %v547, %v547
      %v556 = vpack.c.bf16 %v548, %v548
      %s557 = scalar_lea.vmem %s2, 128
      %v558 = vld [vmem:[%s557] sm:$0xf]
      %v559 = vld [vmem:[%s557 + $0x4] sm:$0xf]
      %v560 = vld [vmem:[%s557 + $0x8] sm:$0xf]
      %v561 = vld [vmem:[%s557 + $0xc] sm:$0xf]
      %v562 = vld [vmem:[%s557 + $0x10] sm:$0xf]
      %v563 = vld [vmem:[%s557 + $0x14] sm:$0xf]
      %v564 = vld [vmem:[%s557 + $0x18] sm:$0xf]
      %v565 = vld [vmem:[%s557 + $0x1c] sm:$0xf]
      %v566 = vld [vmem:[%s557 + $0x20] sm:$0xf]
      %v567 = vld [vmem:[%s557 + $0x24] sm:$0xf]
      %v568 = vld [vmem:[%s557 + $0x28] sm:$0xf]
      %v569 = vld [vmem:[%s557 + $0x2c] sm:$0xf]
      %v570 = vld [vmem:[%s557 + $0x30] sm:$0xf]
      %v571 = vld [vmem:[%s557 + $0x34] sm:$0xf]
      %v572 = vld [vmem:[%s557 + $0x38] sm:$0xf]
      %v573 = vld [vmem:[%s557 + $0x3c] sm:$0xf]
      %v582 = vunpack.c.l.b16 %v549
      %v583 = vunpack.c.l.b16 %v550
      %v584 = vunpack.c.l.b16 %v551
      %v585 = vunpack.c.l.b16 %v552
      %v586 = vunpack.c.l.b16 %v553
      %v587 = vunpack.c.l.b16 %v554
      %v588 = vunpack.c.l.b16 %v555
      %v589 = vunpack.c.l.b16 %v556
      %v590 = vpack.c.b16 %v583, %v582
      %v591 = vpack.c.b16 %v585, %v584
      %v592 = vpack.c.b16 %v587, %v586
      %v593 = vpack.c.b16 %v589, %v588
      %v614 = vunpack.c.l.b16 %v558
      %v615 = vunpack.c.l.b16 %v559
      %v616 = vunpack.c.l.b16 %v560
      %v617 = vunpack.c.l.b16 %v561
      %v618 = vunpack.c.l.b16 %v562
      %v619 = vunpack.c.l.b16 %v563
      %v620 = vunpack.c.l.b16 %v564
      %v621 = vunpack.c.l.b16 %v565
      %v622 = vunpack.c.l.b16 %v566
      %v623 = vunpack.c.l.b16 %v567
      %v624 = vunpack.c.l.b16 %v568
      %v625 = vunpack.c.l.b16 %v569
      %v626 = vunpack.c.l.b16 %v570
      %v627 = vunpack.c.l.b16 %v571
      %v628 = vunpack.c.l.b16 %v572
      %v629 = vunpack.c.l.b16 %v573
      %v630 = vpack.c.b16 %v615, %v614
      %v631 = vpack.c.b16 %v617, %v616
      %v632 = vpack.c.b16 %v619, %v618
      %v633 = vpack.c.b16 %v621, %v620
      %v634 = vpack.c.b16 %v623, %v622
      %v635 = vpack.c.b16 %v625, %v624
      %v636 = vpack.c.b16 %v627, %v626
      %v637 = vpack.c.b16 %v629, %v628
      %646 = vmatpush.bf16.msra.mxu0 %v637
      %647 = vmatpush.bf16.msra.mxu0 %v636
      %648 = vmatpush.bf16.msra.mxu0 %v635
      %649 = vmatpush.bf16.msra.mxu0 %v634
      %650 = vmatpush.bf16.msra.mxu0 %v633
      %651 = vmatpush.bf16.msra.mxu0 %v632
      %652 = vmatpush.bf16.msra.mxu0 %v631
      %653 = vmatpush.bf16.msra.mxu0 %v630
      %654 = vmatmul.bf16.gmra.mxu0 %v590
      %v655 = vpop.f32.mrf.mxu0
      %v656 = vadd.f32 0.0, %v655
      %v657 = vpop.f32.mrf.mxu0
      %v658 = vadd.f32 0.0, %v657
      %659 = vmatmul.bf16.gmra.mxu0 %v591
      %v660 = vpop.f32.mrf.mxu0
      %v661 = vadd.f32 0.0, %v660
      %v662 = vpop.f32.mrf.mxu0
      %v663 = vadd.f32 0.0, %v662
      %664 = vmatmul.bf16.gmra.mxu0 %v592
      %v665 = vpop.f32.mrf.mxu0
      %v666 = vadd.f32 0.0, %v665
      %v667 = vpop.f32.mrf.mxu0
      %v668 = vadd.f32 0.0, %v667
      %669 = vmatmul.bf16.gmra.mxu0 %v593
      %v670 = vpop.f32.mrf.mxu0
      %v671 = vadd.f32 0.0, %v670
      %v672 = vpop.f32.mrf.mxu0
      %v673 = vadd.f32 0.0, %v672
      %674 = vdwg.mxu0
      %v675 = vadd.f32 %v522, %v656
      %v676 = vadd.f32 %v524, %v658
      %v677 = vadd.f32 %v527, %v661
      %v678 = vadd.f32 %v529, %v663
      %v679 = vadd.f32 %v532, %v666
      %v680 = vadd.f32 %v534, %v668
      %v681 = vadd.f32 %v537, %v671
      %v682 = vadd.f32 %v539, %v673
      %v683 = vld [vmem:[%s265] sm:$0xff]
      %v684 = vld [vmem:[%s265 + $0x10] sm:$0xff]
      %v685 = vld [vmem:[%s265 + $0x20] sm:$0xff]
      %v686 = vld [vmem:[%s265 + $0x30] sm:$0xff]
      %v687 = vld [vmem:[%s265 + $0x40] sm:$0xff]
      %v688 = vld [vmem:[%s265 + $0x50] sm:$0xff]
      %v689 = vld [vmem:[%s265 + $0x60] sm:$0xff]
      %v690 = vld [vmem:[%s265 + $0x70] sm:$0xff]
      %v691 = vpack.c.bf16 %v683, %v683
      %v692 = vpack.c.bf16 %v684, %v684
      %v693 = vpack.c.bf16 %v685, %v685
      %v694 = vpack.c.bf16 %v686, %v686
      %v695 = vpack.c.bf16 %v687, %v687
      %v696 = vpack.c.bf16 %v688, %v688
      %v697 = vpack.c.bf16 %v689, %v689
      %v698 = vpack.c.bf16 %v690, %v690
      %s699 = scalar_lea.vmem %s2, 192
      %v700 = vld [vmem:[%s699] sm:$0xf]
      %v701 = vld [vmem:[%s699 + $0x4] sm:$0xf]
      %v702 = vld [vmem:[%s699 + $0x8] sm:$0xf]
      %v703 = vld [vmem:[%s699 + $0xc] sm:$0xf]
      %v704 = vld [vmem:[%s699 + $0x10] sm:$0xf]
      %v705 = vld [vmem:[%s699 + $0x14] sm:$0xf]
      %v706 = vld [vmem:[%s699 + $0x18] sm:$0xf]
      %v707 = vld [vmem:[%s699 + $0x1c] sm:$0xf]
      %v708 = vld [vmem:[%s699 + $0x20] sm:$0xf]
      %v709 = vld [vmem:[%s699 + $0x24] sm:$0xf]
      %v710 = vld [vmem:[%s699 + $0x28] sm:$0xf]
      %v711 = vld [vmem:[%s699 + $0x2c] sm:$0xf]
      %v712 = vld [vmem:[%s699 + $0x30] sm:$0xf]
      %v713 = vld [vmem:[%s699 + $0x34] sm:$0xf]
      %v714 = vld [vmem:[%s699 + $0x38] sm:$0xf]
      %v715 = vld [vmem:[%s699 + $0x3c] sm:$0xf]
      %v724 = vunpack.c.l.b16 %v691
      %v725 = vunpack.c.l.b16 %v692
      %v726 = vunpack.c.l.b16 %v693
      %v727 = vunpack.c.l.b16 %v694
      %v728 = vunpack.c.l.b16 %v695
      %v729 = vunpack.c.l.b16 %v696
      %v730 = vunpack.c.l.b16 %v697
      %v731 = vunpack.c.l.b16 %v698
      %v732 = vpack.c.b16 %v725, %v724
      %v733 = vpack.c.b16 %v727, %v726
      %v734 = vpack.c.b16 %v729, %v728
      %v735 = vpack.c.b16 %v731, %v730
      %v756 = vunpack.c.l.b16 %v700
      %v757 = vunpack.c.l.b16 %v701
      %v758 = vunpack.c.l.b16 %v702
      %v759 = vunpack.c.l.b16 %v703
      %v760 = vunpack.c.l.b16 %v704
      %v761 = vunpack.c.l.b16 %v705
      %v762 = vunpack.c.l.b16 %v706
      %v763 = vunpack.c.l.b16 %v707
      %v764 = vunpack.c.l.b16 %v708
      %v765 = vunpack.c.l.b16 %v709
      %v766 = vunpack.c.l.b16 %v710
      %v767 = vunpack.c.l.b16 %v711
      %v768 = vunpack.c.l.b16 %v712
      %v769 = vunpack.c.l.b16 %v713
      %v770 = vunpack.c.l.b16 %v714
      %v771 = vunpack.c.l.b16 %v715
      %v772 = vpack.c.b16 %v757, %v756
      %v773 = vpack.c.b16 %v759, %v758
      %v774 = vpack.c.b16 %v761, %v760
      %v775 = vpack.c.b16 %v763, %v762
      %v776 = vpack.c.b16 %v765, %v764
      %v777 = vpack.c.b16 %v767, %v766
      %v778 = vpack.c.b16 %v769, %v768
      %v779 = vpack.c.b16 %v771, %v770
      %788 = vmatpush.bf16.msra.mxu0 %v779
      %789 = vmatpush.bf16.msra.mxu0 %v778
      %790 = vmatpush.bf16.msra.mxu0 %v777
      %791 = vmatpush.bf16.msra.mxu0 %v776
      %792 = vmatpush.bf16.msra.mxu0 %v775
      %793 = vmatpush.bf16.msra.mxu0 %v774
      %794 = vmatpush.bf16.msra.mxu0 %v773
      %795 = vmatpush.bf16.msra.mxu0 %v772
      %796 = vmatmul.bf16.gmra.mxu0 %v732
      %v797 = vpop.f32.mrf.mxu0
      %v798 = vadd.f32 0.0, %v797
      %v799 = vpop.f32.mrf.mxu0
      %v800 = vadd.f32 0.0, %v799
      %801 = vmatmul.bf16.gmra.mxu0 %v733
      %v802 = vpop.f32.mrf.mxu0
      %v803 = vadd.f32 0.0, %v802
      %v804 = vpop.f32.mrf.mxu0
      %v805 = vadd.f32 0.0, %v804
      %806 = vmatmul.bf16.gmra.mxu0 %v734
      %v807 = vpop.f32.mrf.mxu0
      %v808 = vadd.f32 0.0, %v807
      %v809 = vpop.f32.mrf.mxu0
      %v810 = vadd.f32 0.0, %v809
      %811 = vmatmul.bf16.gmra.mxu0 %v735
      %v812 = vpop.f32.mrf.mxu0
      %v813 = vadd.f32 0.0, %v812
      %v814 = vpop.f32.mrf.mxu0
      %v815 = vadd.f32 0.0, %v814
      %816 = vdwg.mxu0
      %v817 = vadd.f32 %v675, %v798
      %v818 = vadd.f32 %v676, %v800
      %v819 = vadd.f32 %v677, %v803
      %v820 = vadd.f32 %v678, %v805
      %v821 = vadd.f32 %v679, %v808
      %v822 = vadd.f32 %v680, %v810
      %v823 = vadd.f32 %v681, %v813
      %v824 = vadd.f32 %v682, %v815
      %v825 = vld [vmem:[%s265 + $0x1] sm:$0xff]
      %v826 = vld [vmem:[%s265 + $0x11] sm:$0xff]
      %v827 = vld [vmem:[%s265 + $0x21] sm:$0xff]
      %v828 = vld [vmem:[%s265 + $0x31] sm:$0xff]
      %v829 = vld [vmem:[%s265 + $0x41] sm:$0xff]
      %v830 = vld [vmem:[%s265 + $0x51] sm:$0xff]
      %v831 = vld [vmem:[%s265 + $0x61] sm:$0xff]
      %v832 = vld [vmem:[%s265 + $0x71] sm:$0xff]
      %v833 = vpack.c.bf16 %v825, %v825
      %v834 = vpack.c.bf16 %v826, %v826
      %v835 = vpack.c.bf16 %v827, %v827
      %v836 = vpack.c.bf16 %v828, %v828
      %v837 = vpack.c.bf16 %v829, %v829
      %v838 = vpack.c.bf16 %v830, %v830
      %v839 = vpack.c.bf16 %v831, %v831
      %v840 = vpack.c.bf16 %v832, %v832
      %s841 = scalar_lea.vmem %s2, 256
      %v842 = vld [vmem:[%s841] sm:$0xf]
      %v843 = vld [vmem:[%s841 + $0x4] sm:$0xf]
      %v844 = vld [vmem:[%s841 + $0x8] sm:$0xf]
      %v845 = vld [vmem:[%s841 + $0xc] sm:$0xf]
      %v846 = vld [vmem:[%s841 + $0x10] sm:$0xf]
      %v847 = vld [vmem:[%s841 + $0x14] sm:$0xf]
      %v848 = vld [vmem:[%s841 + $0x18] sm:$0xf]
      %v849 = vld [vmem:[%s841 + $0x1c] sm:$0xf]
      %v850 = vld [vmem:[%s841 + $0x20] sm:$0xf]
      %v851 = vld [vmem:[%s841 + $0x24] sm:$0xf]
      %v852 = vld [vmem:[%s841 + $0x28] sm:$0xf]
      %v853 = vld [vmem:[%s841 + $0x2c] sm:$0xf]
      %v854 = vld [vmem:[%s841 + $0x30] sm:$0xf]
      %v855 = vld [vmem:[%s841 + $0x34] sm:$0xf]
      %v856 = vld [vmem:[%s841 + $0x38] sm:$0xf]
      %v857 = vld [vmem:[%s841 + $0x3c] sm:$0xf]
      %v866 = vunpack.c.l.b16 %v833
      %v867 = vunpack.c.l.b16 %v834
      %v868 = vunpack.c.l.b16 %v835
      %v869 = vunpack.c.l.b16 %v836
      %v870 = vunpack.c.l.b16 %v837
      %v871 = vunpack.c.l.b16 %v838
      %v872 = vunpack.c.l.b16 %v839
      %v873 = vunpack.c.l.b16 %v840
      %v874 = vpack.c.b16 %v867, %v866
      %v875 = vpack.c.b16 %v869, %v868
      %v876 = vpack.c.b16 %v871, %v870
      %v877 = vpack.c.b16 %v873, %v872
      %v898 = vunpack.c.l.b16 %v842
      %v899 = vunpack.c.l.b16 %v843
      %v900 = vunpack.c.l.b16 %v844
      %v901 = vunpack.c.l.b16 %v845
      %v902 = vunpack.c.l.b16 %v846
      %v903 = vunpack.c.l.b16 %v847
      %v904 = vunpack.c.l.b16 %v848
      %v905 = vunpack.c.l.b16 %v849
      %v906 = vunpack.c.l.b16 %v850
      %v907 = vunpack.c.l.b16 %v851
      %v908 = vunpack.c.l.b16 %v852
      %v909 = vunpack.c.l.b16 %v853
      %v910 = vunpack.c.l.b16 %v854
      %v911 = vunpack.c.l.b16 %v855
      %v912 = vunpack.c.l.b16 %v856
      %v913 = vunpack.c.l.b16 %v857
      %v914 = vpack.c.b16 %v899, %v898
      %v915 = vpack.c.b16 %v901, %v900
      %v916 = vpack.c.b16 %v903, %v902
      %v917 = vpack.c.b16 %v905, %v904
      %v918 = vpack.c.b16 %v907, %v906
      %v919 = vpack.c.b16 %v909, %v908
      %v920 = vpack.c.b16 %v911, %v910
      %v921 = vpack.c.b16 %v913, %v912
      %930 = vmatpush.bf16.msra.mxu0 %v921
      %931 = vmatpush.bf16.msra.mxu0 %v920
      %932 = vmatpush.bf16.msra.mxu0 %v919
      %933 = vmatpush.bf16.msra.mxu0 %v918
      %934 = vmatpush.bf16.msra.mxu0 %v917
      %935 = vmatpush.bf16.msra.mxu0 %v916
      %936 = vmatpush.bf16.msra.mxu0 %v915
      %937 = vmatpush.bf16.msra.mxu0 %v914
      %938 = vmatmul.bf16.gmra.mxu0 %v874
      %v939 = vpop.f32.mrf.mxu0
      %v940 = vadd.f32 0.0, %v939
      %v941 = vpop.f32.mrf.mxu0
      %v942 = vadd.f32 0.0, %v941
      %943 = vmatmul.bf16.gmra.mxu0 %v875
      %v944 = vpop.f32.mrf.mxu0
      %v945 = vadd.f32 0.0, %v944
      %v946 = vpop.f32.mrf.mxu0
      %v947 = vadd.f32 0.0, %v946
      %948 = vmatmul.bf16.gmra.mxu0 %v876
      %v949 = vpop.f32.mrf.mxu0
      %v950 = vadd.f32 0.0, %v949
      %v951 = vpop.f32.mrf.mxu0
      %v952 = vadd.f32 0.0, %v951
      %953 = vmatmul.bf16.gmra.mxu0 %v877
      %v954 = vpop.f32.mrf.mxu0
      %v955 = vadd.f32 0.0, %v954
      %v956 = vpop.f32.mrf.mxu0
      %v957 = vadd.f32 0.0, %v956
      %958 = vdwg.mxu0
      %v959 = vadd.f32 %v817, %v940
      %v960 = vadd.f32 %v818, %v942
      %v961 = vadd.f32 %v819, %v945
      %v962 = vadd.f32 %v820, %v947
      %v963 = vadd.f32 %v821, %v950
      %v964 = vadd.f32 %v822, %v952
      %v965 = vadd.f32 %v823, %v955
      %v966 = vadd.f32 %v824, %v957
      %v967 = vld [vmem:[%s265 + $0x2] sm:$0xff]
      %v968 = vld [vmem:[%s265 + $0x12] sm:$0xff]
      %v969 = vld [vmem:[%s265 + $0x22] sm:$0xff]
      %v970 = vld [vmem:[%s265 + $0x32] sm:$0xff]
      %v971 = vld [vmem:[%s265 + $0x42] sm:$0xff]
      %v972 = vld [vmem:[%s265 + $0x52] sm:$0xff]
      %v973 = vld [vmem:[%s265 + $0x62] sm:$0xff]
      %v974 = vld [vmem:[%s265 + $0x72] sm:$0xff]
      %v975 = vpack.c.bf16 %v967, %v967
      %v976 = vpack.c.bf16 %v968, %v968
      %v977 = vpack.c.bf16 %v969, %v969
      %v978 = vpack.c.bf16 %v970, %v970
      %v979 = vpack.c.bf16 %v971, %v971
      %v980 = vpack.c.bf16 %v972, %v972
      %v981 = vpack.c.bf16 %v973, %v973
      %v982 = vpack.c.bf16 %v974, %v974
      %s983 = scalar_lea.vmem %s2, 320
      %v984 = vld [vmem:[%s983] sm:$0xf]
      %v985 = vld [vmem:[%s983 + $0x4] sm:$0xf]
      %v986 = vld [vmem:[%s983 + $0x8] sm:$0xf]
      %v987 = vld [vmem:[%s983 + $0xc] sm:$0xf]
      %v988 = vld [vmem:[%s983 + $0x10] sm:$0xf]
      %v989 = vld [vmem:[%s983 + $0x14] sm:$0xf]
      %v990 = vld [vmem:[%s983 + $0x18] sm:$0xf]
      %v991 = vld [vmem:[%s983 + $0x1c] sm:$0xf]
      %v992 = vld [vmem:[%s983 + $0x20] sm:$0xf]
      %v993 = vld [vmem:[%s983 + $0x24] sm:$0xf]
      %v994 = vld [vmem:[%s983 + $0x28] sm:$0xf]
      %v995 = vld [vmem:[%s983 + $0x2c] sm:$0xf]
      %v996 = vld [vmem:[%s983 + $0x30] sm:$0xf]
      %v997 = vld [vmem:[%s983 + $0x34] sm:$0xf]
      %v998 = vld [vmem:[%s983 + $0x38] sm:$0xf]
      %v999 = vld [vmem:[%s983 + $0x3c] sm:$0xf]
      %v1008 = vunpack.c.l.b16 %v975
      %v1009 = vunpack.c.l.b16 %v976
      %v1010 = vunpack.c.l.b16 %v977
      %v1011 = vunpack.c.l.b16 %v978
      %v1012 = vunpack.c.l.b16 %v979
      %v1013 = vunpack.c.l.b16 %v980
      %v1014 = vunpack.c.l.b16 %v981
      %v1015 = vunpack.c.l.b16 %v982
      %v1016 = vpack.c.b16 %v1009, %v1008
      %v1017 = vpack.c.b16 %v1011, %v1010
      %v1018 = vpack.c.b16 %v1013, %v1012
      %v1019 = vpack.c.b16 %v1015, %v1014
      %v1040 = vunpack.c.l.b16 %v984
      %v1041 = vunpack.c.l.b16 %v985
      %v1042 = vunpack.c.l.b16 %v986
      %v1043 = vunpack.c.l.b16 %v987
      %v1044 = vunpack.c.l.b16 %v988
      %v1045 = vunpack.c.l.b16 %v989
      %v1046 = vunpack.c.l.b16 %v990
      %v1047 = vunpack.c.l.b16 %v991
      %v1048 = vunpack.c.l.b16 %v992
      %v1049 = vunpack.c.l.b16 %v993
      %v1050 = vunpack.c.l.b16 %v994
      %v1051 = vunpack.c.l.b16 %v995
      %v1052 = vunpack.c.l.b16 %v996
      %v1053 = vunpack.c.l.b16 %v997
      %v1054 = vunpack.c.l.b16 %v998
      %v1055 = vunpack.c.l.b16 %v999
      %v1056 = vpack.c.b16 %v1041, %v1040
      %v1057 = vpack.c.b16 %v1043, %v1042
      %v1058 = vpack.c.b16 %v1045, %v1044
      %v1059 = vpack.c.b16 %v1047, %v1046
      %v1060 = vpack.c.b16 %v1049, %v1048
      %v1061 = vpack.c.b16 %v1051, %v1050
      %v1062 = vpack.c.b16 %v1053, %v1052
      %v1063 = vpack.c.b16 %v1055, %v1054
      %1072 = vmatpush.bf16.msra.mxu0 %v1063
      %1073 = vmatpush.bf16.msra.mxu0 %v1062
      %1074 = vmatpush.bf16.msra.mxu0 %v1061
      %1075 = vmatpush.bf16.msra.mxu0 %v1060
      %1076 = vmatpush.bf16.msra.mxu0 %v1059
      %1077 = vmatpush.bf16.msra.mxu0 %v1058
      %1078 = vmatpush.bf16.msra.mxu0 %v1057
      %1079 = vmatpush.bf16.msra.mxu0 %v1056
      %1080 = vmatmul.bf16.gmra.mxu0 %v1016
      %v1081 = vpop.f32.mrf.mxu0
      %v1082 = vadd.f32 0.0, %v1081
      %v1083 = vpop.f32.mrf.mxu0
      %v1084 = vadd.f32 0.0, %v1083
      %1085 = vmatmul.bf16.gmra.mxu0 %v1017
      %v1086 = vpop.f32.mrf.mxu0
      %v1087 = vadd.f32 0.0, %v1086
      %v1088 = vpop.f32.mrf.mxu0
      %v1089 = vadd.f32 0.0, %v1088
      %1090 = vmatmul.bf16.gmra.mxu0 %v1018
      %v1091 = vpop.f32.mrf.mxu0
      %v1092 = vadd.f32 0.0, %v1091
      %v1093 = vpop.f32.mrf.mxu0
      %v1094 = vadd.f32 0.0, %v1093
      %1095 = vmatmul.bf16.gmra.mxu0 %v1019
      %v1096 = vpop.f32.mrf.mxu0
      %v1097 = vadd.f32 0.0, %v1096
      %v1098 = vpop.f32.mrf.mxu0
      %v1099 = vadd.f32 0.0, %v1098
      %1100 = vdwg.mxu0
      %v1101 = vadd.f32 %v959, %v1082
      %v1102 = vadd.f32 %v960, %v1084
      %v1103 = vadd.f32 %v961, %v1087
      %v1104 = vadd.f32 %v962, %v1089
      %v1105 = vadd.f32 %v963, %v1092
      %v1106 = vadd.f32 %v964, %v1094
      %v1107 = vadd.f32 %v965, %v1097
      %v1108 = vadd.f32 %v966, %v1099
      %s1109 = scalar_lea.vmem [#allocation2], 32
      %v1110 = vld [vmem:[%s1109] sm:$0xff]
      %v1111 = vld [vmem:[%s1109 + $0x10] sm:$0xff]
      %v1112 = vld [vmem:[%s1109 + $0x20] sm:$0xff]
      %v1113 = vld [vmem:[%s1109 + $0x30] sm:$0xff]
      %v1114 = vld [vmem:[%s1109 + $0x40] sm:$0xff]
      %v1115 = vld [vmem:[%s1109 + $0x50] sm:$0xff]
      %v1116 = vld [vmem:[%s1109 + $0x60] sm:$0xff]
      %v1117 = vld [vmem:[%s1109 + $0x70] sm:$0xff]
      %v1118 = vpack.c.bf16 %v1110, %v1110
      %v1119 = vpack.c.bf16 %v1111, %v1111
      %v1120 = vpack.c.bf16 %v1112, %v1112
      %v1121 = vpack.c.bf16 %v1113, %v1113
      %v1122 = vpack.c.bf16 %v1114, %v1114
      %v1123 = vpack.c.bf16 %v1115, %v1115
      %v1124 = vpack.c.bf16 %v1116, %v1116
      %v1125 = vpack.c.bf16 %v1117, %v1117
      %s1126 = scalar_lea.vmem %s2, 384
      %v1127 = vld [vmem:[%s1126] sm:$0xf]
      %v1128 = vld [vmem:[%s1126 + $0x4] sm:$0xf]
      %v1129 = vld [vmem:[%s1126 + $0x8] sm:$0xf]
      %v1130 = vld [vmem:[%s1126 + $0xc] sm:$0xf]
      %v1131 = vld [vmem:[%s1126 + $0x10] sm:$0xf]
      %v1132 = vld [vmem:[%s1126 + $0x14] sm:$0xf]
      %v1133 = vld [vmem:[%s1126 + $0x18] sm:$0xf]
      %v1134 = vld [vmem:[%s1126 + $0x1c] sm:$0xf]
      %v1135 = vld [vmem:[%s1126 + $0x20] sm:$0xf]
      %v1136 = vld [vmem:[%s1126 + $0x24] sm:$0xf]
      %v1137 = vld [vmem:[%s1126 + $0x28] sm:$0xf]
      %v1138 = vld [vmem:[%s1126 + $0x2c] sm:$0xf]
      %v1139 = vld [vmem:[%s1126 + $0x30] sm:$0xf]
      %v1140 = vld [vmem:[%s1126 + $0x34] sm:$0xf]
      %v1141 = vld [vmem:[%s1126 + $0x38] sm:$0xf]
      %v1142 = vld [vmem:[%s1126 + $0x3c] sm:$0xf]
      %v1151 = vunpack.c.l.b16 %v1118
      %v1152 = vunpack.c.l.b16 %v1119
      %v1153 = vunpack.c.l.b16 %v1120
      %v1154 = vunpack.c.l.b16 %v1121
      %v1155 = vunpack.c.l.b16 %v1122
      %v1156 = vunpack.c.l.b16 %v1123
      %v1157 = vunpack.c.l.b16 %v1124
      %v1158 = vunpack.c.l.b16 %v1125
      %v1159 = vpack.c.b16 %v1152, %v1151
      %v1160 = vpack.c.b16 %v1154, %v1153
      %v1161 = vpack.c.b16 %v1156, %v1155
      %v1162 = vpack.c.b16 %v1158, %v1157
      %v1183 = vunpack.c.l.b16 %v1127
      %v1184 = vunpack.c.l.b16 %v1128
      %v1185 = vunpack.c.l.b16 %v1129
      %v1186 = vunpack.c.l.b16 %v1130
      %v1187 = vunpack.c.l.b16 %v1131
      %v1188 = vunpack.c.l.b16 %v1132
      %v1189 = vunpack.c.l.b16 %v1133
      %v1190 = vunpack.c.l.b16 %v1134
      %v1191 = vunpack.c.l.b16 %v1135
      %v1192 = vunpack.c.l.b16 %v1136
      %v1193 = vunpack.c.l.b16 %v1137
      %v1194 = vunpack.c.l.b16 %v1138
      %v1195 = vunpack.c.l.b16 %v1139
      %v1196 = vunpack.c.l.b16 %v1140
      %v1197 = vunpack.c.l.b16 %v1141
      %v1198 = vunpack.c.l.b16 %v1142
      %v1199 = vpack.c.b16 %v1184, %v1183
      %v1200 = vpack.c.b16 %v1186, %v1185
      %v1201 = vpack.c.b16 %v1188, %v1187
      %v1202 = vpack.c.b16 %v1190, %v1189
      %v1203 = vpack.c.b16 %v1192, %v1191
      %v1204 = vpack.c.b16 %v1194, %v1193
      %v1205 = vpack.c.b16 %v1196, %v1195
      %v1206 = vpack.c.b16 %v1198, %v1197
      %1215 = vmatpush.bf16.msra.mxu0 %v1206
      %1216 = vmatpush.bf16.msra.mxu0 %v1205
      %1217 = vmatpush.bf16.msra.mxu0 %v1204
      %1218 = vmatpush.bf16.msra.mxu0 %v1203
      %1219 = vmatpush.bf16.msra.mxu0 %v1202
      %1220 = vmatpush.bf16.msra.mxu0 %v1201
      %1221 = vmatpush.bf16.msra.mxu0 %v1200
      %1222 = vmatpush.bf16.msra.mxu0 %v1199
      %1223 = vmatmul.bf16.gmra.mxu0 %v1159
      %v1224 = vpop.f32.mrf.mxu0
      %v1225 = vadd.f32 0.0, %v1224
      %v1226 = vpop.f32.mrf.mxu0
      %v1227 = vadd.f32 0.0, %v1226
      %1228 = vmatmul.bf16.gmra.mxu0 %v1160
      %v1229 = vpop.f32.mrf.mxu0
      %v1230 = vadd.f32 0.0, %v1229
      %v1231 = vpop.f32.mrf.mxu0
      %v1232 = vadd.f32 0.0, %v1231
      %1233 = vmatmul.bf16.gmra.mxu0 %v1161
      %v1234 = vpop.f32.mrf.mxu0
      %v1235 = vadd.f32 0.0, %v1234
      %v1236 = vpop.f32.mrf.mxu0
      %v1237 = vadd.f32 0.0, %v1236
      %1238 = vmatmul.bf16.gmra.mxu0 %v1162
      %v1239 = vpop.f32.mrf.mxu0
      %v1240 = vadd.f32 0.0, %v1239
      %v1241 = vpop.f32.mrf.mxu0
      %v1242 = vadd.f32 0.0, %v1241
      %1243 = vdwg.mxu0
      %v1244 = vadd.f32 %v1101, %v1225
      %v1245 = vadd.f32 %v1102, %v1227
      %v1246 = vadd.f32 %v1103, %v1230
      %v1247 = vadd.f32 %v1104, %v1232
      %v1248 = vadd.f32 %v1105, %v1235
      %v1249 = vadd.f32 %v1106, %v1237
      %v1250 = vadd.f32 %v1107, %v1240
      %v1251 = vadd.f32 %v1108, %v1242
      %v1252 = vld [vmem:[%s1109 + $0x1] sm:$0xff]
      %v1253 = vld [vmem:[%s1109 + $0x11] sm:$0xff]
      %v1254 = vld [vmem:[%s1109 + $0x21] sm:$0xff]
      %v1255 = vld [vmem:[%s1109 + $0x31] sm:$0xff]
      %v1256 = vld [vmem:[%s1109 + $0x41] sm:$0xff]
      %v1257 = vld [vmem:[%s1109 + $0x51] sm:$0xff]
      %v1258 = vld [vmem:[%s1109 + $0x61] sm:$0xff]
      %v1259 = vld [vmem:[%s1109 + $0x71] sm:$0xff]
      %v1260 = vpack.c.bf16 %v1252, %v1252
      %v1261 = vpack.c.bf16 %v1253, %v1253
      %v1262 = vpack.c.bf16 %v1254, %v1254
      %v1263 = vpack.c.bf16 %v1255, %v1255
      %v1264 = vpack.c.bf16 %v1256, %v1256
      %v1265 = vpack.c.bf16 %v1257, %v1257
      %v1266 = vpack.c.bf16 %v1258, %v1258
      %v1267 = vpack.c.bf16 %v1259, %v1259
      %s1268 = scalar_lea.vmem %s2, 448
      %v1269 = vld [vmem:[%s1268] sm:$0xf]
      %v1270 = vld [vmem:[%s1268 + $0x4] sm:$0xf]
      %v1271 = vld [vmem:[%s1268 + $0x8] sm:$0xf]
      %v1272 = vld [vmem:[%s1268 + $0xc] sm:$0xf]
      %v1273 = vld [vmem:[%s1268 + $0x10] sm:$0xf]
      %v1274 = vld [vmem:[%s1268 + $0x14] sm:$0xf]
      %v1275 = vld [vmem:[%s1268 + $0x18] sm:$0xf]
      %v1276 = vld [vmem:[%s1268 + $0x1c] sm:$0xf]
      %v1277 = vld [vmem:[%s1268 + $0x20] sm:$0xf]
      %v1278 = vld [vmem:[%s1268 + $0x24] sm:$0xf]
      %v1279 = vld [vmem:[%s1268 + $0x28] sm:$0xf]
      %v1280 = vld [vmem:[%s1268 + $0x2c] sm:$0xf]
      %v1281 = vld [vmem:[%s1268 + $0x30] sm:$0xf]
      %v1282 = vld [vmem:[%s1268 + $0x34] sm:$0xf]
      %v1283 = vld [vmem:[%s1268 + $0x38] sm:$0xf]
      %v1284 = vld [vmem:[%s1268 + $0x3c] sm:$0xf]
      %v1293 = vunpack.c.l.b16 %v1260
      %v1294 = vunpack.c.l.b16 %v1261
      %v1295 = vunpack.c.l.b16 %v1262
      %v1296 = vunpack.c.l.b16 %v1263
      %v1297 = vunpack.c.l.b16 %v1264
      %v1298 = vunpack.c.l.b16 %v1265
      %v1299 = vunpack.c.l.b16 %v1266
      %v1300 = vunpack.c.l.b16 %v1267
      %v1301 = vpack.c.b16 %v1294, %v1293
      %v1302 = vpack.c.b16 %v1296, %v1295
      %v1303 = vpack.c.b16 %v1298, %v1297
      %v1304 = vpack.c.b16 %v1300, %v1299
      %v1325 = vunpack.c.l.b16 %v1269
      %v1326 = vunpack.c.l.b16 %v1270
      %v1327 = vunpack.c.l.b16 %v1271
      %v1328 = vunpack.c.l.b16 %v1272
      %v1329 = vunpack.c.l.b16 %v1273
      %v1330 = vunpack.c.l.b16 %v1274
      %v1331 = vunpack.c.l.b16 %v1275
      %v1332 = vunpack.c.l.b16 %v1276
      %v1333 = vunpack.c.l.b16 %v1277
      %v1334 = vunpack.c.l.b16 %v1278
      %v1335 = vunpack.c.l.b16 %v1279
      %v1336 = vunpack.c.l.b16 %v1280
      %v1337 = vunpack.c.l.b16 %v1281
      %v1338 = vunpack.c.l.b16 %v1282
      %v1339 = vunpack.c.l.b16 %v1283
      %v1340 = vunpack.c.l.b16 %v1284
      %v1341 = vpack.c.b16 %v1326, %v1325
      %v1342 = vpack.c.b16 %v1328, %v1327
      %v1343 = vpack.c.b16 %v1330, %v1329
      %v1344 = vpack.c.b16 %v1332, %v1331
      %v1345 = vpack.c.b16 %v1334, %v1333
      %v1346 = vpack.c.b16 %v1336, %v1335
      %v1347 = vpack.c.b16 %v1338, %v1337
      %v1348 = vpack.c.b16 %v1340, %v1339
      %1357 = vmatpush.bf16.msra.mxu0 %v1348
      %1358 = vmatpush.bf16.msra.mxu0 %v1347
      %1359 = vmatpush.bf16.msra.mxu0 %v1346
      %1360 = vmatpush.bf16.msra.mxu0 %v1345
      %1361 = vmatpush.bf16.msra.mxu0 %v1344
      %1362 = vmatpush.bf16.msra.mxu0 %v1343
      %1363 = vmatpush.bf16.msra.mxu0 %v1342
      %1364 = vmatpush.bf16.msra.mxu0 %v1341
      %1365 = vmatmul.bf16.gmra.mxu0 %v1301
      %v1366 = vpop.f32.mrf.mxu0
      %v1367 = vadd.f32 0.0, %v1366
      %v1368 = vpop.f32.mrf.mxu0
      %v1369 = vadd.f32 0.0, %v1368
      %1370 = vmatmul.bf16.gmra.mxu0 %v1302
      %v1371 = vpop.f32.mrf.mxu0
      %v1372 = vadd.f32 0.0, %v1371
      %v1373 = vpop.f32.mrf.mxu0
      %v1374 = vadd.f32 0.0, %v1373
      %1375 = vmatmul.bf16.gmra.mxu0 %v1303
      %v1376 = vpop.f32.mrf.mxu0
      %v1377 = vadd.f32 0.0, %v1376
      %v1378 = vpop.f32.mrf.mxu0
      %v1379 = vadd.f32 0.0, %v1378
      %1380 = vmatmul.bf16.gmra.mxu0 %v1304
      %v1381 = vpop.f32.mrf.mxu0
      %v1382 = vadd.f32 0.0, %v1381
      %v1383 = vpop.f32.mrf.mxu0
      %v1384 = vadd.f32 0.0, %v1383
      %1385 = vdwg.mxu0
      %v1386 = vadd.f32 %v1244, %v1367
      %v1387 = vadd.f32 %v1245, %v1369
      %v1388 = vadd.f32 %v1246, %v1372
      %v1389 = vadd.f32 %v1247, %v1374
      %v1390 = vadd.f32 %v1248, %v1377
      %v1391 = vadd.f32 %v1249, %v1379
      %v1392 = vadd.f32 %v1250, %v1382
      %v1393 = vadd.f32 %v1251, %v1384
      %v1394 = vld [vmem:[%s1109 + $0x2] sm:$0xff]
      %v1395 = vld [vmem:[%s1109 + $0x12] sm:$0xff]
      %v1396 = vld [vmem:[%s1109 + $0x22] sm:$0xff]
      %v1397 = vld [vmem:[%s1109 + $0x32] sm:$0xff]
      %v1398 = vld [vmem:[%s1109 + $0x42] sm:$0xff]
      %v1399 = vld [vmem:[%s1109 + $0x52] sm:$0xff]
      %v1400 = vld [vmem:[%s1109 + $0x62] sm:$0xff]
      %v1401 = vld [vmem:[%s1109 + $0x72] sm:$0xff]
      %v1402 = vpack.c.bf16 %v1394, %v1394
      %v1403 = vpack.c.bf16 %v1395, %v1395
      %v1404 = vpack.c.bf16 %v1396, %v1396
      %v1405 = vpack.c.bf16 %v1397, %v1397
      %v1406 = vpack.c.bf16 %v1398, %v1398
      %v1407 = vpack.c.bf16 %v1399, %v1399
      %v1408 = vpack.c.bf16 %v1400, %v1400
      %v1409 = vpack.c.bf16 %v1401, %v1401
      %s1410 = scalar_lea.vmem %s2, 512
      %v1411 = vld [vmem:[%s1410] sm:$0xf]
      %v1412 = vld [vmem:[%s1410 + $0x4] sm:$0xf]
      %v1413 = vld [vmem:[%s1410 + $0x8] sm:$0xf]
      %v1414 = vld [vmem:[%s1410 + $0xc] sm:$0xf]
      %v1415 = vld [vmem:[%s1410 + $0x10] sm:$0xf]
      %v1416 = vld [vmem:[%s1410 + $0x14] sm:$0xf]
      %v1417 = vld [vmem:[%s1410 + $0x18] sm:$0xf]
      %v1418 = vld [vmem:[%s1410 + $0x1c] sm:$0xf]
      %v1419 = vld [vmem:[%s1410 + $0x20] sm:$0xf]
      %v1420 = vld [vmem:[%s1410 + $0x24] sm:$0xf]
      %v1421 = vld [vmem:[%s1410 + $0x28] sm:$0xf]
      %v1422 = vld [vmem:[%s1410 + $0x2c] sm:$0xf]
      %v1423 = vld [vmem:[%s1410 + $0x30] sm:$0xf]
      %v1424 = vld [vmem:[%s1410 + $0x34] sm:$0xf]
      %v1425 = vld [vmem:[%s1410 + $0x38] sm:$0xf]
      %v1426 = vld [vmem:[%s1410 + $0x3c] sm:$0xf]
      %v1435 = vunpack.c.l.b16 %v1402
      %v1436 = vunpack.c.l.b16 %v1403
      %v1437 = vunpack.c.l.b16 %v1404
      %v1438 = vunpack.c.l.b16 %v1405
      %v1439 = vunpack.c.l.b16 %v1406
      %v1440 = vunpack.c.l.b16 %v1407
      %v1441 = vunpack.c.l.b16 %v1408
      %v1442 = vunpack.c.l.b16 %v1409
      %v1443 = vpack.c.b16 %v1436, %v1435
      %v1444 = vpack.c.b16 %v1438, %v1437
      %v1445 = vpack.c.b16 %v1440, %v1439
      %v1446 = vpack.c.b16 %v1442, %v1441
      %v1467 = vunpack.c.l.b16 %v1411
      %v1468 = vunpack.c.l.b16 %v1412
      %v1469 = vunpack.c.l.b16 %v1413
      %v1470 = vunpack.c.l.b16 %v1414
      %v1471 = vunpack.c.l.b16 %v1415
      %v1472 = vunpack.c.l.b16 %v1416
      %v1473 = vunpack.c.l.b16 %v1417
      %v1474 = vunpack.c.l.b16 %v1418
      %v1475 = vunpack.c.l.b16 %v1419
      %v1476 = vunpack.c.l.b16 %v1420
      %v1477 = vunpack.c.l.b16 %v1421
      %v1478 = vunpack.c.l.b16 %v1422
      %v1479 = vunpack.c.l.b16 %v1423
      %v1480 = vunpack.c.l.b16 %v1424
      %v1481 = vunpack.c.l.b16 %v1425
      %v1482 = vunpack.c.l.b16 %v1426
      %v1483 = vpack.c.b16 %v1468, %v1467
      %v1484 = vpack.c.b16 %v1470, %v1469
      %v1485 = vpack.c.b16 %v1472, %v1471
      %v1486 = vpack.c.b16 %v1474, %v1473
      %v1487 = vpack.c.b16 %v1476, %v1475
      %v1488 = vpack.c.b16 %v1478, %v1477
      %v1489 = vpack.c.b16 %v1480, %v1479
      %v1490 = vpack.c.b16 %v1482, %v1481
      %1499 = vmatpush.bf16.msra.mxu0 %v1490
      %1500 = vmatpush.bf16.msra.mxu0 %v1489
      %1501 = vmatpush.bf16.msra.mxu0 %v1488
      %1502 = vmatpush.bf16.msra.mxu0 %v1487
      %1503 = vmatpush.bf16.msra.mxu0 %v1486
      %1504 = vmatpush.bf16.msra.mxu0 %v1485
      %1505 = vmatpush.bf16.msra.mxu0 %v1484
      %1506 = vmatpush.bf16.msra.mxu0 %v1483
      %1507 = vmatmul.bf16.gmra.mxu0 %v1443
      %v1508 = vpop.f32.mrf.mxu0
      %v1509 = vadd.f32 0.0, %v1508
      %v1510 = vpop.f32.mrf.mxu0
      %v1511 = vadd.f32 0.0, %v1510
      %1512 = vmatmul.bf16.gmra.mxu0 %v1444
      %v1513 = vpop.f32.mrf.mxu0
      %v1514 = vadd.f32 0.0, %v1513
      %v1515 = vpop.f32.mrf.mxu0
      %v1516 = vadd.f32 0.0, %v1515
      %1517 = vmatmul.bf16.gmra.mxu0 %v1445
      %v1518 = vpop.f32.mrf.mxu0
      %v1519 = vadd.f32 0.0, %v1518
      %v1520 = vpop.f32.mrf.mxu0
      %v1521 = vadd.f32 0.0, %v1520
      %1522 = vmatmul.bf16.gmra.mxu0 %v1446
      %v1523 = vpop.f32.mrf.mxu0
      %v1524 = vadd.f32 0.0, %v1523
      %v1525 = vpop.f32.mrf.mxu0
      %v1526 = vadd.f32 0.0, %v1525
      %1527 = vdwg.mxu0
      %v1528 = vadd.f32 %v1386, %v1509
      %v1529 = vadd.f32 %v1387, %v1511
      %v1530 = vadd.f32 %v1388, %v1514
      %v1531 = vadd.f32 %v1389, %v1516
      %v1532 = vadd.f32 %v1390, %v1519
      %v1533 = vadd.f32 %v1391, %v1521
      %v1534 = vadd.f32 %v1392, %v1524
      %v1535 = vadd.f32 %v1393, %v1526
      %1536 = vst [vmem:[%s204] sm:$0xff] %v1528
      %1537 = vst [vmem:[%s204 + $0x8] sm:$0xff] %v1529
      %1538 = vst [vmem:[%s204 + $0x10] sm:$0xff] %v1530
      %1539 = vst [vmem:[%s204 + $0x18] sm:$0xff] %v1531
      %1540 = vst [vmem:[%s204 + $0x20] sm:$0xff] %v1532
      %1541 = vst [vmem:[%s204 + $0x28] sm:$0xff] %v1533
      %1542 = vst [vmem:[%s204 + $0x30] sm:$0xff] %v1534
      %1543 = vst [vmem:[%s204 + $0x38] sm:$0xff] %v1535
      %v1544 = vadd.f32 %v1528, %v1529
      %v1545 = vadd.f32 %v1544, %v1530
      %v1546 = vadd.f32 %v1545, %v1531
      %v1547 = vadd.f32 %v1546, %v1532
      %v1548 = vadd.f32 %v1547, %v1533
      %v1549 = vadd.f32 %v1548, %v1534
      %v1550 = vadd.f32 %v1549, %v1535
      %v1551 = vrot.slane %v1550, 4
      %v1552 = vadd.f32 %v1550, %v1551
      %v1553 = vrot.slane %v1552, 2
      %v1554 = vadd.f32 %v1552, %v1553
      %v1555 = vrot.slane %v1554, 1
      %v1556 = vadd.f32 %v1554, %v1555
      %v1557 = vmul.f32 %v1528, %v1528
      %v1558 = vmul.f32 %v1529, %v1529
      %v1559 = vmul.f32 %v1530, %v1530
      %v1560 = vmul.f32 %v1531, %v1531
      %v1561 = vmul.f32 %v1532, %v1532
      %v1562 = vmul.f32 %v1533, %v1533
      %v1563 = vmul.f32 %v1534, %v1534
      %v1564 = vmul.f32 %v1535, %v1535
      %v1565 = vadd.f32 %v1557, %v1558
      %v1566 = vadd.f32 %v1565, %v1559
      %v1567 = vadd.f32 %v1566, %v1560
      %v1568 = vadd.f32 %v1567, %v1561
      %v1569 = vadd.f32 %v1568, %v1562
      %v1570 = vadd.f32 %v1569, %v1563
      %v1571 = vadd.f32 %v1570, %v1564
      %v1572 = vrot.slane %v1571, 4
      %v1573 = vadd.f32 %v1571, %v1572
      %v1574 = vrot.slane %v1573, 2
      %v1575 = vadd.f32 %v1573, %v1574
      %v1576 = vrot.slane %v1575, 1
      %v1577 = vadd.f32 %v1575, %v1576
      %vm1578 = vcmask 1040384
      %v1579 = vsel %vm1578, %v1556, %v1577
      %1580 = vst [vmem:[%s208] sm:$0x3] %v1579
      %p1581 = scmp.lt.s32.totalorder %s16, 1
      %s1582 = scalar_select %p1581, %s16, 1
      %s1583 = smul.addr %s1582, 8
      %s1584 = smul.addr %s1583, 8
      %s1585 = scalar_lea.vmem %s3, %s1584
      %p1586 = scmp.lt.s32.totalorder %s16, 1
      %s1587 = scalar_select %p1586, %s16, 1
      %s1588 = smul.addr %s1587, 2
      %s1589 = scalar_lea.vmem %s4, %s1588
      // Predicated region
      $region33: #{residual_block_pallas.4} parent=31 // pred_check
        %p1590 = pneg %p102
      $region34: #{residual_block_pallas.4} parent=31 // pred_check_branch
        %1592 = sbr.rel (%p1590) target = $region36
      $region35: #{residual_block_pallas.4} parent=31 // pred_region
        _
      $region36: #{residual_block_pallas.4} parent=31 // pred_fallthru
        _
      // Predicated region
      $region37: #{residual_block_pallas.4} parent=31 // pred_check
        %p1593 = pneg %p128
      $region38: #{residual_block_pallas.4} parent=31 // pred_check_branch
        %1595 = sbr.rel (%p1593) target = $region40
      $region39: #{residual_block_pallas.4} parent=31 // pred_region
        _
      $region40: #{residual_block_pallas.4} parent=31 // pred_fallthru
        _
    $region32: #{residual_block_pallas.4} parent=5 // pred_fallthru
      _
    %p1596 = scmp.le.s32.totalorder 2, %s11
    // Predicated region
    $region41: #{residual_block_pallas.4} parent=5 // pred_check
      %p1597 = pneg %p1596
    $region42: #{residual_block_pallas.4} parent=5 // pred_check_branch
      %1599 = sbr.rel (%p1597) target = $region44
    $region43: #{residual_block_pallas.4} parent=5 // pred_region
      %s1600 = ssub.s32 %s11, 2
      // Predicated region
      $region45: #{residual_block_pallas.4} parent=43 // pred_check
        %p1601 = pneg %p108
      $region46: #{residual_block_pallas.4} parent=43 // pred_check_branch
        %1603 = sbr.rel (%p1601) target = $region48
      $region47: #{residual_block_pallas.4} parent=43 // pred_region
        %p1604 = scmp.lt.s32.totalorder %s17, 1
        %s1605 = scalar_select %p1604, %s17, 1
        %s1606 = smul.addr %s1605, 8
        %s1607 = smul.addr %s1606, 8
        %s1608 = scalar_lea.vmem %s3, %s1607
      $region48: #{residual_block_pallas.4} parent=43 // pred_fallthru
        _
      // Predicated region
      $region49: #{residual_block_pallas.4} parent=43 // pred_check
        %p1609 = pneg %p134
      $region50: #{residual_block_pallas.4} parent=43 // pred_check_branch
        %1611 = sbr.rel (%p1609) target = $region52
      $region51: #{residual_block_pallas.4} parent=43 // pred_region
        %p1612 = scmp.lt.s32.totalorder %s17, 1
        %s1613 = scalar_select %p1612, %s17, 1
        %s1614 = smul.addr %s1613, 2
        %s1615 = scalar_lea.vmem %s4, %s1614
      $region52: #{residual_block_pallas.4} parent=43 // pred_fallthru
        _
    $region44: #{residual_block_pallas.4} parent=5 // pred_fallthru
      _
  $region6: #{residual_block_pallas.4} parent=0 // loop_footer
    %s15 = sadd.s32 1, %s11
  $region7: #{residual_block_pallas.4} parent=0 // loop_footer_branch
    %10 = sbr.rel target = $region3
  $region8: #{residual_block_pallas.4} parent=0 // loop_exit
    _

// kernel: residual_block_pallas.3
$region0: #{residual_block_pallas.3}
  #allocation0 [shape = 'u32[]', space=smem, size = 0x4, offset = 0x4, fixed_abs, tag = 'smem constant byte address 0x4 - core index']
  #allocation1 [shape = 'u32[72,128]{1,0:T(1,128)}', space=vmem, size = 0x9000, scoped, tag = 'internal scratch']
  %s0 = inlined_call_operand.vmem [shape: bf16[8,9,9,128], index: 0, kind: input, shape index: {}]
  %s1 = inlined_call_operand.vmem [shape: bf16[9,128,128], index: 1, kind: input, shape index: {}]
  %s2 = inlined_call_operand.vmem [shape: bf16[128,128], index: 2, kind: input, shape index: {}]
  %s3 = inlined_call_operand.vmem [shape: f32[2,64,128], index: 3, kind: output, shape index: {0}]
  %s4 = inlined_call_operand.vmem [shape: f32[2,64,128], index: 4, kind: output, shape index: {1}]
  %s5 = inlined_call_operand.vmem [shape: f32[2,2,128], index: 5, kind: output, shape index: {2}]
  %s6 = inlined_call_operand.vmem [shape: f32[2,2,128], index: 6, kind: output, shape index: {3}]
  %7 = xla_tuple %s3, %s4, %s5, %s6
  %s8 = sld [smem:[#allocation0]]
  $region69: #{residual_block_pallas.3} parent=0
    _
  %s10 = ssub.s32 1, %s8
  %s11 = scalar_select 0, %s10, %s8
  loop: start=0, step=1, limit=4
  $region2: #{residual_block_pallas.3} parent=0 // loop_pre_header
    _
  $region3: #{residual_block_pallas.3} parent=0 // loop_header
    %s13 = sphi 0, %s17
    %p14 = scmp.ge.s32.totalorder %s13, 4
    %s23 = sphi 0, %s25
    %s26 = sphi 0, %s23
    %s27 = sphi 0, %s26
    %s43 = sphi 0, %s27
    %s47 = sphi 0, %s47
    %s49 = sphi 0, %s47
    %s50 = sphi 0, %s49
    %s64 = sphi 0, %s50
    %s68 = sphi 0, %s68
    %s70 = sphi 0, %s68
    %s71 = sphi 0, %s70
    %s85 = sphi 0, %s71
    %s91 = sphi 0, %s93
    %s94 = sphi 0, %s91
    %s95 = sphi 0, %s94
    %s111 = sphi 0, %s95
    %s117 = sphi 0, %s119
    %s120 = sphi 0, %s117
    %s121 = sphi 0, %s120
    %s137 = sphi 0, %s121
    %s143 = sphi 0, %s145
    %s146 = sphi 0, %s143
    %s147 = sphi 0, %s146
    %s163 = sphi 0, %s147
    %s169 = sphi 0, %s171
    %s172 = sphi 0, %s169
    %s173 = sphi 0, %s172
    %s189 = sphi 0, %s173
  $region4: #{residual_block_pallas.3} parent=0 // loop_header_branch
    %16 = sbr.rel (%p14) target = $region8
  $region5: #{residual_block_pallas.3} parent=0 // loop_body
    %s18 = ssub.s32 %s13, 1
    %s19 = ssub.s32 %s13, 2
    %s20 = sadd.s32 %s13, 1
    %s21 = ssub.s32 %s13, %s20
    %p22 = scmp.eq.s32.totalorder %s21, 0
    %s24 = sadd.s32 %s23, 1
    %s25 = scalar_select %p22, %s23, %s24
    %p28 = pneg %p22
    %p29 = scmp.eq.s32.totalorder %s13, 1
    %p30 = por %p28, %p29
    %p31 = scmp.ne.s32.totalorder %s23, %s26
    %p32 = scmp.eq.s32.totalorder %s13, 0
    %p33 = por %p31, %p32
    %p34 = scmp.ne.s32.totalorder %s23, %s26
    %p35 = scmp.eq.s32.totalorder %s18, 1
    %p36 = por %p34, %p35
    %p37 = scmp.ne.s32.totalorder %s26, %s27
    %p38 = scmp.eq.s32.totalorder %s18, 0
    %p39 = por %p37, %p38
    %p40 = scmp.ne.s32.totalorder %s26, %s27
    %p41 = scmp.eq.s32.totalorder %s19, 1
    %p42 = por %p40, %p41
    %p44 = scmp.ne.s32.totalorder %s27, %s43
    %p45 = scmp.eq.s32.totalorder %s19, 0
    %p46 = por %p44, %p45
    %s48 = sadd.s32 %s47, 1
    %p51 = scmp.eq.s32.totalorder %s13, 1
    %p52 = scmp.ne.s32.totalorder %s47, %s49
    %p53 = scmp.eq.s32.totalorder %s13, 0
    %p54 = por %p52, %p53
    %p55 = scmp.ne.s32.totalorder %s47, %s49
    %p56 = scmp.eq.s32.totalorder %s18, 1
    %p57 = por %p55, %p56
    %p58 = scmp.ne.s32.totalorder %s49, %s50
    %p59 = scmp.eq.s32.totalorder %s18, 0
    %p60 = por %p58, %p59
    %p61 = scmp.ne.s32.totalorder %s49, %s50
    %p62 = scmp.eq.s32.totalorder %s19, 1
    %p63 = por %p61, %p62
    %p65 = scmp.ne.s32.totalorder %s50, %s64
    %p66 = scmp.eq.s32.totalorder %s19, 0
    %p67 = por %p65, %p66
    %s69 = sadd.s32 %s68, 1
    %p72 = scmp.eq.s32.totalorder %s13, 1
    %p73 = scmp.ne.s32.totalorder %s68, %s70
    %p74 = scmp.eq.s32.totalorder %s13, 0
    %p75 = por %p73, %p74
    %p76 = scmp.ne.s32.totalorder %s68, %s70
    %p77 = scmp.eq.s32.totalorder %s18, 1
    %p78 = por %p76, %p77
    %p79 = scmp.ne.s32.totalorder %s70, %s71
    %p80 = scmp.eq.s32.totalorder %s18, 0
    %p81 = por %p79, %p80
    %p82 = scmp.ne.s32.totalorder %s70, %s71
    %p83 = scmp.eq.s32.totalorder %s19, 1
    %p84 = por %p82, %p83
    %p86 = scmp.ne.s32.totalorder %s71, %s85
    %p87 = scmp.eq.s32.totalorder %s19, 0
    %p88 = por %p86, %p87
    %s89 = ssub.s32 %s13, %s20
    %p90 = scmp.eq.s32.totalorder %s89, 0
    %s92 = sadd.s32 %s91, 1
    %s93 = scalar_select %p90, %s91, %s92
    %p96 = pneg %p90
    %p97 = scmp.eq.s32.totalorder %s13, 1
    %p98 = por %p96, %p97
    %p99 = scmp.ne.s32.totalorder %s91, %s94
    %p100 = scmp.eq.s32.totalorder %s13, 0
    %p101 = por %p99, %p100
    %p102 = scmp.ne.s32.totalorder %s91, %s94
    %p103 = scmp.eq.s32.totalorder %s18, 1
    %p104 = por %p102, %p103
    %p105 = scmp.ne.s32.totalorder %s94, %s95
    %p106 = scmp.eq.s32.totalorder %s18, 0
    %p107 = por %p105, %p106
    %p108 = scmp.ne.s32.totalorder %s94, %s95
    %p109 = scmp.eq.s32.totalorder %s19, 1
    %p110 = por %p108, %p109
    %p112 = scmp.ne.s32.totalorder %s95, %s111
    %p113 = scmp.eq.s32.totalorder %s19, 0
    %p114 = por %p112, %p113
    %s115 = ssub.s32 %s13, %s20
    %p116 = scmp.eq.s32.totalorder %s115, 0
    %s118 = sadd.s32 %s117, 1
    %s119 = scalar_select %p116, %s117, %s118
    %p122 = pneg %p116
    %p123 = scmp.eq.s32.totalorder %s13, 1
    %p124 = por %p122, %p123
    %p125 = scmp.ne.s32.totalorder %s117, %s120
    %p126 = scmp.eq.s32.totalorder %s13, 0
    %p127 = por %p125, %p126
    %p128 = scmp.ne.s32.totalorder %s117, %s120
    %p129 = scmp.eq.s32.totalorder %s18, 1
    %p130 = por %p128, %p129
    %p131 = scmp.ne.s32.totalorder %s120, %s121
    %p132 = scmp.eq.s32.totalorder %s18, 0
    %p133 = por %p131, %p132
    %p134 = scmp.ne.s32.totalorder %s120, %s121
    %p135 = scmp.eq.s32.totalorder %s19, 1
    %p136 = por %p134, %p135
    %p138 = scmp.ne.s32.totalorder %s121, %s137
    %p139 = scmp.eq.s32.totalorder %s19, 0
    %p140 = por %p138, %p139
    %s141 = ssub.s32 %s13, %s20
    %p142 = scmp.eq.s32.totalorder %s141, 0
    %s144 = sadd.s32 %s143, 1
    %s145 = scalar_select %p142, %s143, %s144
    %p148 = pneg %p142
    %p149 = scmp.eq.s32.totalorder %s13, 1
    %p150 = por %p148, %p149
    %p151 = scmp.ne.s32.totalorder %s143, %s146
    %p152 = scmp.eq.s32.totalorder %s13, 0
    %p153 = por %p151, %p152
    %p154 = scmp.ne.s32.totalorder %s143, %s146
    %p155 = scmp.eq.s32.totalorder %s18, 1
    %p156 = por %p154, %p155
    %p157 = scmp.ne.s32.totalorder %s146, %s147
    %p158 = scmp.eq.s32.totalorder %s18, 0
    %p159 = por %p157, %p158
    %p160 = scmp.ne.s32.totalorder %s146, %s147
    %p161 = scmp.eq.s32.totalorder %s19, 1
    %p162 = por %p160, %p161
    %p164 = scmp.ne.s32.totalorder %s147, %s163
    %p165 = scmp.eq.s32.totalorder %s19, 0
    %p166 = por %p164, %p165
    %s167 = ssub.s32 %s13, %s20
    %p168 = scmp.eq.s32.totalorder %s167, 0
    %s170 = sadd.s32 %s169, 1
    %s171 = scalar_select %p168, %s169, %s170
    %p174 = pneg %p168
    %p175 = scmp.eq.s32.totalorder %s13, 1
    %p176 = por %p174, %p175
    %p177 = scmp.ne.s32.totalorder %s169, %s172
    %p178 = scmp.eq.s32.totalorder %s13, 0
    %p179 = por %p177, %p178
    %p180 = scmp.ne.s32.totalorder %s169, %s172
    %p181 = scmp.eq.s32.totalorder %s18, 1
    %p182 = por %p180, %p181
    %p183 = scmp.ne.s32.totalorder %s172, %s173
    %p184 = scmp.eq.s32.totalorder %s18, 0
    %p185 = por %p183, %p184
    %p186 = scmp.ne.s32.totalorder %s172, %s173
    %p187 = scmp.eq.s32.totalorder %s19, 1
    %p188 = por %p186, %p187
    %p190 = scmp.ne.s32.totalorder %s173, %s189
    %p191 = scmp.eq.s32.totalorder %s19, 0
    %p192 = por %p190, %p191
    %p193 = scmp.le.s32.totalorder 1, %s13
    %p194 = scmp.lt.s32.totalorder %s13, 3
    %p195 = pnand %p193, %p194
    %p196 = pneg %p195
    // Predicated region
    $region9: #{residual_block_pallas.3} parent=5 // pred_check
      _
    $region10: #{residual_block_pallas.3} parent=5 // pred_check_branch
      %198 = sbr.rel (%p195) target = $region12
    $region11: #{residual_block_pallas.3} parent=5 // pred_region
      %s199 = ssub.s32 %s13, 1
      // Predicated region
      $region13: #{residual_block_pallas.3} parent=11 // pred_check
        %p200 = pneg %p60
      $region14: #{residual_block_pallas.3} parent=11 // pred_check_branch
        %202 = sbr.rel (%p200) target = $region16
      $region15: #{residual_block_pallas.3} parent=11 // pred_region
        _
      $region16: #{residual_block_pallas.3} parent=11 // pred_fallthru
        _
      // Predicated region
      $region17: #{residual_block_pallas.3} parent=11 // pred_check
        %p203 = pneg %p81
      $region18: #{residual_block_pallas.3} parent=11 // pred_check_branch
        %205 = sbr.rel (%p203) target = $region20
      $region19: #{residual_block_pallas.3} parent=11 // pred_region
        _
      $region20: #{residual_block_pallas.3} parent=11 // pred_fallthru
        _
    $region12: #{residual_block_pallas.3} parent=5 // pred_fallthru
      _
    %p206 = scmp.lt.s32.totalorder %s13, 2
    // Predicated region
    $region21: #{residual_block_pallas.3} parent=5 // pred_check
      %p207 = pneg %p206
    $region22: #{residual_block_pallas.3} parent=5 // pred_check_branch
      %209 = sbr.rel (%p207) target = $region24
    $region23: #{residual_block_pallas.3} parent=5 // pred_region
      // Predicated region
      $region25: #{residual_block_pallas.3} parent=23 // pred_check
        %p210 = pneg %p33
      $region26: #{residual_block_pallas.3} parent=23 // pred_check_branch
        %212 = sbr.rel (%p210) target = $region28
      $region27: #{residual_block_pallas.3} parent=23 // pred_region
        %s213 = smul.u32 4, %s13
        %p214 = scmp.lt.s32.totalorder %s213, 7
        %s215 = scalar_select %p214, %s213, 7
        %s216 = smul.addr %s215, 18
        %s217 = smul.addr %s216, 4
        %s218 = scalar_lea.vmem %s0, %s217
        %s219 = smul.u32 4, %s13
      $region28: #{residual_block_pallas.3} parent=23 // pred_fallthru
        _
    $region24: #{residual_block_pallas.3} parent=5 // pred_fallthru
      _
    %p220 = scmp.le.s32.totalorder 1, %s13
    %p221 = scmp.lt.s32.totalorder %s13, 3
    %p222 = pnand %p220, %p221
    %p223 = pneg %p222
    // Predicated region
    $region29: #{residual_block_pallas.3} parent=5 // pred_check
      _
    $region30: #{residual_block_pallas.3} parent=5 // pred_check_branch
      %225 = sbr.rel (%p222) target = $region32
    $region31: #{residual_block_pallas.3} parent=5 // pred_region
      %s226 = ssub.s32 %s13, 1
      %s227 = smul.u32 4, %s18
      %p228 = scmp.lt.s32.totalorder %s227, 7
      %s229 = scalar_select %p228, %s227, 7
      %s230 = smul.addr %s229, 18
      %s231 = smul.addr %s230, 4
      %s232 = scalar_lea.vmem %s0, %s231
      %p233 = pneg %p39
      %p234 = pneg %p36
      %p235 = pneg %p60
      %p236 = pneg %p57
      %p237 = pneg %p81
      %p238 = pneg %p78
      %p239 = pneg %p107
      %p240 = pneg %p104
      %p241 = scmp.lt.s32.totalorder %s18, 1
      %s242 = scalar_select %p241, %s18, 1
      %s243 = smul.addr %s242, 8
      %s244 = smul.addr %s243, 8
      %s245 = scalar_lea.vmem %s3, %s244
      %p246 = pneg %p133
      %p247 = pneg %p130
      %p248 = scmp.lt.s32.totalorder %s18, 1
      %s249 = scalar_select %p248, %s18, 1
      %s250 = smul.addr %s249, 8
      %s251 = smul.addr %s250, 8
      %s252 = scalar_lea.vmem %s4, %s251
      %p253 = pneg %p159
      %p254 = pneg %p156
      %p255 = scmp.lt.s32.totalorder %s18, 1
      %s256 = scalar_select %p255, %s18, 1
      %s257 = smul.addr %s256, 2
      %s258 = scalar_lea.vmem %s5, %s257
      %p259 = pneg %p185
      %p260 = pneg %p182
      %p261 = scmp.lt.s32.totalorder %s18, 1
      %s262 = scalar_select %p261, %s18, 1
      %s263 = smul.addr %s262, 2
      %s264 = scalar_lea.vmem %s6, %s263
      %s265 = smul.u32 4, %s18
      %p266 = scmp.lt.s32.totalorder %s265, 7
      %s267 = scalar_select %p266, %s265, 7
      %s268 = smul.addr %s267, 18
      %s269 = smul.addr %s268, 4
      %s270 = scalar_lea.vmem %s0, %s269
      %s271 = smul.u32 4, %s18
      %p272 = scmp.lt.s32.totalorder %s18, 1
      %s273 = scalar_select %p272, %s18, 1
      %s274 = smul.addr %s273, 8
      %s275 = smul.addr %s274, 8
      %s276 = scalar_lea.vmem %s3, %s275
      %p277 = scmp.lt.s32.totalorder %s18, 1
      %s278 = scalar_select %p277, %s18, 1
      %s279 = smul.addr %s278, 8
      %s280 = smul.addr %s279, 8
      %s281 = scalar_lea.vmem %s4, %s280
      %p282 = scmp.lt.s32.totalorder %s18, 1
      %s283 = scalar_select %p282, %s18, 1
      %s284 = smul.addr %s283, 2
      %s285 = scalar_lea.vmem %s5, %s284
      %p286 = scmp.lt.s32.totalorder %s18, 1
      %s287 = scalar_select %p286, %s18, 1
      %s288 = smul.addr %s287, 2
      %s289 = scalar_lea.vmem %s6, %s288
      %v290 = vld [vmem:[%s270] sm:$0xf]
      %v291 = vld [vmem:[%s270 + $0x8] sm:$0xf]
      %v292 = vld [vmem:[%s270 + $0x10] sm:$0xf]
      %v293 = vld [vmem:[%s270 + $0x18] sm:$0xf]
      %v294 = vld [vmem:[%s270 + $0x20] sm:$0xf]
      %v295 = vld [vmem:[%s270 + $0x28] sm:$0xf]
      %v296 = vld [vmem:[%s270 + $0x30] sm:$0xf]
      %v297 = vld [vmem:[%s270 + $0x38] sm:$0xf]
      %v298 = vld [vmem:[%s1] sm:$0xf]
      %v299 = vld [vmem:[%s1 + $0x4] sm:$0xf]
      %v300 = vld [vmem:[%s1 + $0x8] sm:$0xf]
      %v301 = vld [vmem:[%s1 + $0xc] sm:$0xf]
      %v302 = vld [vmem:[%s1 + $0x10] sm:$0xf]
      %v303 = vld [vmem:[%s1 + $0x14] sm:$0xf]
      %v304 = vld [vmem:[%s1 + $0x18] sm:$0xf]
      %v305 = vld [vmem:[%s1 + $0x1c] sm:$0xf]
      %v306 = vld [vmem:[%s1 + $0x20] sm:$0xf]
      %v307 = vld [vmem:[%s1 + $0x24] sm:$0xf]
      %v308 = vld [vmem:[%s1 + $0x28] sm:$0xf]
      %v309 = vld [vmem:[%s1 + $0x2c] sm:$0xf]
      %v310 = vld [vmem:[%s1 + $0x30] sm:$0xf]
      %v311 = vld [vmem:[%s1 + $0x34] sm:$0xf]
      %v312 = vld [vmem:[%s1 + $0x38] sm:$0xf]
      %v313 = vld [vmem:[%s1 + $0x3c] sm:$0xf]
      %s314 = scalar_lea.vmem %s270, 72
      %v315 = vld [vmem:[%s314] sm:$0xf]
      %v316 = vld [vmem:[%s314 + $0x8] sm:$0xf]
      %v317 = vld [vmem:[%s314 + $0x10] sm:$0xf]
      %v318 = vld [vmem:[%s314 + $0x18] sm:$0xf]
      %v319 = vld [vmem:[%s314 + $0x20] sm:$0xf]
      %v320 = vld [vmem:[%s314 + $0x28] sm:$0xf]
      %v321 = vld [vmem:[%s314 + $0x30] sm:$0xf]
      %v322 = vld [vmem:[%s314 + $0x38] sm:$0xf]
      %s323 = scalar_lea.vmem %s1, 64
      %v324 = vld [vmem:[%s323] sm:$0xf]
      %v325 = vld [vmem:[%s323 + $0x4] sm:$0xf]
      %v326 = vld [vmem:[%s323 + $0x8] sm:$0xf]
      %v327 = vld [vmem:[%s323 + $0xc] sm:$0xf]
      %v328 = vld [vmem:[%s323 + $0x10] sm:$0xf]
      %v329 = vld [vmem:[%s323 + $0x14] sm:$0xf]
      %v330 = vld [vmem:[%s323 + $0x18] sm:$0xf]
      %v331 = vld [vmem:[%s323 + $0x1c] sm:$0xf]
      %v332 = vld [vmem:[%s323 + $0x20] sm:$0xf]
      %v333 = vld [vmem:[%s323 + $0x24] sm:$0xf]
      %v334 = vld [vmem:[%s323 + $0x28] sm:$0xf]
      %v335 = vld [vmem:[%s323 + $0x2c] sm:$0xf]
      %v336 = vld [vmem:[%s323 + $0x30] sm:$0xf]
      %v337 = vld [vmem:[%s323 + $0x34] sm:$0xf]
      %v338 = vld [vmem:[%s323 + $0x38] sm:$0xf]
      %v339 = vld [vmem:[%s323 + $0x3c] sm:$0xf]
      %v348 = vunpack.c.l.b16 %v315
      %v349 = vunpack.c.l.b16 %v316
      %v350 = vunpack.c.l.b16 %v317
      %v351 = vunpack.c.l.b16 %v318
      %v352 = vunpack.c.l.b16 %v319
      %v353 = vunpack.c.l.b16 %v320
      %v354 = vunpack.c.l.b16 %v321
      %v355 = vunpack.c.l.b16 %v322
      %v356 = vpack.c.b16 %v349, %v348
      %v357 = vpack.c.b16 %v351, %v350
      %v358 = vpack.c.b16 %v353, %v352
      %v359 = vpack.c.b16 %v355, %v354
      %v380 = vunpack.c.l.b16 %v324
      %v381 = vunpack.c.l.b16 %v325
      %v382 = vunpack.c.l.b16 %v326
      %v383 = vunpack.c.l.b16 %v327
      %v384 = vunpack.c.l.b16 %v328
      %v385 = vunpack.c.l.b16 %v329
      %v386 = vunpack.c.l.b16 %v330
      %v387 = vunpack.c.l.b16 %v331
      %v388 = vunpack.c.l.b16 %v332
      %v389 = vunpack.c.l.b16 %v333
      %v390 = vunpack.c.l.b16 %v334
      %v391 = vunpack.c.l.b16 %v335
      %v392 = vunpack.c.l.b16 %v336
      %v393 = vunpack.c.l.b16 %v337
      %v394 = vunpack.c.l.b16 %v338
      %v395 = vunpack.c.l.b16 %v339
      %v396 = vpack.c.b16 %v381, %v380
      %v397 = vpack.c.b16 %v383, %v382
      %v398 = vpack.c.b16 %v385, %v384
      %v399 = vpack.c.b16 %v387, %v386
      %v400 = vpack.c.b16 %v389, %v388
      %v401 = vpack.c.b16 %v391, %v390
      %v402 = vpack.c.b16 %v393, %v392
      %v403 = vpack.c.b16 %v395, %v394
      %412 = vmatpush.bf16.msra.mxu0 %v403
      %413 = vmatpush.bf16.msra.mxu0 %v402
      %414 = vmatpush.bf16.msra.mxu0 %v401
      %415 = vmatpush.bf16.msra.mxu0 %v400
      %416 = vmatpush.bf16.msra.mxu0 %v399
      %417 = vmatpush.bf16.msra.mxu0 %v398
      %418 = vmatpush.bf16.msra.mxu0 %v397
      %419 = vmatpush.bf16.msra.mxu0 %v396
      %420 = vmatmul.bf16.gmra.mxu0 %v356
      %v421 = vpop.f32.mrf.mxu0
      %v422 = vadd.f32 0.0, %v421
      %v423 = vpop.f32.mrf.mxu0
      %v424 = vadd.f32 0.0, %v423
      %425 = vmatmul.bf16.gmra.mxu0 %v357
      %v426 = vpop.f32.mrf.mxu0
      %v427 = vadd.f32 0.0, %v426
      %v428 = vpop.f32.mrf.mxu0
      %v429 = vadd.f32 0.0, %v428
      %430 = vmatmul.bf16.gmra.mxu0 %v358
      %v431 = vpop.f32.mrf.mxu0
      %v432 = vadd.f32 0.0, %v431
      %v433 = vpop.f32.mrf.mxu0
      %v434 = vadd.f32 0.0, %v433
      %435 = vmatmul.bf16.gmra.mxu0 %v359
      %v436 = vpop.f32.mrf.mxu0
      %v437 = vadd.f32 0.0, %v436
      %v438 = vpop.f32.mrf.mxu0
      %v439 = vadd.f32 0.0, %v438
      %440 = vdwg.mxu0
      %v449 = vunpack.c.l.b16 %v290
      %v450 = vunpack.c.l.b16 %v291
      %v451 = vunpack.c.l.b16 %v292
      %v452 = vunpack.c.l.b16 %v293
      %v453 = vunpack.c.l.b16 %v294
      %v454 = vunpack.c.l.b16 %v295
      %v455 = vunpack.c.l.b16 %v296
      %v456 = vunpack.c.l.b16 %v297
      %v457 = vpack.c.b16 %v450, %v449
      %v458 = vpack.c.b16 %v452, %v451
      %v459 = vpack.c.b16 %v454, %v453
      %v460 = vpack.c.b16 %v456, %v455
      %v481 = vunpack.c.l.b16 %v298
      %v482 = vunpack.c.l.b16 %v299
      %v483 = vunpack.c.l.b16 %v300
      %v484 = vunpack.c.l.b16 %v301
      %v485 = vunpack.c.l.b16 %v302
      %v486 = vunpack.c.l.b16 %v303
      %v487 = vunpack.c.l.b16 %v304
      %v488 = vunpack.c.l.b16 %v305
      %v489 = vunpack.c.l.b16 %v306
      %v490 = vunpack.c.l.b16 %v307
      %v491 = vunpack.c.l.b16 %v308
      %v492 = vunpack.c.l.b16 %v309
      %v493 = vunpack.c.l.b16 %v310
      %v494 = vunpack.c.l.b16 %v311
      %v495 = vunpack.c.l.b16 %v312
      %v496 = vunpack.c.l.b16 %v313
      %v497 = vpack.c.b16 %v482, %v481
      %v498 = vpack.c.b16 %v484, %v483
      %v499 = vpack.c.b16 %v486, %v485
      %v500 = vpack.c.b16 %v488, %v487
      %v501 = vpack.c.b16 %v490, %v489
      %v502 = vpack.c.b16 %v492, %v491
      %v503 = vpack.c.b16 %v494, %v493
      %v504 = vpack.c.b16 %v496, %v495
      %513 = vmatpush.bf16.msra.mxu0 %v504
      %514 = vmatpush.bf16.msra.mxu0 %v503
      %515 = vmatpush.bf16.msra.mxu0 %v502
      %516 = vmatpush.bf16.msra.mxu0 %v501
      %517 = vmatpush.bf16.msra.mxu0 %v500
      %518 = vmatpush.bf16.msra.mxu0 %v499
      %519 = vmatpush.bf16.msra.mxu0 %v498
      %520 = vmatpush.bf16.msra.mxu0 %v497
      %521 = vmatmul.bf16.gmra.mxu0 %v457
      %v522 = vpop.f32.mrf.mxu0
      %v523 = vadd.f32 %v422, %v522
      %v524 = vpop.f32.mrf.mxu0
      %v525 = vadd.f32 %v424, %v524
      %526 = vmatmul.bf16.gmra.mxu0 %v458
      %v527 = vpop.f32.mrf.mxu0
      %v528 = vadd.f32 %v427, %v527
      %v529 = vpop.f32.mrf.mxu0
      %v530 = vadd.f32 %v429, %v529
      %531 = vmatmul.bf16.gmra.mxu0 %v459
      %v532 = vpop.f32.mrf.mxu0
      %v533 = vadd.f32 %v432, %v532
      %v534 = vpop.f32.mrf.mxu0
      %v535 = vadd.f32 %v434, %v534
      %536 = vmatmul.bf16.gmra.mxu0 %v460
      %v537 = vpop.f32.mrf.mxu0
      %v538 = vadd.f32 %v437, %v537
      %v539 = vpop.f32.mrf.mxu0
      %v540 = vadd.f32 %v439, %v539
      %541 = vdwg.mxu0
      %v542 = vld [vmem:[%s270] sm:$0xf]
      %v543 = vld [vmem:[%s270 + $0x4] sm:$0x1]
      %v544 = vld [vmem:[%s270 + $0x8] sm:$0xf]
      %v545 = vld [vmem:[%s270 + $0xc] sm:$0x1]
      %v546 = vld [vmem:[%s270 + $0x10] sm:$0xf]
      %v547 = vld [vmem:[%s270 + $0x14] sm:$0x1]
      %v548 = vld [vmem:[%s270 + $0x18] sm:$0xf]
      %v549 = vld [vmem:[%s270 + $0x1c] sm:$0x1]
      %v550 = vld [vmem:[%s270 + $0x20] sm:$0xf]
      %v551 = vld [vmem:[%s270 + $0x24] sm:$0x1]
      %v552 = vld [vmem:[%s270 + $0x28] sm:$0xf]
      %v553 = vld [vmem:[%s270 + $0x2c] sm:$0x1]
      %v554 = vld [vmem:[%s270 + $0x30] sm:$0xf]
      %v555 = vld [vmem:[%s270 + $0x34] sm:$0x1]
      %v556 = vld [vmem:[%s270 + $0x38] sm:$0xf]
      %v557 = vld [vmem:[%s270 + $0x3c] sm:$0x1]
      %vm558 = vsmask.f32 3328
      %vm559 = vsmask.f32 7440
      %vm560 = vmor %vm558, %vm559
      %v562 = vshrl.u32 %v542, 16
      %v564 = vrot.slane %v562, 4
      %v565 = vshll.u32 %v542, 16
      %v567 = vrot.slane %v565, 5
      %v568 = vor.u32 %v564, %v567
      %v569 = vrot.slane %v568, 4
      %v571 = vshll.u32 %v543, 16
      %v573 = vrot.slane %v571, 5
      %v574 = vsel %vm560, %v569, %v573
      %v576 = vshrl.u32 %v544, 16
      %v578 = vrot.slane %v576, 4
      %v579 = vshll.u32 %v544, 16
      %v581 = vrot.slane %v579, 5
      %v582 = vor.u32 %v578, %v581
      %v583 = vrot.slane %v582, 4
      %v585 = vshll.u32 %v545, 16
      %v587 = vrot.slane %v585, 5
      %v588 = vsel %vm560, %v583, %v587
      %v590 = vshrl.u32 %v546, 16
      %v592 = vrot.slane %v590, 4
      %v593 = vshll.u32 %v546, 16
      %v595 = vrot.slane %v593, 5
      %v596 = vor.u32 %v592, %v595
      %v597 = vrot.slane %v596, 4
      %v599 = vshll.u32 %v547, 16
      %v601 = vrot.slane %v599, 5
      %v602 = vsel %vm560, %v597, %v601
      %v604 = vshrl.u32 %v548, 16
      %v606 = vrot.slane %v604, 4
      %v607 = vshll.u32 %v548, 16
      %v609 = vrot.slane %v607, 5
      %v610 = vor.u32 %v606, %v609
      %v611 = vrot.slane %v610, 4
      %v613 = vshll.u32 %v549, 16
      %v615 = vrot.slane %v613, 5
      %v616 = vsel %vm560, %v611, %v615
      %v618 = vshrl.u32 %v550, 16
      %v620 = vrot.slane %v618, 4
      %v621 = vshll.u32 %v550, 16
      %v623 = vrot.slane %v621, 5
      %v624 = vor.u32 %v620, %v623
      %v625 = vrot.slane %v624, 4
      %v627 = vshll.u32 %v551, 16
      %v629 = vrot.slane %v627, 5
      %v630 = vsel %vm560, %v625, %v629
      %v632 = vshrl.u32 %v552, 16
      %v634 = vrot.slane %v632, 4
      %v635 = vshll.u32 %v552, 16
      %v637 = vrot.slane %v635, 5
      %v638 = vor.u32 %v634, %v637
      %v639 = vrot.slane %v638, 4
      %v641 = vshll.u32 %v553, 16
      %v643 = vrot.slane %v641, 5
      %v644 = vsel %vm560, %v639, %v643
      %v646 = vshrl.u32 %v554, 16
      %v648 = vrot.slane %v646, 4
      %v649 = vshll.u32 %v554, 16
      %v651 = vrot.slane %v649, 5
      %v652 = vor.u32 %v648, %v651
      %v653 = vrot.slane %v652, 4
      %v655 = vshll.u32 %v555, 16
      %v657 = vrot.slane %v655, 5
      %v658 = vsel %vm560, %v653, %v657
      %v660 = vshrl.u32 %v556, 16
      %v662 = vrot.slane %v660, 4
      %v663 = vshll.u32 %v556, 16
      %v665 = vrot.slane %v663, 5
      %v666 = vor.u32 %v662, %v665
      %v667 = vrot.slane %v666, 4
      %v669 = vshll.u32 %v557, 16
      %v671 = vrot.slane %v669, 5
      %v672 = vsel %vm560, %v667, %v671
      %s673 = scalar_lea.vmem %s1, 128
      %v674 = vld [vmem:[%s673] sm:$0xf]
      %v675 = vld [vmem:[%s673 + $0x4] sm:$0xf]
      %v676 = vld [vmem:[%s673 + $0x8] sm:$0xf]
      %v677 = vld [vmem:[%s673 + $0xc] sm:$0xf]
      %v678 = vld [vmem:[%s673 + $0x10] sm:$0xf]
      %v679 = vld [vmem:[%s673 + $0x14] sm:$0xf]
      %v680 = vld [vmem:[%s673 + $0x18] sm:$0xf]
      %v681 = vld [vmem:[%s673 + $0x1c] sm:$0xf]
      %v682 = vld [vmem:[%s673 + $0x20] sm:$0xf]
      %v683 = vld [vmem:[%s673 + $0x24] sm:$0xf]
      %v684 = vld [vmem:[%s673 + $0x28] sm:$0xf]
      %v685 = vld [vmem:[%s673 + $0x2c] sm:$0xf]
      %v686 = vld [vmem:[%s673 + $0x30] sm:$0xf]
      %v687 = vld [vmem:[%s673 + $0x34] sm:$0xf]
      %v688 = vld [vmem:[%s673 + $0x38] sm:$0xf]
      %v689 = vld [vmem:[%s673 + $0x3c] sm:$0xf]
      %v690 = vunpack.c.l.b16 %v574
      %v691 = vunpack.c.l.b16 %v588
      %v692 = vunpack.c.l.b16 %v602
      %v693 = vunpack.c.l.b16 %v616
      %v694 = vunpack.c.l.b16 %v630
      %v695 = vunpack.c.l.b16 %v644
      %v696 = vunpack.c.l.b16 %v658
      %v697 = vunpack.c.l.b16 %v672
      %v698 = vpack.c.b16 %v691, %v690
      %v699 = vpack.c.b16 %v693, %v692
      %v700 = vpack.c.b16 %v695, %v694
      %v701 = vpack.c.b16 %v697, %v696
      %v722 = vunpack.c.l.b16 %v674
      %v723 = vunpack.c.l.b16 %v675
      %v724 = vunpack.c.l.b16 %v676
      %v725 = vunpack.c.l.b16 %v677
      %v726 = vunpack.c.l.b16 %v678
      %v727 = vunpack.c.l.b16 %v679
      %v728 = vunpack.c.l.b16 %v680
      %v729 = vunpack.c.l.b16 %v681
      %v730 = vunpack.c.l.b16 %v682
      %v731 = vunpack.c.l.b16 %v683
      %v732 = vunpack.c.l.b16 %v684
      %v733 = vunpack.c.l.b16 %v685
      %v734 = vunpack.c.l.b16 %v686
      %v735 = vunpack.c.l.b16 %v687
      %v736 = vunpack.c.l.b16 %v688
      %v737 = vunpack.c.l.b16 %v689
      %v738 = vpack.c.b16 %v723, %v722
      %v739 = vpack.c.b16 %v725, %v724
      %v740 = vpack.c.b16 %v727, %v726
      %v741 = vpack.c.b16 %v729, %v728
      %v742 = vpack.c.b16 %v731, %v730
      %v743 = vpack.c.b16 %v733, %v732
      %v744 = vpack.c.b16 %v735, %v734
      %v745 = vpack.c.b16 %v737, %v736
      %754 = vmatpush.bf16.msra.mxu0 %v745
      %755 = vmatpush.bf16.msra.mxu0 %v744
      %756 = vmatpush.bf16.msra.mxu0 %v743
      %757 = vmatpush.bf16.msra.mxu0 %v742
      %758 = vmatpush.bf16.msra.mxu0 %v741
      %759 = vmatpush.bf16.msra.mxu0 %v740
      %760 = vmatpush.bf16.msra.mxu0 %v739
      %761 = vmatpush.bf16.msra.mxu0 %v738
      %762 = vmatmul.bf16.gmra.mxu0 %v698
      %v763 = vpop.f32.mrf.mxu0
      %v764 = vadd.f32 0.0, %v763
      %v765 = vpop.f32.mrf.mxu0
      %v766 = vadd.f32 0.0, %v765
      %767 = vmatmul.bf16.gmra.mxu0 %v699
      %v768 = vpop.f32.mrf.mxu0
      %v769 = vadd.f32 0.0, %v768
      %v770 = vpop.f32.mrf.mxu0
      %v771 = vadd.f32 0.0, %v770
      %772 = vmatmul.bf16.gmra.mxu0 %v700
      %v773 = vpop.f32.mrf.mxu0
      %v774 = vadd.f32 0.0, %v773
      %v775 = vpop.f32.mrf.mxu0
      %v776 = vadd.f32 0.0, %v775
      %777 = vmatmul.bf16.gmra.mxu0 %v701
      %v778 = vpop.f32.mrf.mxu0
      %v779 = vadd.f32 0.0, %v778
      %v780 = vpop.f32.mrf.mxu0
      %v781 = vadd.f32 0.0, %v780
      %782 = vdwg.mxu0
      %v783 = vadd.f32 %v523, %v764
      %v784 = vadd.f32 %v525, %v766
      %v785 = vadd.f32 %v528, %v769
      %v786 = vadd.f32 %v530, %v771
      %v787 = vadd.f32 %v533, %v774
      %v788 = vadd.f32 %v535, %v776
      %v789 = vadd.f32 %v538, %v779
      %v790 = vadd.f32 %v540, %v781
      %s791 = scalar_lea.vmem %s270, 144
      %v792 = vld [vmem:[%s791] sm:$0xf]
      %v793 = vld [vmem:[%s791 + $0x8] sm:$0xf]
      %v794 = vld [vmem:[%s791 + $0x10] sm:$0xf]
      %v795 = vld [vmem:[%s791 + $0x18] sm:$0xf]
      %v796 = vld [vmem:[%s791 + $0x20] sm:$0xf]
      %v797 = vld [vmem:[%s791 + $0x28] sm:$0xf]
      %v798 = vld [vmem:[%s791 + $0x30] sm:$0xf]
      %v799 = vld [vmem:[%s791 + $0x38] sm:$0xf]
      %s800 = scalar_lea.vmem %s1, 192
      %v801 = vld [vmem:[%s800] sm:$0xf]
      %v802 = vld [vmem:[%s800 + $0x4] sm:$0xf]
      %v803 = vld [vmem:[%s800 + $0x8] sm:$0xf]
      %v804 = vld [vmem:[%s800 + $0xc] sm:$0xf]
      %v805 = vld [vmem:[%s800 + $0x10] sm:$0xf]
      %v806 = vld [vmem:[%s800 + $0x14] sm:$0xf]
      %v807 = vld [vmem:[%s800 + $0x18] sm:$0xf]
      %v808 = vld [vmem:[%s800 + $0x1c] sm:$0xf]
      %v809 = vld [vmem:[%s800 + $0x20] sm:$0xf]
      %v810 = vld [vmem:[%s800 + $0x24] sm:$0xf]
      %v811 = vld [vmem:[%s800 + $0x28] sm:$0xf]
      %v812 = vld [vmem:[%s800 + $0x2c] sm:$0xf]
      %v813 = vld [vmem:[%s800 + $0x30] sm:$0xf]
      %v814 = vld [vmem:[%s800 + $0x34] sm:$0xf]
      %v815 = vld [vmem:[%s800 + $0x38] sm:$0xf]
      %v816 = vld [vmem:[%s800 + $0x3c] sm:$0xf]
      %v825 = vunpack.c.l.b16 %v792
      %v826 = vunpack.c.l.b16 %v793
      %v827 = vunpack.c.l.b16 %v794
      %v828 = vunpack.c.l.b16 %v795
      %v829 = vunpack.c.l.b16 %v796
      %v830 = vunpack.c.l.b16 %v797
      %v831 = vunpack.c.l.b16 %v798
      %v832 = vunpack.c.l.b16 %v799
      %v833 = vpack.c.b16 %v826, %v825
      %v834 = vpack.c.b16 %v828, %v827
      %v835 = vpack.c.b16 %v830, %v829
      %v836 = vpack.c.b16 %v832, %v831
      %v857 = vunpack.c.l.b16 %v801
      %v858 = vunpack.c.l.b16 %v802
      %v859 = vunpack.c.l.b16 %v803
      %v860 = vunpack.c.l.b16 %v804
      %v861 = vunpack.c.l.b16 %v805
      %v862 = vunpack.c.l.b16 %v806
      %v863 = vunpack.c.l.b16 %v807
      %v864 = vunpack.c.l.b16 %v808
      %v865 = vunpack.c.l.b16 %v809
      %v866 = vunpack.c.l.b16 %v810
      %v867 = vunpack.c.l.b16 %v811
      %v868 = vunpack.c.l.b16 %v812
      %v869 = vunpack.c.l.b16 %v813
      %v870 = vunpack.c.l.b16 %v814
      %v871 = vunpack.c.l.b16 %v815
      %v872 = vunpack.c.l.b16 %v816
      %v873 = vpack.c.b16 %v858, %v857
      %v874 = vpack.c.b16 %v860, %v859
      %v875 = vpack.c.b16 %v862, %v861
      %v876 = vpack.c.b16 %v864, %v863
      %v877 = vpack.c.b16 %v866, %v865
      %v878 = vpack.c.b16 %v868, %v867
      %v879 = vpack.c.b16 %v870, %v869
      %v880 = vpack.c.b16 %v872, %v871
      %889 = vmatpush.bf16.msra.mxu0 %v880
      %890 = vmatpush.bf16.msra.mxu0 %v879
      %891 = vmatpush.bf16.msra.mxu0 %v878
      %892 = vmatpush.bf16.msra.mxu0 %v877
      %893 = vmatpush.bf16.msra.mxu0 %v876
      %894 = vmatpush.bf16.msra.mxu0 %v875
      %895 = vmatpush.bf16.msra.mxu0 %v874
      %896 = vmatpush.bf16.msra.mxu0 %v873
      %897 = vmatmul.bf16.gmra.mxu0 %v833
      %v898 = vpop.f32.mrf.mxu0
      %v899 = vadd.f32 0.0, %v898
      %v900 = vpop.f32.mrf.mxu0
      %v901 = vadd.f32 0.0, %v900
      %902 = vmatmul.bf16.gmra.mxu0 %v834
      %v903 = vpop.f32.mrf.mxu0
      %v904 = vadd.f32 0.0, %v903
      %v905 = vpop.f32.mrf.mxu0
      %v906 = vadd.f32 0.0, %v905
      %907 = vmatmul.bf16.gmra.mxu0 %v835
      %v908 = vpop.f32.mrf.mxu0
      %v909 = vadd.f32 0.0, %v908
      %v910 = vpop.f32.mrf.mxu0
      %v911 = vadd.f32 0.0, %v910
      %912 = vmatmul.bf16.gmra.mxu0 %v836
      %v913 = vpop.f32.mrf.mxu0
      %v914 = vadd.f32 0.0, %v913
      %v915 = vpop.f32.mrf.mxu0
      %v916 = vadd.f32 0.0, %v915
      %917 = vdwg.mxu0
      %v918 = vadd.f32 %v783, %v899
      %v919 = vadd.f32 %v784, %v901
      %v920 = vadd.f32 %v785, %v904
      %v921 = vadd.f32 %v786, %v906
      %v922 = vadd.f32 %v787, %v909
      %v923 = vadd.f32 %v788, %v911
      %v924 = vadd.f32 %v789, %v914
      %v925 = vadd.f32 %v790, %v916
      %s926 = scalar_lea.vmem %s270, 216
      %v927 = vld [vmem:[%s926] sm:$0xf]
      %v928 = vld [vmem:[%s926 + $0x8] sm:$0xf]
      %v929 = vld [vmem:[%s926 + $0x10] sm:$0xf]
      %v930 = vld [vmem:[%s926 + $0x18] sm:$0xf]
      %v931 = vld [vmem:[%s926 + $0x20] sm:$0xf]
      %v932 = vld [vmem:[%s926 + $0x28] sm:$0xf]
      %v933 = vld [vmem:[%s926 + $0x30] sm:$0xf]
      %v934 = vld [vmem:[%s926 + $0x38] sm:$0xf]
      %s935 = scalar_lea.vmem %s1, 256
      %v936 = vld [vmem:[%s935] sm:$0xf]
      %v937 = vld [vmem:[%s935 + $0x4] sm:$0xf]
      %v938 = vld [vmem:[%s935 + $0x8] sm:$0xf]
      %v939 = vld [vmem:[%s935 + $0xc] sm:$0xf]
      %v940 = vld [vmem:[%s935 + $0x10] sm:$0xf]
      %v941 = vld [vmem:[%s935 + $0x14] sm:$0xf]
      %v942 = vld [vmem:[%s935 + $0x18] sm:$0xf]
      %v943 = vld [vmem:[%s935 + $0x1c] sm:$0xf]
      %v944 = vld [vmem:[%s935 + $0x20] sm:$0xf]
      %v945 = vld [vmem:[%s935 + $0x24] sm:$0xf]
      %v946 = vld [vmem:[%s935 + $0x28] sm:$0xf]
      %v947 = vld [vmem:[%s935 + $0x2c] sm:$0xf]
      %v948 = vld [vmem:[%s935 + $0x30] sm:$0xf]
      %v949 = vld [vmem:[%s935 + $0x34] sm:$0xf]
      %v950 = vld [vmem:[%s935 + $0x38] sm:$0xf]
      %v951 = vld [vmem:[%s935 + $0x3c] sm:$0xf]
      %v960 = vunpack.c.l.b16 %v927
      %v961 = vunpack.c.l.b16 %v928
      %v962 = vunpack.c.l.b16 %v929
      %v963 = vunpack.c.l.b16 %v930
      %v964 = vunpack.c.l.b16 %v931
      %v965 = vunpack.c.l.b16 %v932
      %v966 = vunpack.c.l.b16 %v933
      %v967 = vunpack.c.l.b16 %v934
      %v968 = vpack.c.b16 %v961, %v960
      %v969 = vpack.c.b16 %v963, %v962
      %v970 = vpack.c.b16 %v965, %v964
      %v971 = vpack.c.b16 %v967, %v966
      %v992 = vunpack.c.l.b16 %v936
      %v993 = vunpack.c.l.b16 %v937
      %v994 = vunpack.c.l.b16 %v938
      %v995 = vunpack.c.l.b16 %v939
      %v996 = vunpack.c.l.b16 %v940
      %v997 = vunpack.c.l.b16 %v941
      %v998 = vunpack.c.l.b16 %v942
      %v999 = vunpack.c.l.b16 %v943
      %v1000 = vunpack.c.l.b16 %v944
      %v1001 = vunpack.c.l.b16 %v945
      %v1002 = vunpack.c.l.b16 %v946
      %v1003 = vunpack.c.l.b16 %v947
      %v1004 = vunpack.c.l.b16 %v948
      %v1005 = vunpack.c.l.b16 %v949
      %v1006 = vunpack.c.l.b16 %v950
      %v1007 = vunpack.c.l.b16 %v951
      %v1008 = vpack.c.b16 %v993, %v992
      %v1009 = vpack.c.b16 %v995, %v994
      %v1010 = vpack.c.b16 %v997, %v996
      %v1011 = vpack.c.b16 %v999, %v998
      %v1012 = vpack.c.b16 %v1001, %v1000
      %v1013 = vpack.c.b16 %v1003, %v1002
      %v1014 = vpack.c.b16 %v1005, %v1004
      %v1015 = vpack.c.b16 %v1007, %v1006
      %1024 = vmatpush.bf16.msra.mxu0 %v1015
      %1025 = vmatpush.bf16.msra.mxu0 %v1014
      %1026 = vmatpush.bf16.msra.mxu0 %v1013
      %1027 = vmatpush.bf16.msra.mxu0 %v1012
      %1028 = vmatpush.bf16.msra.mxu0 %v1011
      %1029 = vmatpush.bf16.msra.mxu0 %v1010
      %1030 = vmatpush.bf16.msra.mxu0 %v1009
      %1031 = vmatpush.bf16.msra.mxu0 %v1008
      %1032 = vmatmul.bf16.gmra.mxu0 %v968
      %v1033 = vpop.f32.mrf.mxu0
      %v1034 = vadd.f32 0.0, %v1033
      %v1035 = vpop.f32.mrf.mxu0
      %v1036 = vadd.f32 0.0, %v1035
      %1037 = vmatmul.bf16.gmra.mxu0 %v969
      %v1038 = vpop.f32.mrf.mxu0
      %v1039 = vadd.f32 0.0, %v1038
      %v1040 = vpop.f32.mrf.mxu0
      %v1041 = vadd.f32 0.0, %v1040
      %1042 = vmatmul.bf16.gmra.mxu0 %v970
      %v1043 = vpop.f32.mrf.mxu0
      %v1044 = vadd.f32 0.0, %v1043
      %v1045 = vpop.f32.mrf.mxu0
      %v1046 = vadd.f32 0.0, %v1045
      %1047 = vmatmul.bf16.gmra.mxu0 %v971
      %v1048 = vpop.f32.mrf.mxu0
      %v1049 = vadd.f32 0.0, %v1048
      %v1050 = vpop.f32.mrf.mxu0
      %v1051 = vadd.f32 0.0, %v1050
      %1052 = vdwg.mxu0
      %v1053 = vadd.f32 %v918, %v1034
      %v1054 = vadd.f32 %v919, %v1036
      %v1055 = vadd.f32 %v920, %v1039
      %v1056 = vadd.f32 %v921, %v1041
      %v1057 = vadd.f32 %v922, %v1044
      %v1058 = vadd.f32 %v923, %v1046
      %v1059 = vadd.f32 %v924, %v1049
      %v1060 = vadd.f32 %v925, %v1051
      %v1061 = vld [vmem:[%s791] sm:$0xf]
      %v1062 = vld [vmem:[%s791 + $0x4] sm:$0x1]
      %v1063 = vld [vmem:[%s791 + $0x8] sm:$0xf]
      %v1064 = vld [vmem:[%s791 + $0xc] sm:$0x1]
      %v1065 = vld [vmem:[%s791 + $0x10] sm:$0xf]
      %v1066 = vld [vmem:[%s791 + $0x14] sm:$0x1]
      %v1067 = vld [vmem:[%s791 + $0x18] sm:$0xf]
      %v1068 = vld [vmem:[%s791 + $0x1c] sm:$0x1]
      %v1069 = vld [vmem:[%s791 + $0x20] sm:$0xf]
      %v1070 = vld [vmem:[%s791 + $0x24] sm:$0x1]
      %v1071 = vld [vmem:[%s791 + $0x28] sm:$0xf]
      %v1072 = vld [vmem:[%s791 + $0x2c] sm:$0x1]
      %v1073 = vld [vmem:[%s791 + $0x30] sm:$0xf]
      %v1074 = vld [vmem:[%s791 + $0x34] sm:$0x1]
      %v1075 = vld [vmem:[%s791 + $0x38] sm:$0xf]
      %v1076 = vld [vmem:[%s791 + $0x3c] sm:$0x1]
      %v1078 = vshrl.u32 %v1061, 16
      %v1080 = vrot.slane %v1078, 4
      %v1081 = vshll.u32 %v1061, 16
      %v1083 = vrot.slane %v1081, 5
      %v1084 = vor.u32 %v1080, %v1083
      %v1085 = vrot.slane %v1084, 4
      %v1087 = vshll.u32 %v1062, 16
      %v1089 = vrot.slane %v1087, 5
      %v1090 = vsel %vm560, %v1085, %v1089
      %v1092 = vshrl.u32 %v1063, 16
      %v1094 = vrot.slane %v1092, 4
      %v1095 = vshll.u32 %v1063, 16
      %v1097 = vrot.slane %v1095, 5
      %v1098 = vor.u32 %v1094, %v1097
      %v1099 = vrot.slane %v1098, 4
      %v1101 = vshll.u32 %v1064, 16
      %v1103 = vrot.slane %v1101, 5
      %v1104 = vsel %vm560, %v1099, %v1103
      %v1106 = vshrl.u32 %v1065, 16
      %v1108 = vrot.slane %v1106, 4
      %v1109 = vshll.u32 %v1065, 16
      %v1111 = vrot.slane %v1109, 5
      %v1112 = vor.u32 %v1108, %v1111
      %v1113 = vrot.slane %v1112, 4
      %v1115 = vshll.u32 %v1066, 16
      %v1117 = vrot.slane %v1115, 5
      %v1118 = vsel %vm560, %v1113, %v1117
      %v1120 = vshrl.u32 %v1067, 16
      %v1122 = vrot.slane %v1120, 4
      %v1123 = vshll.u32 %v1067, 16
      %v1125 = vrot.slane %v1123, 5
      %v1126 = vor.u32 %v1122, %v1125
      %v1127 = vrot.slane %v1126, 4
      %v1129 = vshll.u32 %v1068, 16
      %v1131 = vrot.slane %v1129, 5
      %v1132 = vsel %vm560, %v1127, %v1131
      %v1134 = vshrl.u32 %v1069, 16
      %v1136 = vrot.slane %v1134, 4
      %v1137 = vshll.u32 %v1069, 16
      %v1139 = vrot.slane %v1137, 5
      %v1140 = vor.u32 %v1136, %v1139
      %v1141 = vrot.slane %v1140, 4
      %v1143 = vshll.u32 %v1070, 16
      %v1145 = vrot.slane %v1143, 5
      %v1146 = vsel %vm560, %v1141, %v1145
      %v1148 = vshrl.u32 %v1071, 16
      %v1150 = vrot.slane %v1148, 4
      %v1151 = vshll.u32 %v1071, 16
      %v1153 = vrot.slane %v1151, 5
      %v1154 = vor.u32 %v1150, %v1153
      %v1155 = vrot.slane %v1154, 4
      %v1157 = vshll.u32 %v1072, 16
      %v1159 = vrot.slane %v1157, 5
      %v1160 = vsel %vm560, %v1155, %v1159
      %v1162 = vshrl.u32 %v1073, 16
      %v1164 = vrot.slane %v1162, 4
      %v1165 = vshll.u32 %v1073, 16
      %v1167 = vrot.slane %v1165, 5
      %v1168 = vor.u32 %v1164, %v1167
      %v1169 = vrot.slane %v1168, 4
      %v1171 = vshll.u32 %v1074, 16
      %v1173 = vrot.slane %v1171, 5
      %v1174 = vsel %vm560, %v1169, %v1173
      %v1176 = vshrl.u32 %v1075, 16
      %v1178 = vrot.slane %v1176, 4
      %v1179 = vshll.u32 %v1075, 16
      %v1181 = vrot.slane %v1179, 5
      %v1182 = vor.u32 %v1178, %v1181
      %v1183 = vrot.slane %v1182, 4
      %v1185 = vshll.u32 %v1076, 16
      %v1187 = vrot.slane %v1185, 5
      %v1188 = vsel %vm560, %v1183, %v1187
      %s1189 = scalar_lea.vmem %s1, 320
      %v1190 = vld [vmem:[%s1189] sm:$0xf]
      %v1191 = vld [vmem:[%s1189 + $0x4] sm:$0xf]
      %v1192 = vld [vmem:[%s1189 + $0x8] sm:$0xf]
      %v1193 = vld [vmem:[%s1189 + $0xc] sm:$0xf]
      %v1194 = vld [vmem:[%s1189 + $0x10] sm:$0xf]
      %v1195 = vld [vmem:[%s1189 + $0x14] sm:$0xf]
      %v1196 = vld [vmem:[%s1189 + $0x18] sm:$0xf]
      %v1197 = vld [vmem:[%s1189 + $0x1c] sm:$0xf]
      %v1198 = vld [vmem:[%s1189 + $0x20] sm:$0xf]
      %v1199 = vld [vmem:[%s1189 + $0x24] sm:$0xf]
      %v1200 = vld [vmem:[%s1189 + $0x28] sm:$0xf]
      %v1201 = vld [vmem:[%s1189 + $0x2c] sm:$0xf]
      %v1202 = vld [vmem:[%s1189 + $0x30] sm:$0xf]
      %v1203 = vld [vmem:[%s1189 + $0x34] sm:$0xf]
      %v1204 = vld [vmem:[%s1189 + $0x38] sm:$0xf]
      %v1205 = vld [vmem:[%s1189 + $0x3c] sm:$0xf]
      %v1206 = vunpack.c.l.b16 %v1090
      %v1207 = vunpack.c.l.b16 %v1104
      %v1208 = vunpack.c.l.b16 %v1118
      %v1209 = vunpack.c.l.b16 %v1132
      %v1210 = vunpack.c.l.b16 %v1146
      %v1211 = vunpack.c.l.b16 %v1160
      %v1212 = vunpack.c.l.b16 %v1174
      %v1213 = vunpack.c.l.b16 %v1188
      %v1214 = vpack.c.b16 %v1207, %v1206
      %v1215 = vpack.c.b16 %v1209, %v1208
      %v1216 = vpack.c.b16 %v1211, %v1210
      %v1217 = vpack.c.b16 %v1213, %v1212
      %v1238 = vunpack.c.l.b16 %v1190
      %v1239 = vunpack.c.l.b16 %v1191
      %v1240 = vunpack.c.l.b16 %v1192
      %v1241 = vunpack.c.l.b16 %v1193
      %v1242 = vunpack.c.l.b16 %v1194
      %v1243 = vunpack.c.l.b16 %v1195
      %v1244 = vunpack.c.l.b16 %v1196
      %v1245 = vunpack.c.l.b16 %v1197
      %v1246 = vunpack.c.l.b16 %v1198
      %v1247 = vunpack.c.l.b16 %v1199
      %v1248 = vunpack.c.l.b16 %v1200
      %v1249 = vunpack.c.l.b16 %v1201
      %v1250 = vunpack.c.l.b16 %v1202
      %v1251 = vunpack.c.l.b16 %v1203
      %v1252 = vunpack.c.l.b16 %v1204
      %v1253 = vunpack.c.l.b16 %v1205
      %v1254 = vpack.c.b16 %v1239, %v1238
      %v1255 = vpack.c.b16 %v1241, %v1240
      %v1256 = vpack.c.b16 %v1243, %v1242
      %v1257 = vpack.c.b16 %v1245, %v1244
      %v1258 = vpack.c.b16 %v1247, %v1246
      %v1259 = vpack.c.b16 %v1249, %v1248
      %v1260 = vpack.c.b16 %v1251, %v1250
      %v1261 = vpack.c.b16 %v1253, %v1252
      %1270 = vmatpush.bf16.msra.mxu0 %v1261
      %1271 = vmatpush.bf16.msra.mxu0 %v1260
      %1272 = vmatpush.bf16.msra.mxu0 %v1259
      %1273 = vmatpush.bf16.msra.mxu0 %v1258
      %1274 = vmatpush.bf16.msra.mxu0 %v1257
      %1275 = vmatpush.bf16.msra.mxu0 %v1256
      %1276 = vmatpush.bf16.msra.mxu0 %v1255
      %1277 = vmatpush.bf16.msra.mxu0 %v1254
      %1278 = vmatmul.bf16.gmra.mxu0 %v1214
      %v1279 = vpop.f32.mrf.mxu0
      %v1280 = vadd.f32 0.0, %v1279
      %v1281 = vpop.f32.mrf.mxu0
      %v1282 = vadd.f32 0.0, %v1281
      %1283 = vmatmul.bf16.gmra.mxu0 %v1215
      %v1284 = vpop.f32.mrf.mxu0
      %v1285 = vadd.f32 0.0, %v1284
      %v1286 = vpop.f32.mrf.mxu0
      %v1287 = vadd.f32 0.0, %v1286
      %1288 = vmatmul.bf16.gmra.mxu0 %v1216
      %v1289 = vpop.f32.mrf.mxu0
      %v1290 = vadd.f32 0.0, %v1289
      %v1291 = vpop.f32.mrf.mxu0
      %v1292 = vadd.f32 0.0, %v1291
      %1293 = vmatmul.bf16.gmra.mxu0 %v1217
      %v1294 = vpop.f32.mrf.mxu0
      %v1295 = vadd.f32 0.0, %v1294
      %v1296 = vpop.f32.mrf.mxu0
      %v1297 = vadd.f32 0.0, %v1296
      %1298 = vdwg.mxu0
      %v1299 = vadd.f32 %v1053, %v1280
      %v1300 = vadd.f32 %v1054, %v1282
      %v1301 = vadd.f32 %v1055, %v1285
      %v1302 = vadd.f32 %v1056, %v1287
      %v1303 = vadd.f32 %v1057, %v1290
      %v1304 = vadd.f32 %v1058, %v1292
      %v1305 = vadd.f32 %v1059, %v1295
      %v1306 = vadd.f32 %v1060, %v1297
      %s1307 = scalar_lea.vmem %s270, 8
      %v1308 = vld [vmem:[%s1307] sm:$0xf]
      %v1309 = vld [vmem:[%s1307 + $0x8] sm:$0xf]
      %v1310 = vld [vmem:[%s1307 + $0x10] sm:$0xf]
      %v1311 = vld [vmem:[%s1307 + $0x18] sm:$0xf]
      %v1312 = vld [vmem:[%s1307 + $0x20] sm:$0xf]
      %v1313 = vld [vmem:[%s1307 + $0x28] sm:$0xf]
      %v1314 = vld [vmem:[%s1307 + $0x30] sm:$0xf]
      %v1315 = vld [vmem:[%s1307 + $0x38] sm:$0xf]
      %s1316 = scalar_lea.vmem %s1, 384
      %v1317 = vld [vmem:[%s1316] sm:$0xf]
      %v1318 = vld [vmem:[%s1316 + $0x4] sm:$0xf]
      %v1319 = vld [vmem:[%s1316 + $0x8] sm:$0xf]
      %v1320 = vld [vmem:[%s1316 + $0xc] sm:$0xf]
      %v1321 = vld [vmem:[%s1316 + $0x10] sm:$0xf]
      %v1322 = vld [vmem:[%s1316 + $0x14] sm:$0xf]
      %v1323 = vld [vmem:[%s1316 + $0x18] sm:$0xf]
      %v1324 = vld [vmem:[%s1316 + $0x1c] sm:$0xf]
      %v1325 = vld [vmem:[%s1316 + $0x20] sm:$0xf]
      %v1326 = vld [vmem:[%s1316 + $0x24] sm:$0xf]
      %v1327 = vld [vmem:[%s1316 + $0x28] sm:$0xf]
      %v1328 = vld [vmem:[%s1316 + $0x2c] sm:$0xf]
      %v1329 = vld [vmem:[%s1316 + $0x30] sm:$0xf]
      %v1330 = vld [vmem:[%s1316 + $0x34] sm:$0xf]
      %v1331 = vld [vmem:[%s1316 + $0x38] sm:$0xf]
      %v1332 = vld [vmem:[%s1316 + $0x3c] sm:$0xf]
      %v1341 = vunpack.c.l.b16 %v1308
      %v1342 = vunpack.c.l.b16 %v1309
      %v1343 = vunpack.c.l.b16 %v1310
      %v1344 = vunpack.c.l.b16 %v1311
      %v1345 = vunpack.c.l.b16 %v1312
      %v1346 = vunpack.c.l.b16 %v1313
      %v1347 = vunpack.c.l.b16 %v1314
      %v1348 = vunpack.c.l.b16 %v1315
      %v1349 = vpack.c.b16 %v1342, %v1341
      %v1350 = vpack.c.b16 %v1344, %v1343
      %v1351 = vpack.c.b16 %v1346, %v1345
      %v1352 = vpack.c.b16 %v1348, %v1347
      %v1373 = vunpack.c.l.b16 %v1317
      %v1374 = vunpack.c.l.b16 %v1318
      %v1375 = vunpack.c.l.b16 %v1319
      %v1376 = vunpack.c.l.b16 %v1320
      %v1377 = vunpack.c.l.b16 %v1321
      %v1378 = vunpack.c.l.b16 %v1322
      %v1379 = vunpack.c.l.b16 %v1323
      %v1380 = vunpack.c.l.b16 %v1324
      %v1381 = vunpack.c.l.b16 %v1325
      %v1382 = vunpack.c.l.b16 %v1326
      %v1383 = vunpack.c.l.b16 %v1327
      %v1384 = vunpack.c.l.b16 %v1328
      %v1385 = vunpack.c.l.b16 %v1329
      %v1386 = vunpack.c.l.b16 %v1330
      %v1387 = vunpack.c.l.b16 %v1331
      %v1388 = vunpack.c.l.b16 %v1332
      %v1389 = vpack.c.b16 %v1374, %v1373
      %v1390 = vpack.c.b16 %v1376, %v1375
      %v1391 = vpack.c.b16 %v1378, %v1377
      %v1392 = vpack.c.b16 %v1380, %v1379
      %v1393 = vpack.c.b16 %v1382, %v1381
      %v1394 = vpack.c.b16 %v1384, %v1383
      %v1395 = vpack.c.b16 %v1386, %v1385
      %v1396 = vpack.c.b16 %v1388, %v1387
      %1405 = vmatpush.bf16.msra.mxu0 %v1396
      %1406 = vmatpush.bf16.msra.mxu0 %v1395
      %1407 = vmatpush.bf16.msra.mxu0 %v1394
      %1408 = vmatpush.bf16.msra.mxu0 %v1393
      %1409 = vmatpush.bf16.msra.mxu0 %v1392
      %1410 = vmatpush.bf16.msra.mxu0 %v1391
      %1411 = vmatpush.bf16.msra.mxu0 %v1390
      %1412 = vmatpush.bf16.msra.mxu0 %v1389
      %1413 = vmatmul.bf16.gmra.mxu0 %v1349
      %v1414 = vpop.f32.mrf.mxu0
      %v1415 = vadd.f32 0.0, %v1414
      %v1416 = vpop.f32.mrf.mxu0
      %v1417 = vadd.f32 0.0, %v1416
      %1418 = vmatmul.bf16.gmra.mxu0 %v1350
      %v1419 = vpop.f32.mrf.mxu0
      %v1420 = vadd.f32 0.0, %v1419
      %v1421 = vpop.f32.mrf.mxu0
      %v1422 = vadd.f32 0.0, %v1421
      %1423 = vmatmul.bf16.gmra.mxu0 %v1351
      %v1424 = vpop.f32.mrf.mxu0
      %v1425 = vadd.f32 0.0, %v1424
      %v1426 = vpop.f32.mrf.mxu0
      %v1427 = vadd.f32 0.0, %v1426
      %1428 = vmatmul.bf16.gmra.mxu0 %v1352
      %v1429 = vpop.f32.mrf.mxu0
      %v1430 = vadd.f32 0.0, %v1429
      %v1431 = vpop.f32.mrf.mxu0
      %v1432 = vadd.f32 0.0, %v1431
      %1433 = vdwg.mxu0
      %v1434 = vadd.f32 %v1299, %v1415
      %v1435 = vadd.f32 %v1300, %v1417
      %v1436 = vadd.f32 %v1301, %v1420
      %v1437 = vadd.f32 %v1302, %v1422
      %v1438 = vadd.f32 %v1303, %v1425
      %v1439 = vadd.f32 %v1304, %v1427
      %v1440 = vadd.f32 %v1305, %v1430
      %v1441 = vadd.f32 %v1306, %v1432
      %s1442 = scalar_lea.vmem %s270, 80
      %v1443 = vld [vmem:[%s1442] sm:$0xf]
      %v1444 = vld [vmem:[%s1442 + $0x8] sm:$0xf]
      %v1445 = vld [vmem:[%s1442 + $0x10] sm:$0xf]
      %v1446 = vld [vmem:[%s1442 + $0x18] sm:$0xf]
      %v1447 = vld [vmem:[%s1442 + $0x20] sm:$0xf]
      %v1448 = vld [vmem:[%s1442 + $0x28] sm:$0xf]
      %v1449 = vld [vmem:[%s1442 + $0x30] sm:$0xf]
      %v1450 = vld [vmem:[%s1442 + $0x38] sm:$0xf]
      %s1451 = scalar_lea.vmem %s1, 448
      %v1452 = vld [vmem:[%s1451] sm:$0xf]
      %v1453 = vld [vmem:[%s1451 + $0x4] sm:$0xf]
      %v1454 = vld [vmem:[%s1451 + $0x8] sm:$0xf]
      %v1455 = vld [vmem:[%s1451 + $0xc] sm:$0xf]
      %v1456 = vld [vmem:[%s1451 + $0x10] sm:$0xf]
      %v1457 = vld [vmem:[%s1451 + $0x14] sm:$0xf]
      %v1458 = vld [vmem:[%s1451 + $0x18] sm:$0xf]
      %v1459 = vld [vmem:[%s1451 + $0x1c] sm:$0xf]
      %v1460 = vld [vmem:[%s1451 + $0x20] sm:$0xf]
      %v1461 = vld [vmem:[%s1451 + $0x24] sm:$0xf]
      %v1462 = vld [vmem:[%s1451 + $0x28] sm:$0xf]
      %v1463 = vld [vmem:[%s1451 + $0x2c] sm:$0xf]
      %v1464 = vld [vmem:[%s1451 + $0x30] sm:$0xf]
      %v1465 = vld [vmem:[%s1451 + $0x34] sm:$0xf]
      %v1466 = vld [vmem:[%s1451 + $0x38] sm:$0xf]
      %v1467 = vld [vmem:[%s1451 + $0x3c] sm:$0xf]
      %v1476 = vunpack.c.l.b16 %v1443
      %v1477 = vunpack.c.l.b16 %v1444
      %v1478 = vunpack.c.l.b16 %v1445
      %v1479 = vunpack.c.l.b16 %v1446
      %v1480 = vunpack.c.l.b16 %v1447
      %v1481 = vunpack.c.l.b16 %v1448
      %v1482 = vunpack.c.l.b16 %v1449
      %v1483 = vunpack.c.l.b16 %v1450
      %v1484 = vpack.c.b16 %v1477, %v1476
      %v1485 = vpack.c.b16 %v1479, %v1478
      %v1486 = vpack.c.b16 %v1481, %v1480
      %v1487 = vpack.c.b16 %v1483, %v1482
      %v1508 = vunpack.c.l.b16 %v1452
      %v1509 = vunpack.c.l.b16 %v1453
      %v1510 = vunpack.c.l.b16 %v1454
      %v1511 = vunpack.c.l.b16 %v1455
      %v1512 = vunpack.c.l.b16 %v1456
      %v1513 = vunpack.c.l.b16 %v1457
      %v1514 = vunpack.c.l.b16 %v1458
      %v1515 = vunpack.c.l.b16 %v1459
      %v1516 = vunpack.c.l.b16 %v1460
      %v1517 = vunpack.c.l.b16 %v1461
      %v1518 = vunpack.c.l.b16 %v1462
      %v1519 = vunpack.c.l.b16 %v1463
      %v1520 = vunpack.c.l.b16 %v1464
      %v1521 = vunpack.c.l.b16 %v1465
      %v1522 = vunpack.c.l.b16 %v1466
      %v1523 = vunpack.c.l.b16 %v1467
      %v1524 = vpack.c.b16 %v1509, %v1508
      %v1525 = vpack.c.b16 %v1511, %v1510
      %v1526 = vpack.c.b16 %v1513, %v1512
      %v1527 = vpack.c.b16 %v1515, %v1514
      %v1528 = vpack.c.b16 %v1517, %v1516
      %v1529 = vpack.c.b16 %v1519, %v1518
      %v1530 = vpack.c.b16 %v1521, %v1520
      %v1531 = vpack.c.b16 %v1523, %v1522
      %1540 = vmatpush.bf16.msra.mxu0 %v1531
      %1541 = vmatpush.bf16.msra.mxu0 %v1530
      %1542 = vmatpush.bf16.msra.mxu0 %v1529
      %1543 = vmatpush.bf16.msra.mxu0 %v1528
      %1544 = vmatpush.bf16.msra.mxu0 %v1527
      %1545 = vmatpush.bf16.msra.mxu0 %v1526
      %1546 = vmatpush.bf16.msra.mxu0 %v1525
      %1547 = vmatpush.bf16.msra.mxu0 %v1524
      %1548 = vmatmul.bf16.gmra.mxu0 %v1484
      %v1549 = vpop.f32.mrf.mxu0
      %v1550 = vadd.f32 0.0, %v1549
      %v1551 = vpop.f32.mrf.mxu0
      %v1552 = vadd.f32 0.0, %v1551
      %1553 = vmatmul.bf16.gmra.mxu0 %v1485
      %v1554 = vpop.f32.mrf.mxu0
      %v1555 = vadd.f32 0.0, %v1554
      %v1556 = vpop.f32.mrf.mxu0
      %v1557 = vadd.f32 0.0, %v1556
      %1558 = vmatmul.bf16.gmra.mxu0 %v1486
      %v1559 = vpop.f32.mrf.mxu0
      %v1560 = vadd.f32 0.0, %v1559
      %v1561 = vpop.f32.mrf.mxu0
      %v1562 = vadd.f32 0.0, %v1561
      %1563 = vmatmul.bf16.gmra.mxu0 %v1487
      %v1564 = vpop.f32.mrf.mxu0
      %v1565 = vadd.f32 0.0, %v1564
      %v1566 = vpop.f32.mrf.mxu0
      %v1567 = vadd.f32 0.0, %v1566
      %1568 = vdwg.mxu0
      %v1569 = vadd.f32 %v1434, %v1550
      %v1570 = vadd.f32 %v1435, %v1552
      %v1571 = vadd.f32 %v1436, %v1555
      %v1572 = vadd.f32 %v1437, %v1557
      %v1573 = vadd.f32 %v1438, %v1560
      %v1574 = vadd.f32 %v1439, %v1562
      %v1575 = vadd.f32 %v1440, %v1565
      %v1576 = vadd.f32 %v1441, %v1567
      %v1577 = vld [vmem:[%s1307] sm:$0xf]
      %v1578 = vld [vmem:[%s1307 + $0x4] sm:$0x1]
      %v1579 = vld [vmem:[%s1307 + $0x8] sm:$0xf]
      %v1580 = vld [vmem:[%s1307 + $0xc] sm:$0x1]
      %v1581 = vld [vmem:[%s1307 + $0x10] sm:$0xf]
      %v1582 = vld [vmem:[%s1307 + $0x14] sm:$0x1]
      %v1583 = vld [vmem:[%s1307 + $0x18] sm:$0xf]
      %v1584 = vld [vmem:[%s1307 + $0x1c] sm:$0x1]
      %v1585 = vld [vmem:[%s1307 + $0x20] sm:$0xf]
      %v1586 = vld [vmem:[%s1307 + $0x24] sm:$0x1]
      %v1587 = vld [vmem:[%s1307 + $0x28] sm:$0xf]
      %v1588 = vld [vmem:[%s1307 + $0x2c] sm:$0x1]
      %v1589 = vld [vmem:[%s1307 + $0x30] sm:$0xf]
      %v1590 = vld [vmem:[%s1307 + $0x34] sm:$0x1]
      %v1591 = vld [vmem:[%s1307 + $0x38] sm:$0xf]
      %v1592 = vld [vmem:[%s1307 + $0x3c] sm:$0x1]
      %v1594 = vshrl.u32 %v1577, 16
      %v1596 = vrot.slane %v1594, 4
      %v1597 = vshll.u32 %v1577, 16
      %v1599 = vrot.slane %v1597, 5
      %v1600 = vor.u32 %v1596, %v1599
      %v1601 = vrot.slane %v1600, 4
      %v1603 = vshll.u32 %v1578, 16
      %v1605 = vrot.slane %v1603, 5
      %v1606 = vsel %vm560, %v1601, %v1605
      %v1608 = vshrl.u32 %v1579, 16
      %v1610 = vrot.slane %v1608, 4
      %v1611 = vshll.u32 %v1579, 16
      %v1613 = vrot.slane %v1611, 5
      %v1614 = vor.u32 %v1610, %v1613
      %v1615 = vrot.slane %v1614, 4
      %v1617 = vshll.u32 %v1580, 16
      %v1619 = vrot.slane %v1617, 5
      %v1620 = vsel %vm560, %v1615, %v1619
      %v1622 = vshrl.u32 %v1581, 16
      %v1624 = vrot.slane %v1622, 4
      %v1625 = vshll.u32 %v1581, 16
      %v1627 = vrot.slane %v1625, 5
      %v1628 = vor.u32 %v1624, %v1627
      %v1629 = vrot.slane %v1628, 4
      %v1631 = vshll.u32 %v1582, 16
      %v1633 = vrot.slane %v1631, 5
      %v1634 = vsel %vm560, %v1629, %v1633
      %v1636 = vshrl.u32 %v1583, 16
      %v1638 = vrot.slane %v1636, 4
      %v1639 = vshll.u32 %v1583, 16
      %v1641 = vrot.slane %v1639, 5
      %v1642 = vor.u32 %v1638, %v1641
      %v1643 = vrot.slane %v1642, 4
      %v1645 = vshll.u32 %v1584, 16
      %v1647 = vrot.slane %v1645, 5
      %v1648 = vsel %vm560, %v1643, %v1647
      %v1650 = vshrl.u32 %v1585, 16
      %v1652 = vrot.slane %v1650, 4
      %v1653 = vshll.u32 %v1585, 16
      %v1655 = vrot.slane %v1653, 5
      %v1656 = vor.u32 %v1652, %v1655
      %v1657 = vrot.slane %v1656, 4
      %v1659 = vshll.u32 %v1586, 16
      %v1661 = vrot.slane %v1659, 5
      %v1662 = vsel %vm560, %v1657, %v1661
      %v1664 = vshrl.u32 %v1587, 16
      %v1666 = vrot.slane %v1664, 4
      %v1667 = vshll.u32 %v1587, 16
      %v1669 = vrot.slane %v1667, 5
      %v1670 = vor.u32 %v1666, %v1669
      %v1671 = vrot.slane %v1670, 4
      %v1673 = vshll.u32 %v1588, 16
      %v1675 = vrot.slane %v1673, 5
      %v1676 = vsel %vm560, %v1671, %v1675
      %v1678 = vshrl.u32 %v1589, 16
      %v1680 = vrot.slane %v1678, 4
      %v1681 = vshll.u32 %v1589, 16
      %v1683 = vrot.slane %v1681, 5
      %v1684 = vor.u32 %v1680, %v1683
      %v1685 = vrot.slane %v1684, 4
      %v1687 = vshll.u32 %v1590, 16
      %v1689 = vrot.slane %v1687, 5
      %v1690 = vsel %vm560, %v1685, %v1689
      %v1692 = vshrl.u32 %v1591, 16
      %v1694 = vrot.slane %v1692, 4
      %v1695 = vshll.u32 %v1591, 16
      %v1697 = vrot.slane %v1695, 5
      %v1698 = vor.u32 %v1694, %v1697
      %v1699 = vrot.slane %v1698, 4
      %v1701 = vshll.u32 %v1592, 16
      %v1703 = vrot.slane %v1701, 5
      %v1704 = vsel %vm560, %v1699, %v1703
      %s1705 = scalar_lea.vmem %s1, 512
      %v1706 = vld [vmem:[%s1705] sm:$0xf]
      %v1707 = vld [vmem:[%s1705 + $0x4] sm:$0xf]
      %v1708 = vld [vmem:[%s1705 + $0x8] sm:$0xf]
      %v1709 = vld [vmem:[%s1705 + $0xc] sm:$0xf]
      %v1710 = vld [vmem:[%s1705 + $0x10] sm:$0xf]
      %v1711 = vld [vmem:[%s1705 + $0x14] sm:$0xf]
      %v1712 = vld [vmem:[%s1705 + $0x18] sm:$0xf]
      %v1713 = vld [vmem:[%s1705 + $0x1c] sm:$0xf]
      %v1714 = vld [vmem:[%s1705 + $0x20] sm:$0xf]
      %v1715 = vld [vmem:[%s1705 + $0x24] sm:$0xf]
      %v1716 = vld [vmem:[%s1705 + $0x28] sm:$0xf]
      %v1717 = vld [vmem:[%s1705 + $0x2c] sm:$0xf]
      %v1718 = vld [vmem:[%s1705 + $0x30] sm:$0xf]
      %v1719 = vld [vmem:[%s1705 + $0x34] sm:$0xf]
      %v1720 = vld [vmem:[%s1705 + $0x38] sm:$0xf]
      %v1721 = vld [vmem:[%s1705 + $0x3c] sm:$0xf]
      %v1722 = vunpack.c.l.b16 %v1606
      %v1723 = vunpack.c.l.b16 %v1620
      %v1724 = vunpack.c.l.b16 %v1634
      %v1725 = vunpack.c.l.b16 %v1648
      %v1726 = vunpack.c.l.b16 %v1662
      %v1727 = vunpack.c.l.b16 %v1676
      %v1728 = vunpack.c.l.b16 %v1690
      %v1729 = vunpack.c.l.b16 %v1704
      %v1730 = vpack.c.b16 %v1723, %v1722
      %v1731 = vpack.c.b16 %v1725, %v1724
      %v1732 = vpack.c.b16 %v1727, %v1726
      %v1733 = vpack.c.b16 %v1729, %v1728
      %v1754 = vunpack.c.l.b16 %v1706
      %v1755 = vunpack.c.l.b16 %v1707
      %v1756 = vunpack.c.l.b16 %v1708
      %v1757 = vunpack.c.l.b16 %v1709
      %v1758 = vunpack.c.l.b16 %v1710
      %v1759 = vunpack.c.l.b16 %v1711
      %v1760 = vunpack.c.l.b16 %v1712
      %v1761 = vunpack.c.l.b16 %v1713
      %v1762 = vunpack.c.l.b16 %v1714
      %v1763 = vunpack.c.l.b16 %v1715
      %v1764 = vunpack.c.l.b16 %v1716
      %v1765 = vunpack.c.l.b16 %v1717
      %v1766 = vunpack.c.l.b16 %v1718
      %v1767 = vunpack.c.l.b16 %v1719
      %v1768 = vunpack.c.l.b16 %v1720
      %v1769 = vunpack.c.l.b16 %v1721
      %v1770 = vpack.c.b16 %v1755, %v1754
      %v1771 = vpack.c.b16 %v1757, %v1756
      %v1772 = vpack.c.b16 %v1759, %v1758
      %v1773 = vpack.c.b16 %v1761, %v1760
      %v1774 = vpack.c.b16 %v1763, %v1762
      %v1775 = vpack.c.b16 %v1765, %v1764
      %v1776 = vpack.c.b16 %v1767, %v1766
      %v1777 = vpack.c.b16 %v1769, %v1768
      %1786 = vmatpush.bf16.msra.mxu0 %v1777
      %1787 = vmatpush.bf16.msra.mxu0 %v1776
      %1788 = vmatpush.bf16.msra.mxu0 %v1775
      %1789 = vmatpush.bf16.msra.mxu0 %v1774
      %1790 = vmatpush.bf16.msra.mxu0 %v1773
      %1791 = vmatpush.bf16.msra.mxu0 %v1772
      %1792 = vmatpush.bf16.msra.mxu0 %v1771
      %1793 = vmatpush.bf16.msra.mxu0 %v1770
      %1794 = vmatmul.bf16.gmra.mxu0 %v1730
      %v1795 = vpop.f32.mrf.mxu0
      %v1796 = vadd.f32 0.0, %v1795
      %v1797 = vpop.f32.mrf.mxu0
      %v1798 = vadd.f32 0.0, %v1797
      %1799 = vmatmul.bf16.gmra.mxu0 %v1731
      %v1800 = vpop.f32.mrf.mxu0
      %v1801 = vadd.f32 0.0, %v1800
      %v1802 = vpop.f32.mrf.mxu0
      %v1803 = vadd.f32 0.0, %v1802
      %1804 = vmatmul.bf16.gmra.mxu0 %v1732
      %v1805 = vpop.f32.mrf.mxu0
      %v1806 = vadd.f32 0.0, %v1805
      %v1807 = vpop.f32.mrf.mxu0
      %v1808 = vadd.f32 0.0, %v1807
      %1809 = vmatmul.bf16.gmra.mxu0 %v1733
      %v1810 = vpop.f32.mrf.mxu0
      %v1811 = vadd.f32 0.0, %v1810
      %v1812 = vpop.f32.mrf.mxu0
      %v1813 = vadd.f32 0.0, %v1812
      %1814 = vdwg.mxu0
      %v1815 = vadd.f32 %v1569, %v1796
      %v1816 = vadd.f32 %v1570, %v1798
      %v1817 = vadd.f32 %v1571, %v1801
      %v1818 = vadd.f32 %v1572, %v1803
      %v1819 = vadd.f32 %v1573, %v1806
      %v1820 = vadd.f32 %v1574, %v1808
      %v1821 = vadd.f32 %v1575, %v1811
      %v1822 = vadd.f32 %v1576, %v1813
      %1823 = vst [vmem:[%s276] sm:$0xff] %v1815
      %1824 = vst [vmem:[%s276 + $0x8] sm:$0xff] %v1816
      %1825 = vst [vmem:[%s276 + $0x10] sm:$0xff] %v1817
      %1826 = vst [vmem:[%s276 + $0x18] sm:$0xff] %v1818
      %1827 = vst [vmem:[%s276 + $0x20] sm:$0xff] %v1819
      %1828 = vst [vmem:[%s276 + $0x28] sm:$0xff] %v1820
      %1829 = vst [vmem:[%s276 + $0x30] sm:$0xff] %v1821
      %1830 = vst [vmem:[%s276 + $0x38] sm:$0xff] %v1822
      %v1831 = vadd.f32 %v1815, %v1816
      %v1832 = vadd.f32 %v1831, %v1817
      %v1833 = vadd.f32 %v1832, %v1818
      %v1834 = vadd.f32 %v1833, %v1819
      %v1835 = vadd.f32 %v1834, %v1820
      %v1836 = vadd.f32 %v1835, %v1821
      %v1837 = vadd.f32 %v1836, %v1822
      %v1838 = vrot.slane %v1837, 4
      %v1839 = vadd.f32 %v1837, %v1838
      %v1840 = vrot.slane %v1839, 2
      %v1841 = vadd.f32 %v1839, %v1840
      %v1842 = vrot.slane %v1841, 1
      %v1843 = vadd.f32 %v1841, %v1842
      %v1844 = vmul.f32 %v1815, %v1815
      %v1845 = vmul.f32 %v1816, %v1816
      %v1846 = vmul.f32 %v1817, %v1817
      %v1847 = vmul.f32 %v1818, %v1818
      %v1848 = vmul.f32 %v1819, %v1819
      %v1849 = vmul.f32 %v1820, %v1820
      %v1850 = vmul.f32 %v1821, %v1821
      %v1851 = vmul.f32 %v1822, %v1822
      %v1852 = vadd.f32 %v1844, %v1845
      %v1853 = vadd.f32 %v1852, %v1846
      %v1854 = vadd.f32 %v1853, %v1847
      %v1855 = vadd.f32 %v1854, %v1848
      %v1856 = vadd.f32 %v1855, %v1849
      %v1857 = vadd.f32 %v1856, %v1850
      %v1858 = vadd.f32 %v1857, %v1851
      %v1859 = vrot.slane %v1858, 4
      %v1860 = vadd.f32 %v1858, %v1859
      %v1861 = vrot.slane %v1860, 2
      %v1862 = vadd.f32 %v1860, %v1861
      %v1863 = vrot.slane %v1862, 1
      %v1864 = vadd.f32 %v1862, %v1863
      %vm1865 = vcmask 1040384
      %v1866 = vsel %vm1865, %v1843, %v1864
      %1867 = vst [vmem:[%s285] sm:$0x3] %v1866
      %v1868 = vld [vmem:[%s2] sm:$0xf]
      %v1869 = vld [vmem:[%s2 + $0x4] sm:$0xf]
      %v1870 = vld [vmem:[%s2 + $0x8] sm:$0xf]
      %v1871 = vld [vmem:[%s2 + $0xc] sm:$0xf]
      %v1872 = vld [vmem:[%s2 + $0x10] sm:$0xf]
      %v1873 = vld [vmem:[%s2 + $0x14] sm:$0xf]
      %v1874 = vld [vmem:[%s2 + $0x18] sm:$0xf]
      %v1875 = vld [vmem:[%s2 + $0x1c] sm:$0xf]
      %v1876 = vld [vmem:[%s2 + $0x20] sm:$0xf]
      %v1877 = vld [vmem:[%s2 + $0x24] sm:$0xf]
      %v1878 = vld [vmem:[%s2 + $0x28] sm:$0xf]
      %v1879 = vld [vmem:[%s2 + $0x2c] sm:$0xf]
      %v1880 = vld [vmem:[%s2 + $0x30] sm:$0xf]
      %v1881 = vld [vmem:[%s2 + $0x34] sm:$0xf]
      %v1882 = vld [vmem:[%s2 + $0x38] sm:$0xf]
      %v1883 = vld [vmem:[%s2 + $0x3c] sm:$0xf]
      %v1900 = vunpack.c.l.b16 %v1868
      %v1901 = vunpack.c.l.b16 %v1869
      %v1902 = vunpack.c.l.b16 %v1870
      %v1903 = vunpack.c.l.b16 %v1871
      %v1904 = vunpack.c.l.b16 %v1872
      %v1905 = vunpack.c.l.b16 %v1873
      %v1906 = vunpack.c.l.b16 %v1874
      %v1907 = vunpack.c.l.b16 %v1875
      %v1908 = vunpack.c.l.b16 %v1876
      %v1909 = vunpack.c.l.b16 %v1877
      %v1910 = vunpack.c.l.b16 %v1878
      %v1911 = vunpack.c.l.b16 %v1879
      %v1912 = vunpack.c.l.b16 %v1880
      %v1913 = vunpack.c.l.b16 %v1881
      %v1914 = vunpack.c.l.b16 %v1882
      %v1915 = vunpack.c.l.b16 %v1883
      %v1916 = vpack.c.b16 %v1901, %v1900
      %v1917 = vpack.c.b16 %v1903, %v1902
      %v1918 = vpack.c.b16 %v1905, %v1904
      %v1919 = vpack.c.b16 %v1907, %v1906
      %v1920 = vpack.c.b16 %v1909, %v1908
      %v1921 = vpack.c.b16 %v1911, %v1910
      %v1922 = vpack.c.b16 %v1913, %v1912
      %v1923 = vpack.c.b16 %v1915, %v1914
      %1932 = vmatpush.bf16.msra.mxu0 %v1923
      %1933 = vmatpush.bf16.msra.mxu0 %v1922
      %1934 = vmatpush.bf16.msra.mxu0 %v1921
      %1935 = vmatpush.bf16.msra.mxu0 %v1920
      %1936 = vmatpush.bf16.msra.mxu0 %v1919
      %1937 = vmatpush.bf16.msra.mxu0 %v1918
      %1938 = vmatpush.bf16.msra.mxu0 %v1917
      %1939 = vmatpush.bf16.msra.mxu0 %v1916
      %1940 = vmatmul.bf16.gmra.mxu0 %v968
      %v1941 = vpop.f32.mrf.mxu0
      %v1942 = vadd.f32 0.0, %v1941
      %v1943 = vpop.f32.mrf.mxu0
      %v1944 = vadd.f32 0.0, %v1943
      %1945 = vmatmul.bf16.gmra.mxu0 %v969
      %v1946 = vpop.f32.mrf.mxu0
      %v1947 = vadd.f32 0.0, %v1946
      %v1948 = vpop.f32.mrf.mxu0
      %v1949 = vadd.f32 0.0, %v1948
      %1950 = vmatmul.bf16.gmra.mxu0 %v970
      %v1951 = vpop.f32.mrf.mxu0
      %v1952 = vadd.f32 0.0, %v1951
      %v1953 = vpop.f32.mrf.mxu0
      %v1954 = vadd.f32 0.0, %v1953
      %1955 = vmatmul.bf16.gmra.mxu0 %v971
      %v1956 = vpop.f32.mrf.mxu0
      %v1957 = vadd.f32 0.0, %v1956
      %v1958 = vpop.f32.mrf.mxu0
      %v1959 = vadd.f32 0.0, %v1958
      %1960 = vdwg.mxu0
      %1961 = vst [vmem:[%s281] sm:$0xff] %v1942
      %1962 = vst [vmem:[%s281 + $0x8] sm:$0xff] %v1944
      %1963 = vst [vmem:[%s281 + $0x10] sm:$0xff] %v1947
      %1964 = vst [vmem:[%s281 + $0x18] sm:$0xff] %v1949
      %1965 = vst [vmem:[%s281 + $0x20] sm:$0xff] %v1952
      %1966 = vst [vmem:[%s281 + $0x28] sm:$0xff] %v1954
      %1967 = vst [vmem:[%s281 + $0x30] sm:$0xff] %v1957
      %1968 = vst [vmem:[%s281 + $0x38] sm:$0xff] %v1959
      %v1969 = vadd.f32 %v1942, %v1944
      %v1970 = vadd.f32 %v1969, %v1947
      %v1971 = vadd.f32 %v1970, %v1949
      %v1972 = vadd.f32 %v1971, %v1952
      %v1973 = vadd.f32 %v1972, %v1954
      %v1974 = vadd.f32 %v1973, %v1957
      %v1975 = vadd.f32 %v1974, %v1959
      %v1976 = vrot.slane %v1975, 4
      %v1977 = vadd.f32 %v1975, %v1976
      %v1978 = vrot.slane %v1977, 2
      %v1979 = vadd.f32 %v1977, %v1978
      %v1980 = vrot.slane %v1979, 1
      %v1981 = vadd.f32 %v1979, %v1980
      %v1982 = vmul.f32 %v1942, %v1942
      %v1983 = vmul.f32 %v1944, %v1944
      %v1984 = vmul.f32 %v1947, %v1947
      %v1985 = vmul.f32 %v1949, %v1949
      %v1986 = vmul.f32 %v1952, %v1952
      %v1987 = vmul.f32 %v1954, %v1954
      %v1988 = vmul.f32 %v1957, %v1957
      %v1989 = vmul.f32 %v1959, %v1959
      %v1990 = vadd.f32 %v1982, %v1983
      %v1991 = vadd.f32 %v1990, %v1984
      %v1992 = vadd.f32 %v1991, %v1985
      %v1993 = vadd.f32 %v1992, %v1986
      %v1994 = vadd.f32 %v1993, %v1987
      %v1995 = vadd.f32 %v1994, %v1988
      %v1996 = vadd.f32 %v1995, %v1989
      %v1997 = vrot.slane %v1996, 4
      %v1998 = vadd.f32 %v1996, %v1997
      %v1999 = vrot.slane %v1998, 2
      %v2000 = vadd.f32 %v1998, %v1999
      %v2001 = vrot.slane %v2000, 1
      %v2002 = vadd.f32 %v2000, %v2001
      %v2003 = vsel %vm1865, %v1981, %v2002
      %2004 = vst [vmem:[%s289] sm:$0x3] %v2003
      %p2005 = scmp.lt.s32.totalorder %s18, 1
      %s2006 = scalar_select %p2005, %s18, 1
      %s2007 = smul.addr %s2006, 8
      %s2008 = smul.addr %s2007, 8
      %s2009 = scalar_lea.vmem %s3, %s2008
      %p2010 = scmp.lt.s32.totalorder %s18, 1
      %s2011 = scalar_select %p2010, %s18, 1
      %s2012 = smul.addr %s2011, 8
      %s2013 = smul.addr %s2012, 8
      %s2014 = scalar_lea.vmem %s4, %s2013
      %p2015 = scmp.lt.s32.totalorder %s18, 1
      %s2016 = scalar_select %p2015, %s18, 1
      %s2017 = smul.addr %s2016, 2
      %s2018 = scalar_lea.vmem %s5, %s2017
      %p2019 = scmp.lt.s32.totalorder %s18, 1
      %s2020 = scalar_select %p2019, %s18, 1
      %s2021 = smul.addr %s2020, 2
      %s2022 = scalar_lea.vmem %s6, %s2021
      // Predicated region
      $region33: #{residual_block_pallas.3} parent=31 // pred_check
        %p2023 = pneg %p104
      $region34: #{residual_block_pallas.3} parent=31 // pred_check_branch
        %2025 = sbr.rel (%p2023) target = $region36
      $region35: #{residual_block_pallas.3} parent=31 // pred_region
        _
      $region36: #{residual_block_pallas.3} parent=31 // pred_fallthru
        _
      // Predicated region
      $region37: #{residual_block_pallas.3} parent=31 // pred_check
        %p2026 = pneg %p130
      $region38: #{residual_block_pallas.3} parent=31 // pred_check_branch
        %2028 = sbr.rel (%p2026) target = $region40
      $region39: #{residual_block_pallas.3} parent=31 // pred_region
        _
      $region40: #{residual_block_pallas.3} parent=31 // pred_fallthru
        _
      // Predicated region
      $region41: #{residual_block_pallas.3} parent=31 // pred_check
        %p2029 = pneg %p156
      $region42: #{residual_block_pallas.3} parent=31 // pred_check_branch
        %2031 = sbr.rel (%p2029) target = $region44
      $region43: #{residual_block_pallas.3} parent=31 // pred_region
        _
      $region44: #{residual_block_pallas.3} parent=31 // pred_fallthru
        _
      // Predicated region
      $region45: #{residual_block_pallas.3} parent=31 // pred_check
        %p2032 = pneg %p182
      $region46: #{residual_block_pallas.3} parent=31 // pred_check_branch
        %2034 = sbr.rel (%p2032) target = $region48
      $region47: #{residual_block_pallas.3} parent=31 // pred_region
        _
      $region48: #{residual_block_pallas.3} parent=31 // pred_fallthru
        _
    $region32: #{residual_block_pallas.3} parent=5 // pred_fallthru
      _
    %p2035 = scmp.le.s32.totalorder 2, %s13
    // Predicated region
    $region49: #{residual_block_pallas.3} parent=5 // pred_check
      %p2036 = pneg %p2035
    $region50: #{residual_block_pallas.3} parent=5 // pred_check_branch
      %2038 = sbr.rel (%p2036) target = $region52
    $region51: #{residual_block_pallas.3} parent=5 // pred_region
      %s2039 = ssub.s32 %s13, 2
      // Predicated region
      $region53: #{residual_block_pallas.3} parent=51 // pred_check
        %p2040 = pneg %p110
      $region54: #{residual_block_pallas.3} parent=51 // pred_check_branch
        %2042 = sbr.rel (%p2040) target = $region56
      $region55: #{residual_block_pallas.3} parent=51 // pred_region
        %p2043 = scmp.lt.s32.totalorder %s19, 1
        %s2044 = scalar_select %p2043, %s19, 1
        %s2045 = smul.addr %s2044, 8
        %s2046 = smul.addr %s2045, 8
        %s2047 = scalar_lea.vmem %s3, %s2046
      $region56: #{residual_block_pallas.3} parent=51 // pred_fallthru
        _
      // Predicated region
      $region57: #{residual_block_pallas.3} parent=51 // pred_check
        %p2048 = pneg %p136
      $region58: #{residual_block_pallas.3} parent=51 // pred_check_branch
        %2050 = sbr.rel (%p2048) target = $region60
      $region59: #{residual_block_pallas.3} parent=51 // pred_region
        %p2051 = scmp.lt.s32.totalorder %s19, 1
        %s2052 = scalar_select %p2051, %s19, 1
        %s2053 = smul.addr %s2052, 8
        %s2054 = smul.addr %s2053, 8
        %s2055 = scalar_lea.vmem %s4, %s2054
      $region60: #{residual_block_pallas.3} parent=51 // pred_fallthru
        _
      // Predicated region
      $region61: #{residual_block_pallas.3} parent=51 // pred_check
        %p2056 = pneg %p162
      $region62: #{residual_block_pallas.3} parent=51 // pred_check_branch
        %2058 = sbr.rel (%p2056) target = $region64
      $region63: #{residual_block_pallas.3} parent=51 // pred_region
        %p2059 = scmp.lt.s32.totalorder %s19, 1
        %s2060 = scalar_select %p2059, %s19, 1
        %s2061 = smul.addr %s2060, 2
        %s2062 = scalar_lea.vmem %s5, %s2061
      $region64: #{residual_block_pallas.3} parent=51 // pred_fallthru
        _
      // Predicated region
      $region65: #{residual_block_pallas.3} parent=51 // pred_check
        %p2063 = pneg %p188
      $region66: #{residual_block_pallas.3} parent=51 // pred_check_branch
        %2065 = sbr.rel (%p2063) target = $region68
      $region67: #{residual_block_pallas.3} parent=51 // pred_region
        %p2066 = scmp.lt.s32.totalorder %s19, 1
        %s2067 = scalar_select %p2066, %s19, 1
        %s2068 = smul.addr %s2067, 2
        %s2069 = scalar_lea.vmem %s6, %s2068
      $region68: #{residual_block_pallas.3} parent=51 // pred_fallthru
        _
    $region52: #{residual_block_pallas.3} parent=5 // pred_fallthru
      _
  $region6: #{residual_block_pallas.3} parent=0 // loop_footer
    %s17 = sadd.s32 1, %s13
  $region7: #{residual_block_pallas.3} parent=0 // loop_footer_branch
    %12 = sbr.rel target = $region3
  $region8: #{residual_block_pallas.3} parent=0 // loop_exit
    _

</llo_original>
